<compile_context>
chip_gen: v7x
topology: tpu7x:2x2x1
jax: 0.10.0
libtpu: 0.0.40
codegen_flags: <defaults>
</compile_context>

<pallas_src>
import functools

import jax
import jax.numpy as jnp
from jax import lax
from jax.experimental import pallas as pl
from jax.experimental.pallas import tpu as pltpu


def _vmem_estimate(Np, bt, D, C, S, K_h):
    """Rough per-step VMEM footprint in bytes (incl. default double-buffering)."""
    fd, fc = bt * D, bt * C
    b = 0
    b += 2 * Np * fd * 4            # x block (f32), 2 pipeline buffers
    b += 2 * Np * fc * 4            # out block (f32), 2 pipeline buffers
    b += 2 * S * Np * Np * 2        # supports (bf16, grid-invariant, still 2-buffered)
    b += 2 * K_h * fd * fc * 2      # block-diag BN-folded W1 (bf16)
    b += 2 * fc * fc * 2            # block-diag W2 (bf16)
    b += Np * K_h * fd * 2          # hop-feature scratch (bf16)
    b += 2 * Np * (fd + fc) * 4     # live f32 recurrence state / epilogue temps
    return b


def _pick_batch_tile(B, Np, D, C, S, K_h, budget=40 * 1024 * 1024):
    """Largest batch tile with 128-aligned folded lane widths that fits VMEM.

    Preference order: folded lane width >= 256 (fills the 256-wide v6e/v7x
    MXU; on v5e the 128-wide MXU is already full, the larger tile only
    amortizes per-step overhead), >= 2 grid steps (both TensorCores),
    >= 4 grid steps (>= 2 pipelined steps per core on v7x), then largest tile.
    """
    divisors = [bt for bt in range(1, B + 1) if B % bt == 0]
    aligned = [bt for bt in divisors
               if (bt * D) % 128 == 0 and (bt * C) % 128 == 0]
    feasible = [bt for bt in aligned
                if bt * D <= 512 and _vmem_estimate(Np, bt, D, C, S, K_h) <= budget]
    if not feasible:
        if aligned:
            return min(aligned)
        # Unaligned fallback: full-array blocks (still correct, but degrades to
        # masked stores — see review correctness note #3).
        return B

    def rank(bt):
        g = B // bt
        return ((bt * D) >= 256, g >= 2, g >= 4, bt)

    return max(feasible, key=rank)


def ginconv_kernel(eps_ref, xw_ref, supp_ref, w1_ref, bias_ref, w2_ref,
                   o_ref, buf_ref, *, order, support_len, fold_d):
    eps = eps_ref[0]                                  # scalar from SMEM
    x = xw_ref[...].astype(jnp.float32)               # (Np, Bt*D), lane = b*D + d

    # ---- graph propagation, batch folded into the MXU lane axis -----------
    # out_{s,h} updates stay f32; matmul operands are bf16 (MXU native).
    # Each hop result is written ONCE as an aligned, unmasked (Np, Bt*D) slab
    # (offset k*fold_d is a static multiple of 128) — no per-batch unfold.
    k = 0
    for s in range(support_len):
        A = supp_ref[s]                               # (Np, Np) bf16, pre-cast
        out = x
        for _ in range(order):
            out = (1.0 + eps) * out + jnp.dot(
                A, out.astype(jnp.bfloat16),
                preferred_element_type=jnp.float32)
            buf_ref[:, k * fold_d:(k + 1) * fold_d] = out.astype(jnp.bfloat16)
            k += 1

    # ---- fused epilogue: linear1(+BN folded) -> relu -> linear2 ------------
    # One (Np, K*Bt*D) @ (K*Bt*D, Bt*C) matmul against the batch-block-diagonal
    # BN-folded W1, bias add (folded BN shift), relu, then one
    # (Np, Bt*C) @ (Bt*C, Bt*C) matmul against block-diagonal W2.  Output is
    # written as a single lane-dense (Np, Bt*C) slab (unmasked stores).
    h = jnp.dot(buf_ref[...], w1_ref[...], preferred_element_type=jnp.float32)
    h = jnp.maximum(h + bias_ref[...], 0.0)
    h = jnp.dot(h.astype(jnp.bfloat16), w2_ref[...],
                preferred_element_type=jnp.float32)
    o_ref[...] = h.astype(o_ref.dtype)


def ginconv_forward(x, supports, eps, w1, gamma, beta, run_mean, run_var, w2,
                    *, order, bn_eps=1e-5):
    B, N, D = x.shape
    S = supports.shape[0]
    C = w2.shape[0]
    K_h = order * S
    in_total = K_h * D
    assert w1.shape == (C, in_total)

    # Pad the node axis to a multiple of 128: fully unmasked, MXU-width-aligned
    # tiles.  Padded rows/cols of A and x are zero and inert through the
    # propagation; padded output rows pick up the BN shift after linear1 but
    # are sliced off below (keep that slice).
    Np = max(((N + 127) // 128) * 128, 128)
    if Np != N:
        x = jnp.pad(x, ((0, 0), (0, Np - N), (0, 0)))
        supports = jnp.pad(supports, ((0, 0), (0, Np - N), (0, Np - N)))

    Bt = _pick_batch_tile(B, Np, D, C, S, K_h)
    G = B // Bt
    fold_d, fold_c = Bt * D, Bt * C

    # Fold batch into the lane axis: (B, Np, D) -> (Np, B*D), lane = b*D + d.
    x_wide = jnp.transpose(x, (1, 0, 2)).reshape(Np, B * D)

    # bf16 pre-cast of the heavy, grid-invariant operand.
    supports_bf = supports.astype(jnp.bfloat16)

    # Fold BatchNorm1d (eval mode, running stats) into linear1:
    #   bn(x @ W1^T) = x @ (scale*W1)^T + shift
    inv_std = lax.rsqrt(run_var.reshape(-1).astype(jnp.float32) + bn_eps)
    scale = gamma.reshape(-1) * inv_std                          # (C,)
    shift = beta.reshape(-1) - run_mean.reshape(-1) * scale      # (C,)
    w1_bn = w1 * scale[:, None]                                  # (C, in_total)

    # Batch-block-diagonal weights (built once at trace time) so the epilogue
    # consumes the lane-folded activations directly — no unfold/transpose/concat:
    #   W1bd[k*Bt*D + b*D + d, b'*C + c]  = (b == b') * (scale[c] * W1[c, k*D + d])
    #   W2bd[b*C + c,          b'*C + c'] = (b == b') * W2[c', c]
    eye_b = jnp.eye(Bt, dtype=jnp.float32)
    w1_blocks = w1_bn.T.reshape(K_h, D, C)                       # (K, D, C)
    w1bd = jnp.einsum('kdc,bp->kbdpc', w1_blocks, eye_b)
    w1bd = w1bd.reshape(K_h * fold_d, fold_c).astype(jnp.bfloat16)
    w2bd = jnp.einsum('cf,bp->bcpf', w2.T, eye_b)
    w2bd = w2bd.reshape(fold_c, fold_c).astype(jnp.bfloat16)
    bias_fold = jnp.tile(shift, Bt).reshape(1, fold_c).astype(jnp.float32)

    kernel = functools.partial(ginconv_kernel, order=order, support_len=S,
                               fold_d=fold_d)

    vmem_need = _vmem_estimate(Np, Bt, D, C, S, K_h)
    vmem_limit = int(min(max(2 * vmem_need + (8 << 20), 32 << 20), 64 << 20))

    # TODO(synk): pipeline_mode=pl.Buffered(1) on the grid-invariant blocks
    # (supports / W1bd / W2bd) would halve their VMEM residency on v7x; left on
    # default buffering to stay on the conservatively-supported BlockSpec API.
    # NOTE: the resident (S, Np, Np) bf16 supports block caps Np around ~2.8k
    # on v7x's 64 MiB VMEM; beyond that, add an 'arbitrary' grid axis over the
    # adjacency contraction dimension with a VMEM accumulator.
    out_wide = pl.pallas_call(
        kernel,
        out_shape=jax.ShapeDtypeStruct((Np, B * C), x.dtype),
        grid=(G,),
        in_specs=[
            pl.BlockSpec(memory_space=pltpu.MemorySpace.SMEM),       # eps (1,)
            pl.BlockSpec((Np, fold_d), lambda g: (0, g)),            # x_wide
            pl.BlockSpec((S, Np, Np), lambda g: (0, 0, 0)),          # supports bf16
            pl.BlockSpec((K_h * fold_d, fold_c), lambda g: (0, 0)),  # block-diag W1'
            pl.BlockSpec((1, fold_c), lambda g: (0, 0)),             # folded BN shift
            pl.BlockSpec((fold_c, fold_c), lambda g: (0, 0)),        # block-diag W2
        ],
        out_specs=pl.BlockSpec((Np, fold_c), lambda g: (0, g)),      # lane = b*C + c
        scratch_shapes=[pltpu.VMEM((Np, K_h * fold_d), jnp.bfloat16)],
        compiler_params=pltpu.CompilerParams(
            dimension_semantics=("parallel",),        # batch tiles -> both TCs
            vmem_limit_bytes=vmem_limit),
    )(eps, x_wide, supports_bf, w1bd, bias_fold, w2bd)

    # (Np, B*C) -> (B, N, C); the slice drops the padded (BN-shifted) rows.
    return out_wide.reshape(Np, B, C).transpose(1, 0, 2)[:, :N, :]


def ginconv_reference(x, supports, eps, w1, gamma, beta, run_mean, run_var, w2,
                      *, order, bn_eps=1e-5):
    res = []
    for s in range(supports.shape[0]):
        A = supports[s]
        out = x
        for _ in range(order):
            out = (1.0 + eps[0]) * out + jnp.einsum("nm,bmd->bnd", A, out)
            res.append(out)
    out = jnp.concatenate(res, axis=2)
    out = out @ w1.T
    out = (out - run_mean) * lax.rsqrt(run_var + bn_eps) * gamma + beta
    out = jnp.maximum(out, 0.0) @ w2.T
    return out


if __name__ == "__main__":
    # Small shapes consistent with the module; B chosen so the selected batch
    # tile folds to 256 lanes (full 256-wide MXU) with 2 parallel grid steps.
    B, N, in_dim, out_dim = 32, 16, 16, 32
    order, support_len = 2, 2
    in_total = order * support_len * in_dim

    key = jax.random.PRNGKey(0)
    k_x, k_a, k_w1, k_w2 = jax.random.split(key, 4)

    x = jax.random.normal(k_x, (B, N, in_dim), jnp.float32)
    supports = jax.random.uniform(k_a, (support_len, N, N), jnp.float32)
    supports = supports / jnp.sum(supports, axis=-1, keepdims=True)

    # Parameter init matching the module (xavier_uniform, bias-free linears,
    # eps Parameter([0]), fresh BatchNorm running stats).
    b1 = (6.0 / (in_total + out_dim)) ** 0.5
    w1 = jax.random.uniform(k_w1, (out_dim, in_total), jnp.float32, -b1, b1)
    b2 = (6.0 / (out_dim + out_dim)) ** 0.5
    w2 = jax.random.uniform(k_w2, (out_dim, out_dim), jnp.float32, -b2, b2)
    eps = jnp.zeros((1,), jnp.float32)
    gamma = jnp.ones((1, out_dim), jnp.float32)
    beta = jnp.zeros((1, out_dim), jnp.float32)
    run_mean = jnp.zeros((1, out_dim), jnp.float32)
    run_var = jnp.ones((1, out_dim), jnp.float32)

    out = ginconv_forward(x, supports, eps, w1, gamma, beta, run_mean, run_var,
                          w2, order=order)
    out = jax.block_until_ready(out)

    ref = ginconv_reference(x, supports, eps, w1, gamma, beta, run_mean,
                            run_var, w2, order=order)
    assert out.shape == (B, N, out_dim)
    err = float(jnp.max(jnp.abs(out - ref)))
    # bf16 MXU operands (f32 accumulation) -> loosened tolerance vs f32 ref.
    assert jnp.allclose(out, ref, atol=8e-2, rtol=5e-2), f"max abs err {err}"

    # TODO(synk): Dropout(p=0.05) and BatchNorm batch-statistics updates are
    # training-mode stochastic / batch-coupled ops; kernel is eval-mode.
    print("KERNEL_OK")
</pallas_src>

<mosaic_0001>
module attributes {stable_mosaic.version = 11 : i64} {
  func.func @ginconv_kernel(%arg0: i32, %arg1: memref<1xf32, #tpu.memory_space<smem>>, %arg2: memref<128x256xf32, #tpu.memory_space<vmem>>, %arg3: memref<2x128x128xbf16, #tpu.memory_space<vmem>>, %arg4: memref<1024x512xbf16, #tpu.memory_space<vmem>>, %arg5: memref<1x512xf32, #tpu.memory_space<vmem>>, %arg6: memref<512x512xbf16, #tpu.memory_space<vmem>>, %arg7: memref<128x512xf32, #tpu.memory_space<vmem>>, %arg8: memref<128x1024xbf16, #tpu.memory_space<vmem>>) attributes {dimension_semantics = [#tpu.dimension_semantics<parallel>], iteration_bounds = array<i64: 2>, scalar_prefetch = 0 : i64, scratch_operands = 1 : i64, tpu.core_type = #tpu.core_type<tc>, window_params = [{transform_indices = @transform_0, window_bounds = array<i64: 1>}, {transform_indices = @transform_1, window_bounds = array<i64: 128, 256>}, {pipeline_mode = #tpu.pipeline_mode<synchronous>, transform_indices = @transform_2, window_bounds = array<i64: 2, 128, 128>}, {pipeline_mode = #tpu.pipeline_mode<synchronous>, transform_indices = @transform_3, window_bounds = array<i64: 1024, 512>}, {pipeline_mode = #tpu.pipeline_mode<synchronous>, transform_indices = @transform_4, window_bounds = array<i64: 1, 512>}, {pipeline_mode = #tpu.pipeline_mode<synchronous>, transform_indices = @transform_5, window_bounds = array<i64: 512, 512>}, {transform_indices = @transform_6, window_bounds = array<i64: 128, 512>}]} {
    %c0 = arith.constant 0 : index
    %0 = memref.load %arg1[%c0] : memref<1xf32, #tpu.memory_space<smem>>
    %c0_0 = arith.constant 0 : index
    %c0_1 = arith.constant 0 : index
    %1 = vector.load %arg2[%c0_0, %c0_1] : memref<128x256xf32, #tpu.memory_space<vmem>>, vector<128x256xf32>
    %c0_2 = arith.constant 0 : index
    %c0_3 = arith.constant 0 : index
    %c0_4 = arith.constant 0 : index
    %2 = vector.load %arg3[%c0_2, %c0_3, %c0_4] : memref<2x128x128xbf16, #tpu.memory_space<vmem>>, vector<1x128x128xbf16>
    %3 = vector.shape_cast %2 : vector<1x128x128xbf16> to vector<128x128xbf16>
    %cst = arith.constant 1.000000e+00 : f32
    %4 = arith.addf %cst, %0 : f32
    %5 = vector.broadcast %4 : f32 to vector<128x256xf32>
    %6 = arith.mulf %5, %1 : vector<128x256xf32>
    %7 = arith.truncf %1 : vector<128x256xf32> to vector<128x256xbf16>
    %cst_5 = arith.constant dense<0.000000e+00> : vector<128x256xf32>
    %8 = tpu.matmul %3, %7, %cst_5 {dimension_numbers = #tpu.dot_dimension_numbers<[1], [0], [0], [1], [0, 0, 1, 1], [], []>} : vector<128x128xbf16>, vector<128x256xbf16>, vector<128x256xf32> -> vector<128x256xf32>
    %9 = arith.addf %6, %8 : vector<128x256xf32>
    %10 = arith.truncf %9 : vector<128x256xf32> to vector<128x256xbf16>
    %c0_6 = arith.constant 0 : index
    %c0_7 = arith.constant 0 : index
    %11 = vector.load %arg8[%c0_6, %c0_7] : memref<128x1024xbf16, #tpu.memory_space<vmem>>, vector<128x256xbf16>
    tpu.vector_store %arg8[%c0_6, %c0_7], %10 {strides = array<i32>} : memref<128x1024xbf16, #tpu.memory_space<vmem>>, vector<128x256xbf16>,
    %cst_8 = arith.constant 1.000000e+00 : f32
    %12 = arith.addf %cst_8, %0 : f32
    %13 = vector.broadcast %12 : f32 to vector<128x256xf32>
    %14 = arith.mulf %13, %9 : vector<128x256xf32>
    %15 = arith.truncf %9 : vector<128x256xf32> to vector<128x256xbf16>
    %cst_9 = arith.constant dense<0.000000e+00> : vector<128x256xf32>
    %16 = tpu.matmul %3, %15, %cst_9 {dimension_numbers = #tpu.dot_dimension_numbers<[1], [0], [0], [1], [0, 0, 1, 1], [], []>} : vector<128x128xbf16>, vector<128x256xbf16>, vector<128x256xf32> -> vector<128x256xf32>
    %17 = arith.addf %14, %16 : vector<128x256xf32>
    %18 = arith.truncf %17 : vector<128x256xf32> to vector<128x256xbf16>
    %c0_10 = arith.constant 0 : index
    %c256 = arith.constant 256 : index
    %19 = vector.load %arg8[%c0_10, %c256] : memref<128x1024xbf16, #tpu.memory_space<vmem>>, vector<128x256xbf16>
    tpu.vector_store %arg8[%c0_10, %c256], %18 {strides = array<i32>} : memref<128x1024xbf16, #tpu.memory_space<vmem>>, vector<128x256xbf16>,
    %c1 = arith.constant 1 : index
    %c0_11 = arith.constant 0 : index
    %c0_12 = arith.constant 0 : index
    %20 = vector.load %arg3[%c1, %c0_11, %c0_12] : memref<2x128x128xbf16, #tpu.memory_space<vmem>>, vector<1x128x128xbf16>
    %21 = vector.shape_cast %20 : vector<1x128x128xbf16> to vector<128x128xbf16>
    %cst_13 = arith.constant 1.000000e+00 : f32
    %22 = arith.addf %cst_13, %0 : f32
    %23 = vector.broadcast %22 : f32 to vector<128x256xf32>
    %24 = arith.mulf %23, %1 : vector<128x256xf32>
    %25 = arith.truncf %1 : vector<128x256xf32> to vector<128x256xbf16>
    %cst_14 = arith.constant dense<0.000000e+00> : vector<128x256xf32>
    %26 = tpu.matmul %21, %25, %cst_14 {dimension_numbers = #tpu.dot_dimension_numbers<[1], [0], [0], [1], [0, 0, 1, 1], [], []>} : vector<128x128xbf16>, vector<128x256xbf16>, vector<128x256xf32> -> vector<128x256xf32>
    %27 = arith.addf %24, %26 : vector<128x256xf32>
    %28 = arith.truncf %27 : vector<128x256xf32> to vector<128x256xbf16>
    %c0_15 = arith.constant 0 : index
    %c512 = arith.constant 512 : index
    %29 = vector.load %arg8[%c0_15, %c512] : memref<128x1024xbf16, #tpu.memory_space<vmem>>, vector<128x256xbf16>
    tpu.vector_store %arg8[%c0_15, %c512], %28 {strides = array<i32>} : memref<128x1024xbf16, #tpu.memory_space<vmem>>, vector<128x256xbf16>,
    %cst_16 = arith.constant 1.000000e+00 : f32
    %30 = arith.addf %cst_16, %0 : f32
    %31 = vector.broadcast %30 : f32 to vector<128x256xf32>
    %32 = arith.mulf %31, %27 : vector<128x256xf32>
    %33 = arith.truncf %27 : vector<128x256xf32> to vector<128x256xbf16>
    %cst_17 = arith.constant dense<0.000000e+00> : vector<128x256xf32>
    %34 = tpu.matmul %21, %33, %cst_17 {dimension_numbers = #tpu.dot_dimension_numbers<[1], [0], [0], [1], [0, 0, 1, 1], [], []>} : vector<128x128xbf16>, vector<128x256xbf16>, vector<128x256xf32> -> vector<128x256xf32>
    %35 = arith.addf %32, %34 : vector<128x256xf32>
    %36 = arith.truncf %35 : vector<128x256xf32> to vector<128x256xbf16>
    %c0_18 = arith.constant 0 : index
    %c768 = arith.constant 768 : index
    %37 = vector.load %arg8[%c0_18, %c768] : memref<128x1024xbf16, #tpu.memory_space<vmem>>, vector<128x256xbf16>
    tpu.vector_store %arg8[%c0_18, %c768], %36 {strides = array<i32>} : memref<128x1024xbf16, #tpu.memory_space<vmem>>, vector<128x256xbf16>,
    %c0_19 = arith.constant 0 : index
    %c0_20 = arith.constant 0 : index
    %38 = vector.load %arg8[%c0_19, %c0_20] : memref<128x1024xbf16, #tpu.memory_space<vmem>>, vector<128x1024xbf16>
    %c0_21 = arith.constant 0 : index
    %c0_22 = arith.constant 0 : index
    %39 = vector.load %arg4[%c0_21, %c0_22] : memref<1024x512xbf16, #tpu.memory_space<vmem>>, vector<1024x512xbf16>
    %cst_23 = arith.constant dense<0.000000e+00> : vector<128x512xf32>
    %40 = tpu.matmul %38, %39, %cst_23 {dimension_numbers = #tpu.dot_dimension_numbers<[1], [0], [0], [1], [0, 0, 1, 1], [], []>} : vector<128x1024xbf16>, vector<1024x512xbf16>, vector<128x512xf32> -> vector<128x512xf32>
    %c0_24 = arith.constant 0 : index
    %c0_25 = arith.constant 0 : index
    %41 = vector.load %arg5[%c0_24, %c0_25] : memref<1x512xf32, #tpu.memory_space<vmem>>, vector<1x512xf32>
    %42 = vector.broadcast %41 : vector<1x512xf32> to vector<128x512xf32>
    %43 = arith.addf %40, %42 : vector<128x512xf32>
    %cst_26 = arith.constant 0.000000e+00 : f32
    %44 = vector.broadcast %cst_26 : f32 to vector<128x512xf32>
    %45 = arith.maximumf %43, %44 : vector<128x512xf32>
    %46 = arith.truncf %45 : vector<128x512xf32> to vector<128x512xbf16>
    %c0_27 = arith.constant 0 : index
    %c0_28 = arith.constant 0 : index
    %47 = vector.load %arg6[%c0_27, %c0_28] : memref<512x512xbf16, #tpu.memory_space<vmem>>, vector<512x512xbf16>
    %cst_29 = arith.constant dense<0.000000e+00> : vector<128x512xf32>
    %48 = tpu.matmul %46, %47, %cst_29 {dimension_numbers = #tpu.dot_dimension_numbers<[1], [0], [0], [1], [0, 0, 1, 1], [], []>} : vector<128x512xbf16>, vector<512x512xbf16>, vector<128x512xf32> -> vector<128x512xf32>
    %c0_30 = arith.constant 0 : index
    %c0_31 = arith.constant 0 : index
    %49 = vector.load %arg7[%c0_30, %c0_31] : memref<128x512xf32, #tpu.memory_space<vmem>>, vector<128x512xf32>
    tpu.vector_store %arg7[%c0_30, %c0_31], %48 {strides = array<i32>} : memref<128x512xf32, #tpu.memory_space<vmem>>, vector<128x512xf32>,
    return
  }
  func.func @transform_0(%arg0: i32) -> i32 {
    %c0_i32 = arith.constant 0 : i32
    %c0_i32_0 = arith.constant 0 : i32
    return %c0_i32 : i32
  }
  func.func @transform_1(%arg0: i32) -> (i32, i32) {
    %c0_i32 = arith.constant 0 : i32
    %c0_i32_0 = arith.constant 0 : i32
    return %c0_i32, %arg0 : i32, i32
  }
  func.func @transform_2(%arg0: i32) -> (i32, i32, i32) {
    %c0_i32 = arith.constant 0 : i32
    %c0_i32_0 = arith.constant 0 : i32
    %c0_i32_1 = arith.constant 0 : i32
    %c0_i32_2 = arith.constant 0 : i32
    return %c0_i32, %c0_i32_0, %c0_i32_1 : i32, i32, i32
  }
  func.func @transform_3(%arg0: i32) -> (i32, i32) {
    %c0_i32 = arith.constant 0 : i32
    %c0_i32_0 = arith.constant 0 : i32
    %c0_i32_1 = arith.constant 0 : i32
    return %c0_i32, %c0_i32_0 : i32, i32
  }
  func.func @transform_4(%arg0: i32) -> (i32, i32) {
    %c0_i32 = arith.constant 0 : i32
    %c0_i32_0 = arith.constant 0 : i32
    %c0_i32_1 = arith.constant 0 : i32
    return %c0_i32, %c0_i32_0 : i32, i32
  }
  func.func @transform_5(%arg0: i32) -> (i32, i32) {
    %c0_i32 = arith.constant 0 : i32
    %c0_i32_0 = arith.constant 0 : i32
    %c0_i32_1 = arith.constant 0 : i32
    return %c0_i32, %c0_i32_0 : i32, i32
  }
  func.func @transform_6(%arg0: i32) -> (i32, i32) {
    %c0_i32 = arith.constant 0 : i32
    %c0_i32_0 = arith.constant 0 : i32
    return %c0_i32, %arg0 : i32, i32
  }
}

</mosaic_0001>

<llo_original>
// kernel: tpu_custom_call.1
$region0: #{tpu_custom_call.1}
  #allocation0 [shape = 'u32[]', space=smem, size = 0x4, offset = 0x4, fixed_abs, tag = 'smem constant byte address 0x4 - core index']
  #allocation1 [shape = 'u32[144,128]{1,0:T(1,128)}', space=vmem, size = 0x12000, scoped, tag = 'internal scratch']
  #allocation2 [shape = 'bf16[128,1024]{1,0:T(16,128)(2,1)}', space=vmem, size = 0x40000, scoped, tag = 'scratch operand']
  #allocation3 [shape = 'f32[1]{0:T(128)S(6)}', space=smem, size = 0x200, scoped, tag = 'scoped memory for tpu_custom_call.1']
  %s0 = inlined_call_operand.<no memory space> [shape: f32[1], index: 0, kind: input, shape index: {}]
  %s1 = inlined_call_operand.hbm [shape: f32[128,512], index: 1, kind: input, shape index: {}]
  %s2 = inlined_call_operand.hbm [shape: bf16[2,128,128], index: 2, kind: input, shape index: {}]
  %s3 = inlined_call_operand.hbm [shape: bf16[1024,512], index: 3, kind: input, shape index: {}]
  %s4 = inlined_call_operand.vmem [shape: f32[1,512], index: 4, kind: input, shape index: {}]
  %s5 = inlined_call_operand.hbm [shape: bf16[512,512], index: 5, kind: input, shape index: {}]
  %s6 = inlined_call_operand.hbm [shape: f32[128,1024], index: 6, kind: output, shape index: {}]
  %s7 = sld [smem:[#allocation0]]
  $region73: #{tpu_custom_call.1} parent=0
    _
  %s9 = ssub.s32 1, %s7
  %s10 = scalar_select 0, %s9, %s7
  %11 = sst [smem:[#allocation3]] %s0
  $region1: #{tpu_custom_call.1} parent=0
    #allocation4 [shape = 'u8[262144]{0}', space=vmem, size = 0x40000, scoped, tag = 'input window, operand 1']
    #allocation5 [shape = 's32[2]{0}', space=sflag, size = 0x8, scoped, tag = 'scoped memory for tpu_custom_call.1']
    #allocation6 [shape = 's32[2]{0}', space=sflag, size = 0x8, scoped, tag = 'scoped memory for tpu_custom_call.1']
    #allocation7 [shape = 'u8[65536]{0}', space=vmem, size = 0x10000, scoped, tag = 'input window, operand 2, single buffered']
    #allocation8 [shape = 's32[1]{0}', space=sflag, size = 0x4, scoped, tag = 'scoped memory for tpu_custom_call.1']
    #allocation9 [shape = 'u8[1048576]{0}', space=vmem, size = 0x100000, scoped, tag = 'input window, operand 3, single buffered']
    #allocation10 [shape = 'u8[524288]{0}', space=vmem, size = 0x80000, scoped, tag = 'input window, operand 5, single buffered']
    #allocation11 [shape = 's32[1]{0}', space=sflag, size = 0x4, scoped, tag = 'scoped memory for tpu_custom_call.1']
    #allocation12 [shape = 'u8[524288]{0}', space=vmem, size = 0x80000, scoped, tag = 'output window, operand 0']
    %12 = vsyncpa [#allocation5], 0
    %s13 = scalar_lea.sflag [#allocation5], 1
    %14 = vsyncpa %s13, 0
    %15 = vsyncpa [#allocation8], 0
    %16 = vsyncpa [#allocation11], 0
    %17 = vsyncpa [#allocation6], 0
    %s18 = scalar_lea.sflag [#allocation6], 1
    %19 = vsyncpa %s18, 0
    loop: start=0, step=1, limit=4
    $region2: #{tpu_custom_call.1} parent=1 // loop_pre_header
      _
    $region3: #{tpu_custom_call.1} parent=1 // loop_header
      %s21 = sphi 0, %s25
      %p22 = scmp.ge.s32.totalorder %s21, 4
      %s29 = sphi 0, %s29
      %s31 = sphi 0, %s29
      %s32 = sphi 0, %s31
      %s46 = sphi 0, %s32
      %s52 = sphi 0, %s54
      %s55 = sphi 0, %s52
      %s56 = sphi 0, %s55
      %s72 = sphi 0, %s56
      %s76 = sphi 0, %s76
      %s78 = sphi 0, %s76
      %s79 = sphi 0, %s78
      %s93 = sphi 0, %s79
      %s97 = sphi 0, %s97
      %s99 = sphi 0, %s97
      %s100 = sphi 0, %s99
      %s114 = sphi 0, %s100
      %s118 = sphi 0, %s118
      %s120 = sphi 0, %s118
      %s121 = sphi 0, %s120
      %s135 = sphi 0, %s121
      %s139 = sphi 0, %s139
      %s141 = sphi 0, %s139
      %s142 = sphi 0, %s141
      %s156 = sphi 0, %s142
      %s162 = sphi 0, %s164
      %s165 = sphi 0, %s162
      %s166 = sphi 0, %s165
      %s182 = sphi 0, %s166
    $region4: #{tpu_custom_call.1} parent=1 // loop_header_branch
      %24 = sbr.rel (%p22) target = $region8
    $region5: #{tpu_custom_call.1} parent=1 // loop_body
      %s26 = ssub.s32 %s21, 1
      %s27 = ssub.s32 %s21, 2
      %s28 = sadd.s32 %s21, 1
      %s30 = sadd.s32 %s29, 1
      %p33 = scmp.eq.s32.totalorder %s21, 1
      %p34 = scmp.ne.s32.totalorder %s29, %s31
      %p35 = scmp.eq.s32.totalorder %s21, 0
      %p36 = por %p34, %p35
      %p37 = scmp.ne.s32.totalorder %s29, %s31
      %p38 = scmp.eq.s32.totalorder %s26, 1
      %p39 = por %p37, %p38
      %p40 = scmp.ne.s32.totalorder %s31, %s32
      %p41 = scmp.eq.s32.totalorder %s26, 0
      %p42 = por %p40, %p41
      %p43 = scmp.ne.s32.totalorder %s31, %s32
      %p44 = scmp.eq.s32.totalorder %s27, 1
      %p45 = por %p43, %p44
      %p47 = scmp.ne.s32.totalorder %s32, %s46
      %p48 = scmp.eq.s32.totalorder %s27, 0
      %p49 = por %p47, %p48
      %s50 = ssub.s32 %s21, %s28
      %p51 = scmp.eq.s32.totalorder %s50, 0
      %s53 = sadd.s32 %s52, 1
      %s54 = scalar_select %p51, %s52, %s53
      %p57 = pneg %p51
      %p58 = scmp.eq.s32.totalorder %s21, 1
      %p59 = por %p57, %p58
      %p60 = scmp.ne.s32.totalorder %s52, %s55
      %p61 = scmp.eq.s32.totalorder %s21, 0
      %p62 = por %p60, %p61
      %p63 = scmp.ne.s32.totalorder %s52, %s55
      %p64 = scmp.eq.s32.totalorder %s26, 1
      %p65 = por %p63, %p64
      %p66 = scmp.ne.s32.totalorder %s55, %s56
      %p67 = scmp.eq.s32.totalorder %s26, 0
      %p68 = por %p66, %p67
      %p69 = scmp.ne.s32.totalorder %s55, %s56
      %p70 = scmp.eq.s32.totalorder %s27, 1
      %p71 = por %p69, %p70
      %p73 = scmp.ne.s32.totalorder %s56, %s72
      %p74 = scmp.eq.s32.totalorder %s27, 0
      %p75 = por %p73, %p74
      %s77 = sadd.s32 %s76, 1
      %p80 = scmp.eq.s32.totalorder %s21, 1
      %p81 = scmp.ne.s32.totalorder %s76, %s78
      %p82 = scmp.eq.s32.totalorder %s21, 0
      %p83 = por %p81, %p82
      %p84 = scmp.ne.s32.totalorder %s76, %s78
      %p85 = scmp.eq.s32.totalorder %s26, 1
      %p86 = por %p84, %p85
      %p87 = scmp.ne.s32.totalorder %s78, %s79
      %p88 = scmp.eq.s32.totalorder %s26, 0
      %p89 = por %p87, %p88
      %p90 = scmp.ne.s32.totalorder %s78, %s79
      %p91 = scmp.eq.s32.totalorder %s27, 1
      %p92 = por %p90, %p91
      %p94 = scmp.ne.s32.totalorder %s79, %s93
      %p95 = scmp.eq.s32.totalorder %s27, 0
      %p96 = por %p94, %p95
      %s98 = sadd.s32 %s97, 1
      %p101 = scmp.eq.s32.totalorder %s21, 1
      %p102 = scmp.ne.s32.totalorder %s97, %s99
      %p103 = scmp.eq.s32.totalorder %s21, 0
      %p104 = por %p102, %p103
      %p105 = scmp.ne.s32.totalorder %s97, %s99
      %p106 = scmp.eq.s32.totalorder %s26, 1
      %p107 = por %p105, %p106
      %p108 = scmp.ne.s32.totalorder %s99, %s100
      %p109 = scmp.eq.s32.totalorder %s26, 0
      %p110 = por %p108, %p109
      %p111 = scmp.ne.s32.totalorder %s99, %s100
      %p112 = scmp.eq.s32.totalorder %s27, 1
      %p113 = por %p111, %p112
      %p115 = scmp.ne.s32.totalorder %s100, %s114
      %p116 = scmp.eq.s32.totalorder %s27, 0
      %p117 = por %p115, %p116
      %s119 = sadd.s32 %s118, 1
      %p122 = scmp.eq.s32.totalorder %s21, 1
      %p123 = scmp.ne.s32.totalorder %s118, %s120
      %p124 = scmp.eq.s32.totalorder %s21, 0
      %p125 = por %p123, %p124
      %p126 = scmp.ne.s32.totalorder %s118, %s120
      %p127 = scmp.eq.s32.totalorder %s26, 1
      %p128 = por %p126, %p127
      %p129 = scmp.ne.s32.totalorder %s120, %s121
      %p130 = scmp.eq.s32.totalorder %s26, 0
      %p131 = por %p129, %p130
      %p132 = scmp.ne.s32.totalorder %s120, %s121
      %p133 = scmp.eq.s32.totalorder %s27, 1
      %p134 = por %p132, %p133
      %p136 = scmp.ne.s32.totalorder %s121, %s135
      %p137 = scmp.eq.s32.totalorder %s27, 0
      %p138 = por %p136, %p137
      %s140 = sadd.s32 %s139, 1
      %p143 = scmp.eq.s32.totalorder %s21, 1
      %p144 = scmp.ne.s32.totalorder %s139, %s141
      %p145 = scmp.eq.s32.totalorder %s21, 0
      %p146 = por %p144, %p145
      %p147 = scmp.ne.s32.totalorder %s139, %s141
      %p148 = scmp.eq.s32.totalorder %s26, 1
      %p149 = por %p147, %p148
      %p150 = scmp.ne.s32.totalorder %s141, %s142
      %p151 = scmp.eq.s32.totalorder %s26, 0
      %p152 = por %p150, %p151
      %p153 = scmp.ne.s32.totalorder %s141, %s142
      %p154 = scmp.eq.s32.totalorder %s27, 1
      %p155 = por %p153, %p154
      %p157 = scmp.ne.s32.totalorder %s142, %s156
      %p158 = scmp.eq.s32.totalorder %s27, 0
      %p159 = por %p157, %p158
      %s160 = ssub.s32 %s21, %s28
      %p161 = scmp.eq.s32.totalorder %s160, 0
      %s163 = sadd.s32 %s162, 1
      %s164 = scalar_select %p161, %s162, %s163
      %p167 = pneg %p161
      %p168 = scmp.eq.s32.totalorder %s21, 1
      %p169 = por %p167, %p168
      %p170 = scmp.ne.s32.totalorder %s162, %s165
      %p171 = scmp.eq.s32.totalorder %s21, 0
      %p172 = por %p170, %p171
      %p173 = scmp.ne.s32.totalorder %s162, %s165
      %p174 = scmp.eq.s32.totalorder %s26, 1
      %p175 = por %p173, %p174
      %p176 = scmp.ne.s32.totalorder %s165, %s166
      %p177 = scmp.eq.s32.totalorder %s26, 0
      %p178 = por %p176, %p177
      %p179 = scmp.ne.s32.totalorder %s165, %s166
      %p180 = scmp.eq.s32.totalorder %s27, 1
      %p181 = por %p179, %p180
      %p183 = scmp.ne.s32.totalorder %s166, %s182
      %p184 = scmp.eq.s32.totalorder %s27, 0
      %p185 = por %p183, %p184
      %p186 = scmp.le.s32.totalorder 1, %s21
      %p187 = scmp.lt.s32.totalorder %s21, 3
      %p188 = pnand %p186, %p187
      %p189 = pneg %p188
      // Predicated region
      $region9: #{tpu_custom_call.1} parent=5 // pred_check
        _
      $region10: #{tpu_custom_call.1} parent=5 // pred_check_branch
        %191 = sbr.rel (%p188) target = $region12
      $region11: #{tpu_custom_call.1} parent=5 // pred_region
        %s192 = ssub.s32 %s21, 1
        // Predicated region
        $region13: #{tpu_custom_call.1} parent=11 // pred_check
          %p193 = pneg %p42
        $region14: #{tpu_custom_call.1} parent=11 // pred_check_branch
          %195 = sbr.rel (%p193) target = $region16
        $region15: #{tpu_custom_call.1} parent=11 // pred_region
          _
        $region16: #{tpu_custom_call.1} parent=11 // pred_fallthru
          _
        // Predicated region
        $region17: #{tpu_custom_call.1} parent=11 // pred_check
          %p196 = pneg %p89
        $region18: #{tpu_custom_call.1} parent=11 // pred_check_branch
          %198 = sbr.rel (%p196) target = $region20
        $region19: #{tpu_custom_call.1} parent=11 // pred_region
          %s200 = ssub.s32 2048, 2048
          %201 = vsyncadd [#allocation8], %s200
          %s202 = sshll.u32 [#allocation7], 4
          %s203 = int_to_ptr.vmem [resolvable:$true] %s202
          %208 = dma.hbm_to_vmem [thread:$0]  %s2, 2048, %s203, [#allocation8], 64, 64, 4
        $region20: #{tpu_custom_call.1} parent=11 // pred_fallthru
          _
        // Predicated region
        $region21: #{tpu_custom_call.1} parent=11 // pred_check
          %p209 = pneg %p110
        $region22: #{tpu_custom_call.1} parent=11 // pred_check_branch
          %211 = sbr.rel (%p209) target = $region24
        $region23: #{tpu_custom_call.1} parent=11 // pred_region
          %s213 = ssub.s32 32768, 32768
          %214 = vsyncadd [#allocation8], %s213
          %s215 = sshll.u32 [#allocation9], 4
          %s216 = int_to_ptr.vmem [resolvable:$true] %s215
          %221 = dma.hbm_to_vmem [thread:$0]  %s3, 32768, %s216, [#allocation8], 256, 256, 16
        $region24: #{tpu_custom_call.1} parent=11 // pred_fallthru
          _
        // Predicated region
        $region25: #{tpu_custom_call.1} parent=11 // pred_check
          %p222 = pneg %p131
        $region26: #{tpu_custom_call.1} parent=11 // pred_check_branch
          %224 = sbr.rel (%p222) target = $region28
        $region27: #{tpu_custom_call.1} parent=11 // pred_region
          _
        $region28: #{tpu_custom_call.1} parent=11 // pred_fallthru
          _
        // Predicated region
        $region29: #{tpu_custom_call.1} parent=11 // pred_check
          %p225 = pneg %p152
        $region30: #{tpu_custom_call.1} parent=11 // pred_check_branch
          %227 = sbr.rel (%p225) target = $region32
        $region31: #{tpu_custom_call.1} parent=11 // pred_region
          %s229 = ssub.s32 16384, 16384
          %230 = vsyncadd [#allocation11], %s229
          %s231 = sshll.u32 [#allocation10], 4
          %s232 = int_to_ptr.vmem [resolvable:$true] %s231
          %237 = dma.hbm_to_vmem [thread:$0]  %s5, 16384, %s232, [#allocation11], 256, 256, 16
        $region32: #{tpu_custom_call.1} parent=11 // pred_fallthru
          _
      $region12: #{tpu_custom_call.1} parent=5 // pred_fallthru
        _
      %p238 = scmp.lt.s32.totalorder %s21, 2
      // Predicated region
      $region33: #{tpu_custom_call.1} parent=5 // pred_check
        %p239 = pneg %p238
      $region34: #{tpu_custom_call.1} parent=5 // pred_check_branch
        %241 = sbr.rel (%p239) target = $region36
      $region35: #{tpu_custom_call.1} parent=5 // pred_region
        // Predicated region
        $region37: #{tpu_custom_call.1} parent=35 // pred_check
          %p242 = pneg %p62
        $region38: #{tpu_custom_call.1} parent=35 // pred_check_branch
          %244 = sbr.rel (%p242) target = $region40
        $region39: #{tpu_custom_call.1} parent=35 // pred_region
          %s245 = sand.u32 %s52, 1
          %s246 = scalar_lea.sflag [#allocation5], %s245
          %s247 = sand.u32 %s52, 1
          %s248 = smul.addr %s247, 256
          %s249 = scalar_lea.vmem [#allocation4], %s248
          %s250 = smul.u32 2, %s21
          %s252 = ssub.s32 4096, 4096
          %253 = vsyncadd %s246, %s252
          %s254 = smul.addr %s250, 128
          %s255 = scalar_lea.hbm %s1, %s254
          %s256 = sshll.u32 %s249, 4
          %s257 = int_to_ptr.vmem [resolvable:$true] %s256
          %262 = dma.hbm_to_vmem [thread:$0]  %s255, 4096, %s257, %s246, 512, 256, 16
        $region40: #{tpu_custom_call.1} parent=35 // pred_fallthru
          _
      $region36: #{tpu_custom_call.1} parent=5 // pred_fallthru
        _
      %p263 = scmp.le.s32.totalorder 1, %s21
      %p264 = scmp.lt.s32.totalorder %s21, 3
      %p265 = pnand %p263, %p264
      %p266 = pneg %p265
      // Predicated region
      $region41: #{tpu_custom_call.1} parent=5 // pred_check
        _
      $region42: #{tpu_custom_call.1} parent=5 // pred_check_branch
        %268 = sbr.rel (%p265) target = $region44
      $region43: #{tpu_custom_call.1} parent=5 // pred_region
        %s269 = ssub.s32 %s21, 1
        %s270 = sand.u32 %s55, 1
        %s271 = scalar_lea.sflag [#allocation5], %s270
        %s272 = sand.u32 %s55, 1
        %s273 = smul.addr %s272, 256
        %s274 = scalar_lea.vmem [#allocation4], %s273
        // Predicated region
        $region45: #{tpu_custom_call.1} parent=43 // pred_check
          %p275 = pneg %p68
        $region46: #{tpu_custom_call.1} parent=43 // pred_check_branch
          %277 = sbr.rel (%p275) target = $region48
        $region47: #{tpu_custom_call.1} parent=43 // pred_region
          %278 = dma.done %s271, 4096
        $region48: #{tpu_custom_call.1} parent=43 // pred_fallthru
          _
        // Predicated region
        $region49: #{tpu_custom_call.1} parent=43 // pred_check
          %p279 = pneg %p89
        $region50: #{tpu_custom_call.1} parent=43 // pred_check_branch
          %281 = sbr.rel (%p279) target = $region52
        $region51: #{tpu_custom_call.1} parent=43 // pred_region
          %282 = dma.done [#allocation8], 2048
        $region52: #{tpu_custom_call.1} parent=43 // pred_fallthru
          _
        // Predicated region
        $region53: #{tpu_custom_call.1} parent=43 // pred_check
          %p283 = pneg %p110
        $region54: #{tpu_custom_call.1} parent=43 // pred_check_branch
          %285 = sbr.rel (%p283) target = $region56
        $region55: #{tpu_custom_call.1} parent=43 // pred_region
          %286 = dma.done [#allocation8], 32768
        $region56: #{tpu_custom_call.1} parent=43 // pred_fallthru
          _
        // Predicated region
        $region57: #{tpu_custom_call.1} parent=43 // pred_check
          %p287 = pneg %p152
        $region58: #{tpu_custom_call.1} parent=43 // pred_check_branch
          %289 = sbr.rel (%p287) target = $region60
        $region59: #{tpu_custom_call.1} parent=43 // pred_region
          %290 = dma.done [#allocation11], 16384
        $region60: #{tpu_custom_call.1} parent=43 // pred_fallthru
          _
        %p291 = pneg %p42
        %p292 = pneg %p39
        %s293 = sand.u32 %s55, 1
        %s294 = scalar_lea.sflag [#allocation5], %s293
        %s295 = sand.u32 %s55, 1
        %s296 = smul.addr %s295, 256
        %s297 = scalar_lea.vmem [#allocation4], %s296
        %p298 = pneg %p68
        %p299 = pneg %p65
        %p300 = pneg %p89
        %p301 = pneg %p86
        %p302 = pneg %p110
        %p303 = pneg %p107
        %p304 = pneg %p131
        %p305 = pneg %p128
        %p306 = pneg %p152
        %p307 = pneg %p149
        %p308 = pneg %p178
        %p309 = pneg %p175
        %s310 = sand.u32 %s165, 1
        %s311 = scalar_lea.sflag [#allocation6], %s310
        %s312 = sand.u32 %s165, 1
        %s313 = smul.addr %s312, 512
        %s314 = scalar_lea.vmem [#allocation12], %s313
        %s315 = smul.u32 2, %s26
        %s316 = smul.u32 4, %s26
        %s318 = sld [smem:[#allocation3]]
        %v319 = vld [vmem:[%s274] sm:$0xff]
        %v320 = vld [vmem:[%s274 + $0x8] sm:$0xff]
        %v321 = vld [vmem:[%s274 + $0x10] sm:$0xff]
        %v322 = vld [vmem:[%s274 + $0x18] sm:$0xff]
        %v323 = vld [vmem:[%s274 + $0x20] sm:$0xff]
        %v324 = vld [vmem:[%s274 + $0x28] sm:$0xff]
        %v325 = vld [vmem:[%s274 + $0x30] sm:$0xff]
        %v326 = vld [vmem:[%s274 + $0x38] sm:$0xff]
        %v327 = vld [vmem:[%s274 + $0x40] sm:$0xff]
        %v328 = vld [vmem:[%s274 + $0x48] sm:$0xff]
        %v329 = vld [vmem:[%s274 + $0x50] sm:$0xff]
        %v330 = vld [vmem:[%s274 + $0x58] sm:$0xff]
        %v331 = vld [vmem:[%s274 + $0x60] sm:$0xff]
        %v332 = vld [vmem:[%s274 + $0x68] sm:$0xff]
        %v333 = vld [vmem:[%s274 + $0x70] sm:$0xff]
        %v334 = vld [vmem:[%s274 + $0x78] sm:$0xff]
        %v335 = vld [vmem:[%s274 + $0x80] sm:$0xff]
        %v336 = vld [vmem:[%s274 + $0x88] sm:$0xff]
        %v337 = vld [vmem:[%s274 + $0x90] sm:$0xff]
        %v338 = vld [vmem:[%s274 + $0x98] sm:$0xff]
        %v339 = vld [vmem:[%s274 + $0xa0] sm:$0xff]
        %v340 = vld [vmem:[%s274 + $0xa8] sm:$0xff]
        %v341 = vld [vmem:[%s274 + $0xb0] sm:$0xff]
        %v342 = vld [vmem:[%s274 + $0xb8] sm:$0xff]
        %v343 = vld [vmem:[%s274 + $0xc0] sm:$0xff]
        %v344 = vld [vmem:[%s274 + $0xc8] sm:$0xff]
        %v345 = vld [vmem:[%s274 + $0xd0] sm:$0xff]
        %v346 = vld [vmem:[%s274 + $0xd8] sm:$0xff]
        %v347 = vld [vmem:[%s274 + $0xe0] sm:$0xff]
        %v348 = vld [vmem:[%s274 + $0xe8] sm:$0xff]
        %v349 = vld [vmem:[%s274 + $0xf0] sm:$0xff]
        %v350 = vld [vmem:[%s274 + $0xf8] sm:$0xff]
        %v351 = vld [vmem:[#allocation7] sm:$0xf]
        %v352 = vld [vmem:[#allocation7 + $0x4] sm:$0xf]
        %v353 = vld [vmem:[#allocation7 + $0x8] sm:$0xf]
        %v354 = vld [vmem:[#allocation7 + $0xc] sm:$0xf]
        %v355 = vld [vmem:[#allocation7 + $0x10] sm:$0xf]
        %v356 = vld [vmem:[#allocation7 + $0x14] sm:$0xf]
        %v357 = vld [vmem:[#allocation7 + $0x18] sm:$0xf]
        %v358 = vld [vmem:[#allocation7 + $0x1c] sm:$0xf]
        %v359 = vld [vmem:[#allocation7 + $0x20] sm:$0xf]
        %v360 = vld [vmem:[#allocation7 + $0x24] sm:$0xf]
        %v361 = vld [vmem:[#allocation7 + $0x28] sm:$0xf]
        %v362 = vld [vmem:[#allocation7 + $0x2c] sm:$0xf]
        %v363 = vld [vmem:[#allocation7 + $0x30] sm:$0xf]
        %v364 = vld [vmem:[#allocation7 + $0x34] sm:$0xf]
        %v365 = vld [vmem:[#allocation7 + $0x38] sm:$0xf]
        %v366 = vld [vmem:[#allocation7 + $0x3c] sm:$0xf]
        %s367 = sadd.f32 %s318, 1.0
        %v368 = vstv %s367
        %v369 = vmul.f32 %v368, %v319
        %v370 = vmul.f32 %v368, %v320
        %v371 = vmul.f32 %v368, %v321
        %v372 = vmul.f32 %v368, %v322
        %v373 = vmul.f32 %v368, %v323
        %v374 = vmul.f32 %v368, %v324
        %v375 = vmul.f32 %v368, %v325
        %v376 = vmul.f32 %v368, %v326
        %v377 = vmul.f32 %v368, %v327
        %v378 = vmul.f32 %v368, %v328
        %v379 = vmul.f32 %v368, %v329
        %v380 = vmul.f32 %v368, %v330
        %v381 = vmul.f32 %v368, %v331
        %v382 = vmul.f32 %v368, %v332
        %v383 = vmul.f32 %v368, %v333
        %v384 = vmul.f32 %v368, %v334
        %v385 = vmul.f32 %v368, %v335
        %v386 = vmul.f32 %v368, %v336
        %v387 = vmul.f32 %v368, %v337
        %v388 = vmul.f32 %v368, %v338
        %v389 = vmul.f32 %v368, %v339
        %v390 = vmul.f32 %v368, %v340
        %v391 = vmul.f32 %v368, %v341
        %v392 = vmul.f32 %v368, %v342
        %v393 = vmul.f32 %v368, %v343
        %v394 = vmul.f32 %v368, %v344
        %v395 = vmul.f32 %v368, %v345
        %v396 = vmul.f32 %v368, %v346
        %v397 = vmul.f32 %v368, %v347
        %v398 = vmul.f32 %v368, %v348
        %v399 = vmul.f32 %v368, %v349
        %v400 = vmul.f32 %v368, %v350
        %v401 = vpack.c.bf16 %v321, %v319
        %v402 = vpack.c.bf16 %v322, %v320
        %v403 = vpack.c.bf16 %v325, %v323
        %v404 = vpack.c.bf16 %v326, %v324
        %v405 = vpack.c.bf16 %v329, %v327
        %v406 = vpack.c.bf16 %v330, %v328
        %v407 = vpack.c.bf16 %v333, %v331
        %v408 = vpack.c.bf16 %v334, %v332
        %v409 = vpack.c.bf16 %v337, %v335
        %v410 = vpack.c.bf16 %v338, %v336
        %v411 = vpack.c.bf16 %v341, %v339
        %v412 = vpack.c.bf16 %v342, %v340
        %v413 = vpack.c.bf16 %v345, %v343
        %v414 = vpack.c.bf16 %v346, %v344
        %v415 = vpack.c.bf16 %v349, %v347
        %v416 = vpack.c.bf16 %v350, %v348
        %v433 = vunpack.c.l.b16 %v351
        %v434 = vunpack.c.l.b16 %v352
        %v435 = vunpack.c.l.b16 %v353
        %v436 = vunpack.c.l.b16 %v354
        %v437 = vunpack.c.l.b16 %v355
        %v438 = vunpack.c.l.b16 %v356
        %v439 = vunpack.c.l.b16 %v357
        %v440 = vunpack.c.l.b16 %v358
        %v441 = vunpack.c.l.b16 %v359
        %v442 = vunpack.c.l.b16 %v360
        %v443 = vunpack.c.l.b16 %v361
        %v444 = vunpack.c.l.b16 %v362
        %v445 = vunpack.c.l.b16 %v363
        %v446 = vunpack.c.l.b16 %v364
        %v447 = vunpack.c.l.b16 %v365
        %v448 = vunpack.c.l.b16 %v366
        %v449 = vpack.c.b16 %v434, %v433
        %v450 = vpack.c.b16 %v436, %v435
        %v451 = vpack.c.b16 %v438, %v437
        %v452 = vpack.c.b16 %v440, %v439
        %v453 = vpack.c.b16 %v442, %v441
        %v454 = vpack.c.b16 %v444, %v443
        %v455 = vpack.c.b16 %v446, %v445
        %v456 = vpack.c.b16 %v448, %v447
        %465 = vmatprep.subr.bf16.mxu0 %v402
        %466 = vmatpush1.bf16.msra.mxu0 %v401
        %467 = vmatprep.subr.bf16.mxu0 %v404
        %468 = vmatpush1.bf16.msra.mxu0 %v403
        %469 = vmatprep.subr.bf16.mxu0 %v406
        %470 = vmatpush1.bf16.msra.mxu0 %v405
        %471 = vmatprep.subr.bf16.mxu0 %v408
        %472 = vmatpush1.bf16.msra.mxu0 %v407
        %473 = vmatprep.subr.bf16.mxu0 %v410
        %474 = vmatpush1.bf16.msra.mxu0 %v409
        %475 = vmatprep.subr.bf16.mxu0 %v412
        %476 = vmatpush1.bf16.msra.mxu0 %v411
        %477 = vmatprep.subr.bf16.mxu0 %v414
        %478 = vmatpush1.bf16.msra.mxu0 %v413
        %479 = vmatprep.subr.bf16.mxu0 %v416
        %480 = vmatpush1.bf16.msra.mxu0 %v415
        %481 = vmatprep.subr.bf16.mxu0 0
        %482 = vmatpush1.bf16.msra.mxu0 0
        %483 = vmatprep.subr.bf16.mxu0 0
        %484 = vmatpush1.bf16.msra.mxu0 0
        %485 = vmatprep.subr.bf16.mxu0 0
        %486 = vmatpush1.bf16.msra.mxu0 0
        %487 = vmatprep.subr.bf16.mxu0 0
        %488 = vmatpush1.bf16.msra.mxu0 0
        %489 = vmatprep.subr.bf16.mxu0 0
        %490 = vmatpush1.bf16.msra.mxu0 0
        %491 = vmatprep.subr.bf16.mxu0 0
        %492 = vmatpush1.bf16.msra.mxu0 0
        %493 = vmatprep.subr.bf16.mxu0 0
        %494 = vmatpush1.bf16.msra.mxu0 0
        %495 = vmatprep.subr.bf16.mxu0 0
        %496 = vmatpush1.bf16.msra.mxu0 0
        %497 = vmatprep.mubr.bf16.mxu0 0
        %498 = vmatmul.mubr.bf16.gmra.mrb[0].mxu0 %v449
        %v499 = vpop.f32.mrb[0].mxu0
        %v500 = vadd.f32 0.0, %v499
        %v501 = vpop.f32.mrb[0].mxu0
        %v502 = vadd.f32 0.0, %v501
        %v503 = vpop.f32.mrb[0].mxu0
        %v504 = vadd.f32 0.0, %v503
        %v505 = vpop.f32.mrb[0].mxu0
        %v506 = vadd.f32 0.0, %v505
        %507 = vmatprep.mubr.bf16.mxu0 0
        %508 = vmatmul.mubr.bf16.gmra.mrb[0].mxu0 %v450
        %v509 = vpop.f32.mrb[0].mxu0
        %v510 = vadd.f32 0.0, %v509
        %v511 = vpop.f32.mrb[0].mxu0
        %v512 = vadd.f32 0.0, %v511
        %v513 = vpop.f32.mrb[0].mxu0
        %v514 = vadd.f32 0.0, %v513
        %v515 = vpop.f32.mrb[0].mxu0
        %v516 = vadd.f32 0.0, %v515
        %517 = vmatprep.mubr.bf16.mxu0 0
        %518 = vmatmul.mubr.bf16.gmra.mrb[0].mxu0 %v451
        %v519 = vpop.f32.mrb[0].mxu0
        %v520 = vadd.f32 0.0, %v519
        %v521 = vpop.f32.mrb[0].mxu0
        %v522 = vadd.f32 0.0, %v521
        %v523 = vpop.f32.mrb[0].mxu0
        %v524 = vadd.f32 0.0, %v523
        %v525 = vpop.f32.mrb[0].mxu0
        %v526 = vadd.f32 0.0, %v525
        %527 = vmatprep.mubr.bf16.mxu0 0
        %528 = vmatmul.mubr.bf16.gmra.mrb[0].mxu0 %v452
        %v529 = vpop.f32.mrb[0].mxu0
        %v530 = vadd.f32 0.0, %v529
        %v531 = vpop.f32.mrb[0].mxu0
        %v532 = vadd.f32 0.0, %v531
        %v533 = vpop.f32.mrb[0].mxu0
        %v534 = vadd.f32 0.0, %v533
        %v535 = vpop.f32.mrb[0].mxu0
        %v536 = vadd.f32 0.0, %v535
        %537 = vmatprep.mubr.bf16.mxu0 0
        %538 = vmatmul.mubr.bf16.gmra.mrb[0].mxu0 %v453
        %v539 = vpop.f32.mrb[0].mxu0
        %v540 = vadd.f32 0.0, %v539
        %v541 = vpop.f32.mrb[0].mxu0
        %v542 = vadd.f32 0.0, %v541
        %v543 = vpop.f32.mrb[0].mxu0
        %v544 = vadd.f32 0.0, %v543
        %v545 = vpop.f32.mrb[0].mxu0
        %v546 = vadd.f32 0.0, %v545
        %547 = vmatprep.mubr.bf16.mxu0 0
        %548 = vmatmul.mubr.bf16.gmra.mrb[0].mxu0 %v454
        %v549 = vpop.f32.mrb[0].mxu0
        %v550 = vadd.f32 0.0, %v549
        %v551 = vpop.f32.mrb[0].mxu0
        %v552 = vadd.f32 0.0, %v551
        %v553 = vpop.f32.mrb[0].mxu0
        %v554 = vadd.f32 0.0, %v553
        %v555 = vpop.f32.mrb[0].mxu0
        %v556 = vadd.f32 0.0, %v555
        %557 = vmatprep.mubr.bf16.mxu0 0
        %558 = vmatmul.mubr.bf16.gmra.mrb[0].mxu0 %v455
        %v559 = vpop.f32.mrb[0].mxu0
        %v560 = vadd.f32 0.0, %v559
        %v561 = vpop.f32.mrb[0].mxu0
        %v562 = vadd.f32 0.0, %v561
        %v563 = vpop.f32.mrb[0].mxu0
        %v564 = vadd.f32 0.0, %v563
        %v565 = vpop.f32.mrb[0].mxu0
        %v566 = vadd.f32 0.0, %v565
        %567 = vmatprep.mubr.bf16.mxu0 0
        %568 = vmatmul.mubr.bf16.gmra.mrb[0].mxu0 %v456
        %v569 = vpop.f32.mrb[0].mxu0
        %v570 = vadd.f32 0.0, %v569
        %v571 = vpop.f32.mrb[0].mxu0
        %v572 = vadd.f32 0.0, %v571
        %v573 = vpop.f32.mrb[0].mxu0
        %v574 = vadd.f32 0.0, %v573
        %v575 = vpop.f32.mrb[0].mxu0
        %v576 = vadd.f32 0.0, %v575
        %577 = vdwg.mxu0
        %v578 = vadd.f32 %v369, %v500
        %v579 = vadd.f32 %v370, %v502
        %v580 = vadd.f32 %v371, %v504
        %v581 = vadd.f32 %v372, %v506
        %v582 = vadd.f32 %v373, %v510
        %v583 = vadd.f32 %v374, %v512
        %v584 = vadd.f32 %v375, %v514
        %v585 = vadd.f32 %v376, %v516
        %v586 = vadd.f32 %v377, %v520
        %v587 = vadd.f32 %v378, %v522
        %v588 = vadd.f32 %v379, %v524
        %v589 = vadd.f32 %v380, %v526
        %v590 = vadd.f32 %v381, %v530
        %v591 = vadd.f32 %v382, %v532
        %v592 = vadd.f32 %v383, %v534
        %v593 = vadd.f32 %v384, %v536
        %v594 = vadd.f32 %v385, %v540
        %v595 = vadd.f32 %v386, %v542
        %v596 = vadd.f32 %v387, %v544
        %v597 = vadd.f32 %v388, %v546
        %v598 = vadd.f32 %v389, %v550
        %v599 = vadd.f32 %v390, %v552
        %v600 = vadd.f32 %v391, %v554
        %v601 = vadd.f32 %v392, %v556
        %v602 = vadd.f32 %v393, %v560
        %v603 = vadd.f32 %v394, %v562
        %v604 = vadd.f32 %v395, %v564
        %v605 = vadd.f32 %v396, %v566
        %v606 = vadd.f32 %v397, %v570
        %v607 = vadd.f32 %v398, %v572
        %v608 = vadd.f32 %v399, %v574
        %v609 = vadd.f32 %v400, %v576
        %v610 = vpack.c.bf16 %v580, %v578
        %v611 = vpack.c.bf16 %v581, %v579
        %v612 = vpack.c.bf16 %v584, %v582
        %v613 = vpack.c.bf16 %v585, %v583
        %v614 = vpack.c.bf16 %v588, %v586
        %v615 = vpack.c.bf16 %v589, %v587
        %v616 = vpack.c.bf16 %v592, %v590
        %v617 = vpack.c.bf16 %v593, %v591
        %v618 = vpack.c.bf16 %v596, %v594
        %v619 = vpack.c.bf16 %v597, %v595
        %v620 = vpack.c.bf16 %v600, %v598
        %v621 = vpack.c.bf16 %v601, %v599
        %v622 = vpack.c.bf16 %v604, %v602
        %v623 = vpack.c.bf16 %v605, %v603
        %v624 = vpack.c.bf16 %v608, %v606
        %v625 = vpack.c.bf16 %v609, %v607
        %626 = vst [vmem:[#allocation2] sm:$0xff] %v610
        %627 = vst [vmem:[#allocation2 + $0x8] sm:$0xff] %v611
        %628 = vst [vmem:[#allocation2 + $0x40] sm:$0xff] %v612
        %629 = vst [vmem:[#allocation2 + $0x48] sm:$0xff] %v613
        %630 = vst [vmem:[#allocation2 + $0x80] sm:$0xff] %v614
        %631 = vst [vmem:[#allocation2 + $0x88] sm:$0xff] %v615
        %632 = vst [vmem:[#allocation2 + $0xc0] sm:$0xff] %v616
        %633 = vst [vmem:[#allocation2 + $0xc8] sm:$0xff] %v617
        %634 = vst [vmem:[#allocation2 + $0x100] sm:$0xff] %v618
        %635 = vst [vmem:[#allocation2 + $0x108] sm:$0xff] %v619
        %636 = vst [vmem:[#allocation2 + $0x140] sm:$0xff] %v620
        %637 = vst [vmem:[#allocation2 + $0x148] sm:$0xff] %v621
        %638 = vst [vmem:[#allocation2 + $0x180] sm:$0xff] %v622
        %639 = vst [vmem:[#allocation2 + $0x188] sm:$0xff] %v623
        %640 = vst [vmem:[#allocation2 + $0x1c0] sm:$0xff] %v624
        %641 = vst [vmem:[#allocation2 + $0x1c8] sm:$0xff] %v625
        %v642 = vmul.f32 %v368, %v578
        %v643 = vmul.f32 %v368, %v579
        %v644 = vmul.f32 %v368, %v580
        %v645 = vmul.f32 %v368, %v581
        %v646 = vmul.f32 %v368, %v582
        %v647 = vmul.f32 %v368, %v583
        %v648 = vmul.f32 %v368, %v584
        %v649 = vmul.f32 %v368, %v585
        %v650 = vmul.f32 %v368, %v586
        %v651 = vmul.f32 %v368, %v587
        %v652 = vmul.f32 %v368, %v588
        %v653 = vmul.f32 %v368, %v589
        %v654 = vmul.f32 %v368, %v590
        %v655 = vmul.f32 %v368, %v591
        %v656 = vmul.f32 %v368, %v592
        %v657 = vmul.f32 %v368, %v593
        %v658 = vmul.f32 %v368, %v594
        %v659 = vmul.f32 %v368, %v595
        %v660 = vmul.f32 %v368, %v596
        %v661 = vmul.f32 %v368, %v597
        %v662 = vmul.f32 %v368, %v598
        %v663 = vmul.f32 %v368, %v599
        %v664 = vmul.f32 %v368, %v600
        %v665 = vmul.f32 %v368, %v601
        %v666 = vmul.f32 %v368, %v602
        %v667 = vmul.f32 %v368, %v603
        %v668 = vmul.f32 %v368, %v604
        %v669 = vmul.f32 %v368, %v605
        %v670 = vmul.f32 %v368, %v606
        %v671 = vmul.f32 %v368, %v607
        %v672 = vmul.f32 %v368, %v608
        %v673 = vmul.f32 %v368, %v609
        %674 = vmatprep.subr.bf16.mxu0 %v611
        %675 = vmatpush1.bf16.msra.mxu0 %v610
        %676 = vmatprep.subr.bf16.mxu0 %v613
        %677 = vmatpush1.bf16.msra.mxu0 %v612
        %678 = vmatprep.subr.bf16.mxu0 %v615
        %679 = vmatpush1.bf16.msra.mxu0 %v614
        %680 = vmatprep.subr.bf16.mxu0 %v617
        %681 = vmatpush1.bf16.msra.mxu0 %v616
        %682 = vmatprep.subr.bf16.mxu0 %v619
        %683 = vmatpush1.bf16.msra.mxu0 %v618
        %684 = vmatprep.subr.bf16.mxu0 %v621
        %685 = vmatpush1.bf16.msra.mxu0 %v620
        %686 = vmatprep.subr.bf16.mxu0 %v623
        %687 = vmatpush1.bf16.msra.mxu0 %v622
        %688 = vmatprep.subr.bf16.mxu0 %v625
        %689 = vmatpush1.bf16.msra.mxu0 %v624
        %690 = vmatprep.subr.bf16.mxu0 0
        %691 = vmatpush1.bf16.msra.mxu0 0
        %692 = vmatprep.subr.bf16.mxu0 0
        %693 = vmatpush1.bf16.msra.mxu0 0
        %694 = vmatprep.subr.bf16.mxu0 0
        %695 = vmatpush1.bf16.msra.mxu0 0
        %696 = vmatprep.subr.bf16.mxu0 0
        %697 = vmatpush1.bf16.msra.mxu0 0
        %698 = vmatprep.subr.bf16.mxu0 0
        %699 = vmatpush1.bf16.msra.mxu0 0
        %700 = vmatprep.subr.bf16.mxu0 0
        %701 = vmatpush1.bf16.msra.mxu0 0
        %702 = vmatprep.subr.bf16.mxu0 0
        %703 = vmatpush1.bf16.msra.mxu0 0
        %704 = vmatprep.subr.bf16.mxu0 0
        %705 = vmatpush1.bf16.msra.mxu0 0
        %706 = vmatprep.mubr.bf16.mxu0 0
        %707 = vmatmul.mubr.bf16.gmra.mrb[0].mxu0 %v449
        %v708 = vpop.f32.mrb[0].mxu0
        %v709 = vadd.f32 0.0, %v708
        %v710 = vpop.f32.mrb[0].mxu0
        %v711 = vadd.f32 0.0, %v710
        %v712 = vpop.f32.mrb[0].mxu0
        %v713 = vadd.f32 0.0, %v712
        %v714 = vpop.f32.mrb[0].mxu0
        %v715 = vadd.f32 0.0, %v714
        %716 = vmatprep.mubr.bf16.mxu0 0
        %717 = vmatmul.mubr.bf16.gmra.mrb[0].mxu0 %v450
        %v718 = vpop.f32.mrb[0].mxu0
        %v719 = vadd.f32 0.0, %v718
        %v720 = vpop.f32.mrb[0].mxu0
        %v721 = vadd.f32 0.0, %v720
        %v722 = vpop.f32.mrb[0].mxu0
        %v723 = vadd.f32 0.0, %v722
        %v724 = vpop.f32.mrb[0].mxu0
        %v725 = vadd.f32 0.0, %v724
        %726 = vmatprep.mubr.bf16.mxu0 0
        %727 = vmatmul.mubr.bf16.gmra.mrb[0].mxu0 %v451
        %v728 = vpop.f32.mrb[0].mxu0
        %v729 = vadd.f32 0.0, %v728
        %v730 = vpop.f32.mrb[0].mxu0
        %v731 = vadd.f32 0.0, %v730
        %v732 = vpop.f32.mrb[0].mxu0
        %v733 = vadd.f32 0.0, %v732
        %v734 = vpop.f32.mrb[0].mxu0
        %v735 = vadd.f32 0.0, %v734
        %736 = vmatprep.mubr.bf16.mxu0 0
        %737 = vmatmul.mubr.bf16.gmra.mrb[0].mxu0 %v452
        %v738 = vpop.f32.mrb[0].mxu0
        %v739 = vadd.f32 0.0, %v738
        %v740 = vpop.f32.mrb[0].mxu0
        %v741 = vadd.f32 0.0, %v740
        %v742 = vpop.f32.mrb[0].mxu0
        %v743 = vadd.f32 0.0, %v742
        %v744 = vpop.f32.mrb[0].mxu0
        %v745 = vadd.f32 0.0, %v744
        %746 = vmatprep.mubr.bf16.mxu0 0
        %747 = vmatmul.mubr.bf16.gmra.mrb[0].mxu0 %v453
        %v748 = vpop.f32.mrb[0].mxu0
        %v749 = vadd.f32 0.0, %v748
        %v750 = vpop.f32.mrb[0].mxu0
        %v751 = vadd.f32 0.0, %v750
        %v752 = vpop.f32.mrb[0].mxu0
        %v753 = vadd.f32 0.0, %v752
        %v754 = vpop.f32.mrb[0].mxu0
        %v755 = vadd.f32 0.0, %v754
        %756 = vmatprep.mubr.bf16.mxu0 0
        %757 = vmatmul.mubr.bf16.gmra.mrb[0].mxu0 %v454
        %v758 = vpop.f32.mrb[0].mxu0
        %v759 = vadd.f32 0.0, %v758
        %v760 = vpop.f32.mrb[0].mxu0
        %v761 = vadd.f32 0.0, %v760
        %v762 = vpop.f32.mrb[0].mxu0
        %v763 = vadd.f32 0.0, %v762
        %v764 = vpop.f32.mrb[0].mxu0
        %v765 = vadd.f32 0.0, %v764
        %766 = vmatprep.mubr.bf16.mxu0 0
        %767 = vmatmul.mubr.bf16.gmra.mrb[0].mxu0 %v455
        %v768 = vpop.f32.mrb[0].mxu0
        %v769 = vadd.f32 0.0, %v768
        %v770 = vpop.f32.mrb[0].mxu0
        %v771 = vadd.f32 0.0, %v770
        %v772 = vpop.f32.mrb[0].mxu0
        %v773 = vadd.f32 0.0, %v772
        %v774 = vpop.f32.mrb[0].mxu0
        %v775 = vadd.f32 0.0, %v774
        %776 = vmatprep.mubr.bf16.mxu0 0
        %777 = vmatmul.mubr.bf16.gmra.mrb[0].mxu0 %v456
        %v778 = vpop.f32.mrb[0].mxu0
        %v779 = vadd.f32 0.0, %v778
        %v780 = vpop.f32.mrb[0].mxu0
        %v781 = vadd.f32 0.0, %v780
        %v782 = vpop.f32.mrb[0].mxu0
        %v783 = vadd.f32 0.0, %v782
        %v784 = vpop.f32.mrb[0].mxu0
        %v785 = vadd.f32 0.0, %v784
        %786 = vdwg.mxu0
        %v787 = vadd.f32 %v642, %v709
        %v788 = vadd.f32 %v643, %v711
        %v789 = vadd.f32 %v644, %v713
        %v790 = vadd.f32 %v645, %v715
        %v791 = vadd.f32 %v646, %v719
        %v792 = vadd.f32 %v647, %v721
        %v793 = vadd.f32 %v648, %v723
        %v794 = vadd.f32 %v649, %v725
        %v795 = vadd.f32 %v650, %v729
        %v796 = vadd.f32 %v651, %v731
        %v797 = vadd.f32 %v652, %v733
        %v798 = vadd.f32 %v653, %v735
        %v799 = vadd.f32 %v654, %v739
        %v800 = vadd.f32 %v655, %v741
        %v801 = vadd.f32 %v656, %v743
        %v802 = vadd.f32 %v657, %v745
        %v803 = vadd.f32 %v658, %v749
        %v804 = vadd.f32 %v659, %v751
        %v805 = vadd.f32 %v660, %v753
        %v806 = vadd.f32 %v661, %v755
        %v807 = vadd.f32 %v662, %v759
        %v808 = vadd.f32 %v663, %v761
        %v809 = vadd.f32 %v664, %v763
        %v810 = vadd.f32 %v665, %v765
        %v811 = vadd.f32 %v666, %v769
        %v812 = vadd.f32 %v667, %v771
        %v813 = vadd.f32 %v668, %v773
        %v814 = vadd.f32 %v669, %v775
        %v815 = vadd.f32 %v670, %v779
        %v816 = vadd.f32 %v671, %v781
        %v817 = vadd.f32 %v672, %v783
        %v818 = vadd.f32 %v673, %v785
        %v819 = vpack.c.bf16 %v789, %v787
        %v820 = vpack.c.bf16 %v790, %v788
        %v821 = vpack.c.bf16 %v793, %v791
        %v822 = vpack.c.bf16 %v794, %v792
        %v823 = vpack.c.bf16 %v797, %v795
        %v824 = vpack.c.bf16 %v798, %v796
        %v825 = vpack.c.bf16 %v801, %v799
        %v826 = vpack.c.bf16 %v802, %v800
        %v827 = vpack.c.bf16 %v805, %v803
        %v828 = vpack.c.bf16 %v806, %v804
        %v829 = vpack.c.bf16 %v809, %v807
        %v830 = vpack.c.bf16 %v810, %v808
        %v831 = vpack.c.bf16 %v813, %v811
        %v832 = vpack.c.bf16 %v814, %v812
        %v833 = vpack.c.bf16 %v817, %v815
        %v834 = vpack.c.bf16 %v818, %v816
        %835 = vst [vmem:[#allocation2 + $0x10] sm:$0xff] %v819
        %836 = vst [vmem:[#allocation2 + $0x18] sm:$0xff] %v820
        %837 = vst [vmem:[#allocation2 + $0x50] sm:$0xff] %v821
        %838 = vst [vmem:[#allocation2 + $0x58] sm:$0xff] %v822
        %839 = vst [vmem:[#allocation2 + $0x90] sm:$0xff] %v823
        %840 = vst [vmem:[#allocation2 + $0x98] sm:$0xff] %v824
        %841 = vst [vmem:[#allocation2 + $0xd0] sm:$0xff] %v825
        %842 = vst [vmem:[#allocation2 + $0xd8] sm:$0xff] %v826
        %843 = vst [vmem:[#allocation2 + $0x110] sm:$0xff] %v827
        %844 = vst [vmem:[#allocation2 + $0x118] sm:$0xff] %v828
        %845 = vst [vmem:[#allocation2 + $0x150] sm:$0xff] %v829
        %846 = vst [vmem:[#allocation2 + $0x158] sm:$0xff] %v830
        %847 = vst [vmem:[#allocation2 + $0x190] sm:$0xff] %v831
        %848 = vst [vmem:[#allocation2 + $0x198] sm:$0xff] %v832
        %849 = vst [vmem:[#allocation2 + $0x1d0] sm:$0xff] %v833
        %850 = vst [vmem:[#allocation2 + $0x1d8] sm:$0xff] %v834
        %s851 = scalar_lea.vmem [#allocation7], 64
        %v852 = vld [vmem:[%s851] sm:$0xf]
        %v853 = vld [vmem:[%s851 + $0x4] sm:$0xf]
        %v854 = vld [vmem:[%s851 + $0x8] sm:$0xf]
        %v855 = vld [vmem:[%s851 + $0xc] sm:$0xf]
        %v856 = vld [vmem:[%s851 + $0x10] sm:$0xf]
        %v857 = vld [vmem:[%s851 + $0x14] sm:$0xf]
        %v858 = vld [vmem:[%s851 + $0x18] sm:$0xf]
        %v859 = vld [vmem:[%s851 + $0x1c] sm:$0xf]
        %v860 = vld [vmem:[%s851 + $0x20] sm:$0xf]
        %v861 = vld [vmem:[%s851 + $0x24] sm:$0xf]
        %v862 = vld [vmem:[%s851 + $0x28] sm:$0xf]
        %v863 = vld [vmem:[%s851 + $0x2c] sm:$0xf]
        %v864 = vld [vmem:[%s851 + $0x30] sm:$0xf]
        %v865 = vld [vmem:[%s851 + $0x34] sm:$0xf]
        %v866 = vld [vmem:[%s851 + $0x38] sm:$0xf]
        %v867 = vld [vmem:[%s851 + $0x3c] sm:$0xf]
        %v884 = vunpack.c.l.b16 %v852
        %v885 = vunpack.c.l.b16 %v853
        %v886 = vunpack.c.l.b16 %v854
        %v887 = vunpack.c.l.b16 %v855
        %v888 = vunpack.c.l.b16 %v856
        %v889 = vunpack.c.l.b16 %v857
        %v890 = vunpack.c.l.b16 %v858
        %v891 = vunpack.c.l.b16 %v859
        %v892 = vunpack.c.l.b16 %v860
        %v893 = vunpack.c.l.b16 %v861
        %v894 = vunpack.c.l.b16 %v862
        %v895 = vunpack.c.l.b16 %v863
        %v896 = vunpack.c.l.b16 %v864
        %v897 = vunpack.c.l.b16 %v865
        %v898 = vunpack.c.l.b16 %v866
        %v899 = vunpack.c.l.b16 %v867
        %v900 = vpack.c.b16 %v885, %v884
        %v901 = vpack.c.b16 %v887, %v886
        %v902 = vpack.c.b16 %v889, %v888
        %v903 = vpack.c.b16 %v891, %v890
        %v904 = vpack.c.b16 %v893, %v892
        %v905 = vpack.c.b16 %v895, %v894
        %v906 = vpack.c.b16 %v897, %v896
        %v907 = vpack.c.b16 %v899, %v898
        %916 = vmatprep.subr.bf16.mxu0 %v402
        %917 = vmatpush1.bf16.msra.mxu0 %v401
        %918 = vmatprep.subr.bf16.mxu0 %v404
        %919 = vmatpush1.bf16.msra.mxu0 %v403
        %920 = vmatprep.subr.bf16.mxu0 %v406
        %921 = vmatpush1.bf16.msra.mxu0 %v405
        %922 = vmatprep.subr.bf16.mxu0 %v408
        %923 = vmatpush1.bf16.msra.mxu0 %v407
        %924 = vmatprep.subr.bf16.mxu0 %v410
        %925 = vmatpush1.bf16.msra.mxu0 %v409
        %926 = vmatprep.subr.bf16.mxu0 %v412
        %927 = vmatpush1.bf16.msra.mxu0 %v411
        %928 = vmatprep.subr.bf16.mxu0 %v414
        %929 = vmatpush1.bf16.msra.mxu0 %v413
        %930 = vmatprep.subr.bf16.mxu0 %v416
        %931 = vmatpush1.bf16.msra.mxu0 %v415
        %932 = vmatprep.subr.bf16.mxu0 0
        %933 = vmatpush1.bf16.msra.mxu0 0
        %934 = vmatprep.subr.bf16.mxu0 0
        %935 = vmatpush1.bf16.msra.mxu0 0
        %936 = vmatprep.subr.bf16.mxu0 0
        %937 = vmatpush1.bf16.msra.mxu0 0
        %938 = vmatprep.subr.bf16.mxu0 0
        %939 = vmatpush1.bf16.msra.mxu0 0
        %940 = vmatprep.subr.bf16.mxu0 0
        %941 = vmatpush1.bf16.msra.mxu0 0
        %942 = vmatprep.subr.bf16.mxu0 0
        %943 = vmatpush1.bf16.msra.mxu0 0
        %944 = vmatprep.subr.bf16.mxu0 0
        %945 = vmatpush1.bf16.msra.mxu0 0
        %946 = vmatprep.subr.bf16.mxu0 0
        %947 = vmatpush1.bf16.msra.mxu0 0
        %948 = vmatprep.mubr.bf16.mxu0 0
        %949 = vmatmul.mubr.bf16.gmra.mrb[0].mxu0 %v900
        %v950 = vpop.f32.mrb[0].mxu0
        %v951 = vadd.f32 0.0, %v950
        %v952 = vpop.f32.mrb[0].mxu0
        %v953 = vadd.f32 0.0, %v952
        %v954 = vpop.f32.mrb[0].mxu0
        %v955 = vadd.f32 0.0, %v954
        %v956 = vpop.f32.mrb[0].mxu0
        %v957 = vadd.f32 0.0, %v956
        %958 = vmatprep.mubr.bf16.mxu0 0
        %959 = vmatmul.mubr.bf16.gmra.mrb[0].mxu0 %v901
        %v960 = vpop.f32.mrb[0].mxu0
        %v961 = vadd.f32 0.0, %v960
        %v962 = vpop.f32.mrb[0].mxu0
        %v963 = vadd.f32 0.0, %v962
        %v964 = vpop.f32.mrb[0].mxu0
        %v965 = vadd.f32 0.0, %v964
        %v966 = vpop.f32.mrb[0].mxu0
        %v967 = vadd.f32 0.0, %v966
        %968 = vmatprep.mubr.bf16.mxu0 0
        %969 = vmatmul.mubr.bf16.gmra.mrb[0].mxu0 %v902
        %v970 = vpop.f32.mrb[0].mxu0
        %v971 = vadd.f32 0.0, %v970
        %v972 = vpop.f32.mrb[0].mxu0
        %v973 = vadd.f32 0.0, %v972
        %v974 = vpop.f32.mrb[0].mxu0
        %v975 = vadd.f32 0.0, %v974
        %v976 = vpop.f32.mrb[0].mxu0
        %v977 = vadd.f32 0.0, %v976
        %978 = vmatprep.mubr.bf16.mxu0 0
        %979 = vmatmul.mubr.bf16.gmra.mrb[0].mxu0 %v903
        %v980 = vpop.f32.mrb[0].mxu0
        %v981 = vadd.f32 0.0, %v980
        %v982 = vpop.f32.mrb[0].mxu0
        %v983 = vadd.f32 0.0, %v982
        %v984 = vpop.f32.mrb[0].mxu0
        %v985 = vadd.f32 0.0, %v984
        %v986 = vpop.f32.mrb[0].mxu0
        %v987 = vadd.f32 0.0, %v986
        %988 = vmatprep.mubr.bf16.mxu0 0
        %989 = vmatmul.mubr.bf16.gmra.mrb[0].mxu0 %v904
        %v990 = vpop.f32.mrb[0].mxu0
        %v991 = vadd.f32 0.0, %v990
        %v992 = vpop.f32.mrb[0].mxu0
        %v993 = vadd.f32 0.0, %v992
        %v994 = vpop.f32.mrb[0].mxu0
        %v995 = vadd.f32 0.0, %v994
        %v996 = vpop.f32.mrb[0].mxu0
        %v997 = vadd.f32 0.0, %v996
        %998 = vmatprep.mubr.bf16.mxu0 0
        %999 = vmatmul.mubr.bf16.gmra.mrb[0].mxu0 %v905
        %v1000 = vpop.f32.mrb[0].mxu0
        %v1001 = vadd.f32 0.0, %v1000
        %v1002 = vpop.f32.mrb[0].mxu0
        %v1003 = vadd.f32 0.0, %v1002
        %v1004 = vpop.f32.mrb[0].mxu0
        %v1005 = vadd.f32 0.0, %v1004
        %v1006 = vpop.f32.mrb[0].mxu0
        %v1007 = vadd.f32 0.0, %v1006
        %1008 = vmatprep.mubr.bf16.mxu0 0
        %1009 = vmatmul.mubr.bf16.gmra.mrb[0].mxu0 %v906
        %v1010 = vpop.f32.mrb[0].mxu0
        %v1011 = vadd.f32 0.0, %v1010
        %v1012 = vpop.f32.mrb[0].mxu0
        %v1013 = vadd.f32 0.0, %v1012
        %v1014 = vpop.f32.mrb[0].mxu0
        %v1015 = vadd.f32 0.0, %v1014
        %v1016 = vpop.f32.mrb[0].mxu0
        %v1017 = vadd.f32 0.0, %v1016
        %1018 = vmatprep.mubr.bf16.mxu0 0
        %1019 = vmatmul.mubr.bf16.gmra.mrb[0].mxu0 %v907
        %v1020 = vpop.f32.mrb[0].mxu0
        %v1021 = vadd.f32 0.0, %v1020
        %v1022 = vpop.f32.mrb[0].mxu0
        %v1023 = vadd.f32 0.0, %v1022
        %v1024 = vpop.f32.mrb[0].mxu0
        %v1025 = vadd.f32 0.0, %v1024
        %v1026 = vpop.f32.mrb[0].mxu0
        %v1027 = vadd.f32 0.0, %v1026
        %1028 = vdwg.mxu0
        %v1029 = vadd.f32 %v369, %v951
        %v1030 = vadd.f32 %v370, %v953
        %v1031 = vadd.f32 %v371, %v955
        %v1032 = vadd.f32 %v372, %v957
        %v1033 = vadd.f32 %v373, %v961
        %v1034 = vadd.f32 %v374, %v963
        %v1035 = vadd.f32 %v375, %v965
        %v1036 = vadd.f32 %v376, %v967
        %v1037 = vadd.f32 %v377, %v971
        %v1038 = vadd.f32 %v378, %v973
        %v1039 = vadd.f32 %v379, %v975
        %v1040 = vadd.f32 %v380, %v977
        %v1041 = vadd.f32 %v381, %v981
        %v1042 = vadd.f32 %v382, %v983
        %v1043 = vadd.f32 %v383, %v985
        %v1044 = vadd.f32 %v384, %v987
        %v1045 = vadd.f32 %v385, %v991
        %v1046 = vadd.f32 %v386, %v993
        %v1047 = vadd.f32 %v387, %v995
        %v1048 = vadd.f32 %v388, %v997
        %v1049 = vadd.f32 %v389, %v1001
        %v1050 = vadd.f32 %v390, %v1003
        %v1051 = vadd.f32 %v391, %v1005
        %v1052 = vadd.f32 %v392, %v1007
        %v1053 = vadd.f32 %v393, %v1011
        %v1054 = vadd.f32 %v394, %v1013
        %v1055 = vadd.f32 %v395, %v1015
        %v1056 = vadd.f32 %v396, %v1017
        %v1057 = vadd.f32 %v397, %v1021
        %v1058 = vadd.f32 %v398, %v1023
        %v1059 = vadd.f32 %v399, %v1025
        %v1060 = vadd.f32 %v400, %v1027
        %v1061 = vpack.c.bf16 %v1031, %v1029
        %v1062 = vpack.c.bf16 %v1032, %v1030
        %v1063 = vpack.c.bf16 %v1035, %v1033
        %v1064 = vpack.c.bf16 %v1036, %v1034
        %v1065 = vpack.c.bf16 %v1039, %v1037
        %v1066 = vpack.c.bf16 %v1040, %v1038
        %v1067 = vpack.c.bf16 %v1043, %v1041
        %v1068 = vpack.c.bf16 %v1044, %v1042
        %v1069 = vpack.c.bf16 %v1047, %v1045
        %v1070 = vpack.c.bf16 %v1048, %v1046
        %v1071 = vpack.c.bf16 %v1051, %v1049
        %v1072 = vpack.c.bf16 %v1052, %v1050
        %v1073 = vpack.c.bf16 %v1055, %v1053
        %v1074 = vpack.c.bf16 %v1056, %v1054
        %v1075 = vpack.c.bf16 %v1059, %v1057
        %v1076 = vpack.c.bf16 %v1060, %v1058
        %1077 = vst [vmem:[#allocation2 + $0x20] sm:$0xff] %v1061
        %1078 = vst [vmem:[#allocation2 + $0x28] sm:$0xff] %v1062
        %1079 = vst [vmem:[#allocation2 + $0x60] sm:$0xff] %v1063
        %1080 = vst [vmem:[#allocation2 + $0x68] sm:$0xff] %v1064
        %1081 = vst [vmem:[#allocation2 + $0xa0] sm:$0xff] %v1065
        %1082 = vst [vmem:[#allocation2 + $0xa8] sm:$0xff] %v1066
        %1083 = vst [vmem:[#allocation2 + $0xe0] sm:$0xff] %v1067
        %1084 = vst [vmem:[#allocation2 + $0xe8] sm:$0xff] %v1068
        %1085 = vst [vmem:[#allocation2 + $0x120] sm:$0xff] %v1069
        %1086 = vst [vmem:[#allocation2 + $0x128] sm:$0xff] %v1070
        %1087 = vst [vmem:[#allocation2 + $0x160] sm:$0xff] %v1071
        %1088 = vst [vmem:[#allocation2 + $0x168] sm:$0xff] %v1072
        %1089 = vst [vmem:[#allocation2 + $0x1a0] sm:$0xff] %v1073
        %1090 = vst [vmem:[#allocation2 + $0x1a8] sm:$0xff] %v1074
        %1091 = vst [vmem:[#allocation2 + $0x1e0] sm:$0xff] %v1075
        %1092 = vst [vmem:[#allocation2 + $0x1e8] sm:$0xff] %v1076
        %v1093 = vmul.f32 %v368, %v1029
        %v1094 = vmul.f32 %v368, %v1030
        %v1095 = vmul.f32 %v368, %v1031
        %v1096 = vmul.f32 %v368, %v1032
        %v1097 = vmul.f32 %v368, %v1033
        %v1098 = vmul.f32 %v368, %v1034
        %v1099 = vmul.f32 %v368, %v1035
        %v1100 = vmul.f32 %v368, %v1036
        %v1101 = vmul.f32 %v368, %v1037
        %v1102 = vmul.f32 %v368, %v1038
        %v1103 = vmul.f32 %v368, %v1039
        %v1104 = vmul.f32 %v368, %v1040
        %v1105 = vmul.f32 %v368, %v1041
        %v1106 = vmul.f32 %v368, %v1042
        %v1107 = vmul.f32 %v368, %v1043
        %v1108 = vmul.f32 %v368, %v1044
        %v1109 = vmul.f32 %v368, %v1045
        %v1110 = vmul.f32 %v368, %v1046
        %v1111 = vmul.f32 %v368, %v1047
        %v1112 = vmul.f32 %v368, %v1048
        %v1113 = vmul.f32 %v368, %v1049
        %v1114 = vmul.f32 %v368, %v1050
        %v1115 = vmul.f32 %v368, %v1051
        %v1116 = vmul.f32 %v368, %v1052
        %v1117 = vmul.f32 %v368, %v1053
        %v1118 = vmul.f32 %v368, %v1054
        %v1119 = vmul.f32 %v368, %v1055
        %v1120 = vmul.f32 %v368, %v1056
        %v1121 = vmul.f32 %v368, %v1057
        %v1122 = vmul.f32 %v368, %v1058
        %v1123 = vmul.f32 %v368, %v1059
        %v1124 = vmul.f32 %v368, %v1060
        %1125 = vmatprep.subr.bf16.mxu0 %v1062
        %1126 = vmatpush1.bf16.msra.mxu0 %v1061
        %1127 = vmatprep.subr.bf16.mxu0 %v1064
        %1128 = vmatpush1.bf16.msra.mxu0 %v1063
        %1129 = vmatprep.subr.bf16.mxu0 %v1066
        %1130 = vmatpush1.bf16.msra.mxu0 %v1065
        %1131 = vmatprep.subr.bf16.mxu0 %v1068
        %1132 = vmatpush1.bf16.msra.mxu0 %v1067
        %1133 = vmatprep.subr.bf16.mxu0 %v1070
        %1134 = vmatpush1.bf16.msra.mxu0 %v1069
        %1135 = vmatprep.subr.bf16.mxu0 %v1072
        %1136 = vmatpush1.bf16.msra.mxu0 %v1071
        %1137 = vmatprep.subr.bf16.mxu0 %v1074
        %1138 = vmatpush1.bf16.msra.mxu0 %v1073
        %1139 = vmatprep.subr.bf16.mxu0 %v1076
        %1140 = vmatpush1.bf16.msra.mxu0 %v1075
        %1141 = vmatprep.subr.bf16.mxu0 0
        %1142 = vmatpush1.bf16.msra.mxu0 0
        %1143 = vmatprep.subr.bf16.mxu0 0
        %1144 = vmatpush1.bf16.msra.mxu0 0
        %1145 = vmatprep.subr.bf16.mxu0 0
        %1146 = vmatpush1.bf16.msra.mxu0 0
        %1147 = vmatprep.subr.bf16.mxu0 0
        %1148 = vmatpush1.bf16.msra.mxu0 0
        %1149 = vmatprep.subr.bf16.mxu0 0
        %1150 = vmatpush1.bf16.msra.mxu0 0
        %1151 = vmatprep.subr.bf16.mxu0 0
        %1152 = vmatpush1.bf16.msra.mxu0 0
        %1153 = vmatprep.subr.bf16.mxu0 0
        %1154 = vmatpush1.bf16.msra.mxu0 0
        %1155 = vmatprep.subr.bf16.mxu0 0
        %1156 = vmatpush1.bf16.msra.mxu0 0
        %1157 = vmatprep.mubr.bf16.mxu0 0
        %1158 = vmatmul.mubr.bf16.gmra.mrb[0].mxu0 %v900
        %v1159 = vpop.f32.mrb[0].mxu0
        %v1160 = vadd.f32 0.0, %v1159
        %v1161 = vpop.f32.mrb[0].mxu0
        %v1162 = vadd.f32 0.0, %v1161
        %v1163 = vpop.f32.mrb[0].mxu0
        %v1164 = vadd.f32 0.0, %v1163
        %v1165 = vpop.f32.mrb[0].mxu0
        %v1166 = vadd.f32 0.0, %v1165
        %1167 = vmatprep.mubr.bf16.mxu0 0
        %1168 = vmatmul.mubr.bf16.gmra.mrb[0].mxu0 %v901
        %v1169 = vpop.f32.mrb[0].mxu0
        %v1170 = vadd.f32 0.0, %v1169
        %v1171 = vpop.f32.mrb[0].mxu0
        %v1172 = vadd.f32 0.0, %v1171
        %v1173 = vpop.f32.mrb[0].mxu0
        %v1174 = vadd.f32 0.0, %v1173
        %v1175 = vpop.f32.mrb[0].mxu0
        %v1176 = vadd.f32 0.0, %v1175
        %1177 = vmatprep.mubr.bf16.mxu0 0
        %1178 = vmatmul.mubr.bf16.gmra.mrb[0].mxu0 %v902
        %v1179 = vpop.f32.mrb[0].mxu0
        %v1180 = vadd.f32 0.0, %v1179
        %v1181 = vpop.f32.mrb[0].mxu0
        %v1182 = vadd.f32 0.0, %v1181
        %v1183 = vpop.f32.mrb[0].mxu0
        %v1184 = vadd.f32 0.0, %v1183
        %v1185 = vpop.f32.mrb[0].mxu0
        %v1186 = vadd.f32 0.0, %v1185
        %1187 = vmatprep.mubr.bf16.mxu0 0
        %1188 = vmatmul.mubr.bf16.gmra.mrb[0].mxu0 %v903
        %v1189 = vpop.f32.mrb[0].mxu0
        %v1190 = vadd.f32 0.0, %v1189
        %v1191 = vpop.f32.mrb[0].mxu0
        %v1192 = vadd.f32 0.0, %v1191
        %v1193 = vpop.f32.mrb[0].mxu0
        %v1194 = vadd.f32 0.0, %v1193
        %v1195 = vpop.f32.mrb[0].mxu0
        %v1196 = vadd.f32 0.0, %v1195
        %1197 = vmatprep.mubr.bf16.mxu0 0
        %1198 = vmatmul.mubr.bf16.gmra.mrb[0].mxu0 %v904
        %v1199 = vpop.f32.mrb[0].mxu0
        %v1200 = vadd.f32 0.0, %v1199
        %v1201 = vpop.f32.mrb[0].mxu0
        %v1202 = vadd.f32 0.0, %v1201
        %v1203 = vpop.f32.mrb[0].mxu0
        %v1204 = vadd.f32 0.0, %v1203
        %v1205 = vpop.f32.mrb[0].mxu0
        %v1206 = vadd.f32 0.0, %v1205
        %1207 = vmatprep.mubr.bf16.mxu0 0
        %1208 = vmatmul.mubr.bf16.gmra.mrb[0].mxu0 %v905
        %v1209 = vpop.f32.mrb[0].mxu0
        %v1210 = vadd.f32 0.0, %v1209
        %v1211 = vpop.f32.mrb[0].mxu0
        %v1212 = vadd.f32 0.0, %v1211
        %v1213 = vpop.f32.mrb[0].mxu0
        %v1214 = vadd.f32 0.0, %v1213
        %v1215 = vpop.f32.mrb[0].mxu0
        %v1216 = vadd.f32 0.0, %v1215
        %1217 = vmatprep.mubr.bf16.mxu0 0
        %1218 = vmatmul.mubr.bf16.gmra.mrb[0].mxu0 %v906
        %v1219 = vpop.f32.mrb[0].mxu0
        %v1220 = vadd.f32 0.0, %v1219
        %v1221 = vpop.f32.mrb[0].mxu0
        %v1222 = vadd.f32 0.0, %v1221
        %v1223 = vpop.f32.mrb[0].mxu0
        %v1224 = vadd.f32 0.0, %v1223
        %v1225 = vpop.f32.mrb[0].mxu0
        %v1226 = vadd.f32 0.0, %v1225
        %1227 = vmatprep.mubr.bf16.mxu0 0
        %1228 = vmatmul.mubr.bf16.gmra.mrb[0].mxu0 %v907
        %v1229 = vpop.f32.mrb[0].mxu0
        %v1230 = vadd.f32 0.0, %v1229
        %v1231 = vpop.f32.mrb[0].mxu0
        %v1232 = vadd.f32 0.0, %v1231
        %v1233 = vpop.f32.mrb[0].mxu0
        %v1234 = vadd.f32 0.0, %v1233
        %v1235 = vpop.f32.mrb[0].mxu0
        %v1236 = vadd.f32 0.0, %v1235
        %1237 = vdwg.mxu0
        %v1238 = vadd.f32 %v1093, %v1160
        %v1239 = vadd.f32 %v1094, %v1162
        %v1240 = vadd.f32 %v1095, %v1164
        %v1241 = vadd.f32 %v1096, %v1166
        %v1242 = vadd.f32 %v1097, %v1170
        %v1243 = vadd.f32 %v1098, %v1172
        %v1244 = vadd.f32 %v1099, %v1174
        %v1245 = vadd.f32 %v1100, %v1176
        %v1246 = vadd.f32 %v1101, %v1180
        %v1247 = vadd.f32 %v1102, %v1182
        %v1248 = vadd.f32 %v1103, %v1184
        %v1249 = vadd.f32 %v1104, %v1186
        %v1250 = vadd.f32 %v1105, %v1190
        %v1251 = vadd.f32 %v1106, %v1192
        %v1252 = vadd.f32 %v1107, %v1194
        %v1253 = vadd.f32 %v1108, %v1196
        %v1254 = vadd.f32 %v1109, %v1200
        %v1255 = vadd.f32 %v1110, %v1202
        %v1256 = vadd.f32 %v1111, %v1204
        %v1257 = vadd.f32 %v1112, %v1206
        %v1258 = vadd.f32 %v1113, %v1210
        %v1259 = vadd.f32 %v1114, %v1212
        %v1260 = vadd.f32 %v1115, %v1214
        %v1261 = vadd.f32 %v1116, %v1216
        %v1262 = vadd.f32 %v1117, %v1220
        %v1263 = vadd.f32 %v1118, %v1222
        %v1264 = vadd.f32 %v1119, %v1224
        %v1265 = vadd.f32 %v1120, %v1226
        %v1266 = vadd.f32 %v1121, %v1230
        %v1267 = vadd.f32 %v1122, %v1232
        %v1268 = vadd.f32 %v1123, %v1234
        %v1269 = vadd.f32 %v1124, %v1236
        %v1270 = vpack.c.bf16 %v1240, %v1238
        %v1271 = vpack.c.bf16 %v1241, %v1239
        %v1272 = vpack.c.bf16 %v1244, %v1242
        %v1273 = vpack.c.bf16 %v1245, %v1243
        %v1274 = vpack.c.bf16 %v1248, %v1246
        %v1275 = vpack.c.bf16 %v1249, %v1247
        %v1276 = vpack.c.bf16 %v1252, %v1250
        %v1277 = vpack.c.bf16 %v1253, %v1251
        %v1278 = vpack.c.bf16 %v1256, %v1254
        %v1279 = vpack.c.bf16 %v1257, %v1255
        %v1280 = vpack.c.bf16 %v1260, %v1258
        %v1281 = vpack.c.bf16 %v1261, %v1259
        %v1282 = vpack.c.bf16 %v1264, %v1262
        %v1283 = vpack.c.bf16 %v1265, %v1263
        %v1284 = vpack.c.bf16 %v1268, %v1266
        %v1285 = vpack.c.bf16 %v1269, %v1267
        %1286 = vst [vmem:[#allocation2 + $0x30] sm:$0xff] %v1270
        %1287 = vst [vmem:[#allocation2 + $0x38] sm:$0xff] %v1271
        %1288 = vst [vmem:[#allocation2 + $0x70] sm:$0xff] %v1272
        %1289 = vst [vmem:[#allocation2 + $0x78] sm:$0xff] %v1273
        %1290 = vst [vmem:[#allocation2 + $0xb0] sm:$0xff] %v1274
        %1291 = vst [vmem:[#allocation2 + $0xb8] sm:$0xff] %v1275
        %1292 = vst [vmem:[#allocation2 + $0xf0] sm:$0xff] %v1276
        %1293 = vst [vmem:[#allocation2 + $0xf8] sm:$0xff] %v1277
        %1294 = vst [vmem:[#allocation2 + $0x130] sm:$0xff] %v1278
        %1295 = vst [vmem:[#allocation2 + $0x138] sm:$0xff] %v1279
        %1296 = vst [vmem:[#allocation2 + $0x170] sm:$0xff] %v1280
        %1297 = vst [vmem:[#allocation2 + $0x178] sm:$0xff] %v1281
        %1298 = vst [vmem:[#allocation2 + $0x1b0] sm:$0xff] %v1282
        %1299 = vst [vmem:[#allocation2 + $0x1b8] sm:$0xff] %v1283
        %1300 = vst [vmem:[#allocation2 + $0x1f0] sm:$0xff] %v1284
        %1301 = vst [vmem:[#allocation2 + $0x1f8] sm:$0xff] %v1285
        %v1302 = vld [vmem:[#allocation2] sm:$0xff]
        %v1303 = vld [vmem:[#allocation2 + $0x8] sm:$0xff]
        %v1304 = vld [vmem:[#allocation2 + $0x10] sm:$0xff]
        %v1305 = vld [vmem:[#allocation2 + $0x18] sm:$0xff]
        %v1306 = vld [vmem:[#allocation2 + $0x20] sm:$0xff]
        %v1307 = vld [vmem:[#allocation2 + $0x28] sm:$0xff]
        %v1308 = vld [vmem:[#allocation2 + $0x30] sm:$0xff]
        %v1309 = vld [vmem:[#allocation2 + $0x38] sm:$0xff]
        %v1310 = vld [vmem:[#allocation2 + $0x40] sm:$0xff]
        %v1311 = vld [vmem:[#allocation2 + $0x48] sm:$0xff]
        %v1312 = vld [vmem:[#allocation2 + $0x50] sm:$0xff]
        %v1313 = vld [vmem:[#allocation2 + $0x58] sm:$0xff]
        %v1314 = vld [vmem:[#allocation2 + $0x60] sm:$0xff]
        %v1315 = vld [vmem:[#allocation2 + $0x68] sm:$0xff]
        %v1316 = vld [vmem:[#allocation2 + $0x70] sm:$0xff]
        %v1317 = vld [vmem:[#allocation2 + $0x78] sm:$0xff]
        %v1318 = vld [vmem:[#allocation2 + $0x80] sm:$0xff]
        %v1319 = vld [vmem:[#allocation2 + $0x88] sm:$0xff]
        %v1320 = vld [vmem:[#allocation2 + $0x90] sm:$0xff]
        %v1321 = vld [vmem:[#allocation2 + $0x98] sm:$0xff]
        %v1322 = vld [vmem:[#allocation2 + $0xa0] sm:$0xff]
        %v1323 = vld [vmem:[#allocation2 + $0xa8] sm:$0xff]
        %v1324 = vld [vmem:[#allocation2 + $0xb0] sm:$0xff]
        %v1325 = vld [vmem:[#allocation2 + $0xb8] sm:$0xff]
        %v1326 = vld [vmem:[#allocation2 + $0xc0] sm:$0xff]
        %v1327 = vld [vmem:[#allocation2 + $0xc8] sm:$0xff]
        %v1328 = vld [vmem:[#allocation2 + $0xd0] sm:$0xff]
        %v1329 = vld [vmem:[#allocation2 + $0xd8] sm:$0xff]
        %v1330 = vld [vmem:[#allocation2 + $0xe0] sm:$0xff]
        %v1331 = vld [vmem:[#allocation2 + $0xe8] sm:$0xff]
        %v1332 = vld [vmem:[#allocation2 + $0xf0] sm:$0xff]
        %v1333 = vld [vmem:[#allocation2 + $0xf8] sm:$0xff]
        %v1334 = vld [vmem:[#allocation2 + $0x100] sm:$0xff]
        %v1335 = vld [vmem:[#allocation2 + $0x108] sm:$0xff]
        %v1336 = vld [vmem:[#allocation2 + $0x110] sm:$0xff]
        %v1337 = vld [vmem:[#allocation2 + $0x118] sm:$0xff]
        %v1338 = vld [vmem:[#allocation2 + $0x120] sm:$0xff]
        %v1339 = vld [vmem:[#allocation2 + $0x128] sm:$0xff]
        %v1340 = vld [vmem:[#allocation2 + $0x130] sm:$0xff]
        %v1341 = vld [vmem:[#allocation2 + $0x138] sm:$0xff]
        %v1342 = vld [vmem:[#allocation2 + $0x140] sm:$0xff]
        %v1343 = vld [vmem:[#allocation2 + $0x148] sm:$0xff]
        %v1344 = vld [vmem:[#allocation2 + $0x150] sm:$0xff]
        %v1345 = vld [vmem:[#allocation2 + $0x158] sm:$0xff]
        %v1346 = vld [vmem:[#allocation2 + $0x160] sm:$0xff]
        %v1347 = vld [vmem:[#allocation2 + $0x168] sm:$0xff]
        %v1348 = vld [vmem:[#allocation2 + $0x170] sm:$0xff]
        %v1349 = vld [vmem:[#allocation2 + $0x178] sm:$0xff]
        %v1350 = vld [vmem:[#allocation2 + $0x180] sm:$0xff]
        %v1351 = vld [vmem:[#allocation2 + $0x188] sm:$0xff]
        %v1352 = vld [vmem:[#allocation2 + $0x190] sm:$0xff]
        %v1353 = vld [vmem:[#allocation2 + $0x198] sm:$0xff]
        %v1354 = vld [vmem:[#allocation2 + $0x1a0] sm:$0xff]
        %v1355 = vld [vmem:[#allocation2 + $0x1a8] sm:$0xff]
        %v1356 = vld [vmem:[#allocation2 + $0x1b0] sm:$0xff]
        %v1357 = vld [vmem:[#allocation2 + $0x1b8] sm:$0xff]
        %v1358 = vld [vmem:[#allocation2 + $0x1c0] sm:$0xff]
        %v1359 = vld [vmem:[#allocation2 + $0x1c8] sm:$0xff]
        %v1360 = vld [vmem:[#allocation2 + $0x1d0] sm:$0xff]
        %v1361 = vld [vmem:[#allocation2 + $0x1d8] sm:$0xff]
        %v1362 = vld [vmem:[#allocation2 + $0x1e0] sm:$0xff]
        %v1363 = vld [vmem:[#allocation2 + $0x1e8] sm:$0xff]
        %v1364 = vld [vmem:[#allocation2 + $0x1f0] sm:$0xff]
        %v1365 = vld [vmem:[#allocation2 + $0x1f8] sm:$0xff]
        %v1366 = vld [vmem:[#allocation9] sm:$0xff]
        %v1367 = vld [vmem:[#allocation9 + $0x8] sm:$0xff]
        %v1368 = vld [vmem:[#allocation9 + $0x10] sm:$0xff]
        %v1369 = vld [vmem:[#allocation9 + $0x18] sm:$0xff]
        %v1370 = vld [vmem:[#allocation9 + $0x20] sm:$0xff]
        %v1371 = vld [vmem:[#allocation9 + $0x28] sm:$0xff]
        %v1372 = vld [vmem:[#allocation9 + $0x30] sm:$0xff]
        %v1373 = vld [vmem:[#allocation9 + $0x38] sm:$0xff]
        %v1374 = vld [vmem:[#allocation9 + $0x40] sm:$0xff]
        %v1375 = vld [vmem:[#allocation9 + $0x48] sm:$0xff]
        %v1376 = vld [vmem:[#allocation9 + $0x50] sm:$0xff]
        %v1377 = vld [vmem:[#allocation9 + $0x58] sm:$0xff]
        %v1378 = vld [vmem:[#allocation9 + $0x60] sm:$0xff]
        %v1379 = vld [vmem:[#allocation9 + $0x68] sm:$0xff]
        %v1380 = vld [vmem:[#allocation9 + $0x70] sm:$0xff]
        %v1381 = vld [vmem:[#allocation9 + $0x78] sm:$0xff]
        %v1382 = vld [vmem:[#allocation9 + $0x80] sm:$0xff]
        %v1383 = vld [vmem:[#allocation9 + $0x88] sm:$0xff]
        %v1384 = vld [vmem:[#allocation9 + $0x90] sm:$0xff]
        %v1385 = vld [vmem:[#allocation9 + $0x98] sm:$0xff]
        %v1386 = vld [vmem:[#allocation9 + $0xa0] sm:$0xff]
        %v1387 = vld [vmem:[#allocation9 + $0xa8] sm:$0xff]
        %v1388 = vld [vmem:[#allocation9 + $0xb0] sm:$0xff]
        %v1389 = vld [vmem:[#allocation9 + $0xb8] sm:$0xff]
        %v1390 = vld [vmem:[#allocation9 + $0xc0] sm:$0xff]
        %v1391 = vld [vmem:[#allocation9 + $0xc8] sm:$0xff]
        %v1392 = vld [vmem:[#allocation9 + $0xd0] sm:$0xff]
        %v1393 = vld [vmem:[#allocation9 + $0xd8] sm:$0xff]
        %v1394 = vld [vmem:[#allocation9 + $0xe0] sm:$0xff]
        %v1395 = vld [vmem:[#allocation9 + $0xe8] sm:$0xff]
        %v1396 = vld [vmem:[#allocation9 + $0xf0] sm:$0xff]
        %v1397 = vld [vmem:[#allocation9 + $0xf8] sm:$0xff]
        %v1398 = vld [vmem:[#allocation9 + $0x100] sm:$0xff]
        %v1399 = vld [vmem:[#allocation9 + $0x108] sm:$0xff]
        %v1400 = vld [vmem:[#allocation9 + $0x110] sm:$0xff]
        %v1401 = vld [vmem:[#allocation9 + $0x118] sm:$0xff]
        %v1402 = vld [vmem:[#allocation9 + $0x120] sm:$0xff]
        %v1403 = vld [vmem:[#allocation9 + $0x128] sm:$0xff]
        %v1404 = vld [vmem:[#allocation9 + $0x130] sm:$0xff]
        %v1405 = vld [vmem:[#allocation9 + $0x138] sm:$0xff]
        %v1406 = vld [vmem:[#allocation9 + $0x140] sm:$0xff]
        %v1407 = vld [vmem:[#allocation9 + $0x148] sm:$0xff]
        %v1408 = vld [vmem:[#allocation9 + $0x150] sm:$0xff]
        %v1409 = vld [vmem:[#allocation9 + $0x158] sm:$0xff]
        %v1410 = vld [vmem:[#allocation9 + $0x160] sm:$0xff]
        %v1411 = vld [vmem:[#allocation9 + $0x168] sm:$0xff]
        %v1412 = vld [vmem:[#allocation9 + $0x170] sm:$0xff]
        %v1413 = vld [vmem:[#allocation9 + $0x178] sm:$0xff]
        %v1414 = vld [vmem:[#allocation9 + $0x180] sm:$0xff]
        %v1415 = vld [vmem:[#allocation9 + $0x188] sm:$0xff]
        %v1416 = vld [vmem:[#allocation9 + $0x190] sm:$0xff]
        %v1417 = vld [vmem:[#allocation9 + $0x198] sm:$0xff]
        %v1418 = vld [vmem:[#allocation9 + $0x1a0] sm:$0xff]
        %v1419 = vld [vmem:[#allocation9 + $0x1a8] sm:$0xff]
        %v1420 = vld [vmem:[#allocation9 + $0x1b0] sm:$0xff]
        %v1421 = vld [vmem:[#allocation9 + $0x1b8] sm:$0xff]
        %v1422 = vld [vmem:[#allocation9 + $0x1c0] sm:$0xff]
        %v1423 = vld [vmem:[#allocation9 + $0x1c8] sm:$0xff]
        %v1424 = vld [vmem:[#allocation9 + $0x1d0] sm:$0xff]
        %v1425 = vld [vmem:[#allocation9 + $0x1d8] sm:$0xff]
        %v1426 = vld [vmem:[#allocation9 + $0x1e0] sm:$0xff]
        %v1427 = vld [vmem:[#allocation9 + $0x1e8] sm:$0xff]
        %v1428 = vld [vmem:[#allocation9 + $0x1f0] sm:$0xff]
        %v1429 = vld [vmem:[#allocation9 + $0x1f8] sm:$0xff]
        %v1430 = vld [vmem:[#allocation9 + $0x200] sm:$0xff]
        %v1431 = vld [vmem:[#allocation9 + $0x208] sm:$0xff]
        %v1432 = vld [vmem:[#allocation9 + $0x210] sm:$0xff]
        %v1433 = vld [vmem:[#allocation9 + $0x218] sm:$0xff]
        %v1434 = vld [vmem:[#allocation9 + $0x220] sm:$0xff]
        %v1435 = vld [vmem:[#allocation9 + $0x228] sm:$0xff]
        %v1436 = vld [vmem:[#allocation9 + $0x230] sm:$0xff]
        %v1437 = vld [vmem:[#allocation9 + $0x238] sm:$0xff]
        %v1438 = vld [vmem:[#allocation9 + $0x240] sm:$0xff]
        %v1439 = vld [vmem:[#allocation9 + $0x248] sm:$0xff]
        %v1440 = vld [vmem:[#allocation9 + $0x250] sm:$0xff]
        %v1441 = vld [vmem:[#allocation9 + $0x258] sm:$0xff]
        %v1442 = vld [vmem:[#allocation9 + $0x260] sm:$0xff]
        %v1443 = vld [vmem:[#allocation9 + $0x268] sm:$0xff]
        %v1444 = vld [vmem:[#allocation9 + $0x270] sm:$0xff]
        %v1445 = vld [vmem:[#allocation9 + $0x278] sm:$0xff]
        %v1446 = vld [vmem:[#allocation9 + $0x280] sm:$0xff]
        %v1447 = vld [vmem:[#allocation9 + $0x288] sm:$0xff]
        %v1448 = vld [vmem:[#allocation9 + $0x290] sm:$0xff]
        %v1449 = vld [vmem:[#allocation9 + $0x298] sm:$0xff]
        %v1450 = vld [vmem:[#allocation9 + $0x2a0] sm:$0xff]
        %v1451 = vld [vmem:[#allocation9 + $0x2a8] sm:$0xff]
        %v1452 = vld [vmem:[#allocation9 + $0x2b0] sm:$0xff]
        %v1453 = vld [vmem:[#allocation9 + $0x2b8] sm:$0xff]
        %v1454 = vld [vmem:[#allocation9 + $0x2c0] sm:$0xff]
        %v1455 = vld [vmem:[#allocation9 + $0x2c8] sm:$0xff]
        %v1456 = vld [vmem:[#allocation9 + $0x2d0] sm:$0xff]
        %v1457 = vld [vmem:[#allocation9 + $0x2d8] sm:$0xff]
        %v1458 = vld [vmem:[#allocation9 + $0x2e0] sm:$0xff]
        %v1459 = vld [vmem:[#allocation9 + $0x2e8] sm:$0xff]
        %v1460 = vld [vmem:[#allocation9 + $0x2f0] sm:$0xff]
        %v1461 = vld [vmem:[#allocation9 + $0x2f8] sm:$0xff]
        %v1462 = vld [vmem:[#allocation9 + $0x300] sm:$0xff]
        %v1463 = vld [vmem:[#allocation9 + $0x308] sm:$0xff]
        %v1464 = vld [vmem:[#allocation9 + $0x310] sm:$0xff]
        %v1465 = vld [vmem:[#allocation9 + $0x318] sm:$0xff]
        %v1466 = vld [vmem:[#allocation9 + $0x320] sm:$0xff]
        %v1467 = vld [vmem:[#allocation9 + $0x328] sm:$0xff]
        %v1468 = vld [vmem:[#allocation9 + $0x330] sm:$0xff]
        %v1469 = vld [vmem:[#allocation9 + $0x338] sm:$0xff]
        %v1470 = vld [vmem:[#allocation9 + $0x340] sm:$0xff]
        %v1471 = vld [vmem:[#allocation9 + $0x348] sm:$0xff]
        %v1472 = vld [vmem:[#allocation9 + $0x350] sm:$0xff]
        %v1473 = vld [vmem:[#allocation9 + $0x358] sm:$0xff]
        %v1474 = vld [vmem:[#allocation9 + $0x360] sm:$0xff]
        %v1475 = vld [vmem:[#allocation9 + $0x368] sm:$0xff]
        %v1476 = vld [vmem:[#allocation9 + $0x370] sm:$0xff]
        %v1477 = vld [vmem:[#allocation9 + $0x378] sm:$0xff]
        %v1478 = vld [vmem:[#allocation9 + $0x380] sm:$0xff]
        %v1479 = vld [vmem:[#allocation9 + $0x388] sm:$0xff]
        %v1480 = vld [vmem:[#allocation9 + $0x390] sm:$0xff]
        %v1481 = vld [vmem:[#allocation9 + $0x398] sm:$0xff]
        %v1482 = vld [vmem:[#allocation9 + $0x3a0] sm:$0xff]
        %v1483 = vld [vmem:[#allocation9 + $0x3a8] sm:$0xff]
        %v1484 = vld [vmem:[#allocation9 + $0x3b0] sm:$0xff]
        %v1485 = vld [vmem:[#allocation9 + $0x3b8] sm:$0xff]
        %v1486 = vld [vmem:[#allocation9 + $0x3c0] sm:$0xff]
        %v1487 = vld [vmem:[#allocation9 + $0x3c8] sm:$0xff]
        %v1488 = vld [vmem:[#allocation9 + $0x3d0] sm:$0xff]
        %v1489 = vld [vmem:[#allocation9 + $0x3d8] sm:$0xff]
        %v1490 = vld [vmem:[#allocation9 + $0x3e0] sm:$0xff]
        %v1491 = vld [vmem:[#allocation9 + $0x3e8] sm:$0xff]
        %v1492 = vld [vmem:[#allocation9 + $0x3f0] sm:$0xff]
        %v1493 = vld [vmem:[#allocation9 + $0x3f8] sm:$0xff]
        %v1494 = vld [vmem:[#allocation9 + $0x400] sm:$0xff]
        %v1495 = vld [vmem:[#allocation9 + $0x408] sm:$0xff]
        %v1496 = vld [vmem:[#allocation9 + $0x410] sm:$0xff]
        %v1497 = vld [vmem:[#allocation9 + $0x418] sm:$0xff]
        %v1498 = vld [vmem:[#allocation9 + $0x420] sm:$0xff]
        %v1499 = vld [vmem:[#allocation9 + $0x428] sm:$0xff]
        %v1500 = vld [vmem:[#allocation9 + $0x430] sm:$0xff]
        %v1501 = vld [vmem:[#allocation9 + $0x438] sm:$0xff]
        %v1502 = vld [vmem:[#allocation9 + $0x440] sm:$0xff]
        %v1503 = vld [vmem:[#allocation9 + $0x448] sm:$0xff]
        %v1504 = vld [vmem:[#allocation9 + $0x450] sm:$0xff]
        %v1505 = vld [vmem:[#allocation9 + $0x458] sm:$0xff]
        %v1506 = vld [vmem:[#allocation9 + $0x460] sm:$0xff]
        %v1507 = vld [vmem:[#allocation9 + $0x468] sm:$0xff]
        %v1508 = vld [vmem:[#allocation9 + $0x470] sm:$0xff]
        %v1509 = vld [vmem:[#allocation9 + $0x478] sm:$0xff]
        %v1510 = vld [vmem:[#allocation9 + $0x480] sm:$0xff]
        %v1511 = vld [vmem:[#allocation9 + $0x488] sm:$0xff]
        %v1512 = vld [vmem:[#allocation9 + $0x490] sm:$0xff]
        %v1513 = vld [vmem:[#allocation9 + $0x498] sm:$0xff]
        %v1514 = vld [vmem:[#allocation9 + $0x4a0] sm:$0xff]
        %v1515 = vld [vmem:[#allocation9 + $0x4a8] sm:$0xff]
        %v1516 = vld [vmem:[#allocation9 + $0x4b0] sm:$0xff]
        %v1517 = vld [vmem:[#allocation9 + $0x4b8] sm:$0xff]
        %v1518 = vld [vmem:[#allocation9 + $0x4c0] sm:$0xff]
        %v1519 = vld [vmem:[#allocation9 + $0x4c8] sm:$0xff]
        %v1520 = vld [vmem:[#allocation9 + $0x4d0] sm:$0xff]
        %v1521 = vld [vmem:[#allocation9 + $0x4d8] sm:$0xff]
        %v1522 = vld [vmem:[#allocation9 + $0x4e0] sm:$0xff]
        %v1523 = vld [vmem:[#allocation9 + $0x4e8] sm:$0xff]
        %v1524 = vld [vmem:[#allocation9 + $0x4f0] sm:$0xff]
        %v1525 = vld [vmem:[#allocation9 + $0x4f8] sm:$0xff]
        %v1526 = vld [vmem:[#allocation9 + $0x500] sm:$0xff]
        %v1527 = vld [vmem:[#allocation9 + $0x508] sm:$0xff]
        %v1528 = vld [vmem:[#allocation9 + $0x510] sm:$0xff]
        %v1529 = vld [vmem:[#allocation9 + $0x518] sm:$0xff]
        %v1530 = vld [vmem:[#allocation9 + $0x520] sm:$0xff]
        %v1531 = vld [vmem:[#allocation9 + $0x528] sm:$0xff]
        %v1532 = vld [vmem:[#allocation9 + $0x530] sm:$0xff]
        %v1533 = vld [vmem:[#allocation9 + $0x538] sm:$0xff]
        %v1534 = vld [vmem:[#allocation9 + $0x540] sm:$0xff]
        %v1535 = vld [vmem:[#allocation9 + $0x548] sm:$0xff]
        %v1536 = vld [vmem:[#allocation9 + $0x550] sm:$0xff]
        %v1537 = vld [vmem:[#allocation9 + $0x558] sm:$0xff]
        %v1538 = vld [vmem:[#allocation9 + $0x560] sm:$0xff]
        %v1539 = vld [vmem:[#allocation9 + $0x568] sm:$0xff]
        %v1540 = vld [vmem:[#allocation9 + $0x570] sm:$0xff]
        %v1541 = vld [vmem:[#allocation9 + $0x578] sm:$0xff]
        %v1542 = vld [vmem:[#allocation9 + $0x580] sm:$0xff]
        %v1543 = vld [vmem:[#allocation9 + $0x588] sm:$0xff]
        %v1544 = vld [vmem:[#allocation9 + $0x590] sm:$0xff]
        %v1545 = vld [vmem:[#allocation9 + $0x598] sm:$0xff]
        %v1546 = vld [vmem:[#allocation9 + $0x5a0] sm:$0xff]
        %v1547 = vld [vmem:[#allocation9 + $0x5a8] sm:$0xff]
        %v1548 = vld [vmem:[#allocation9 + $0x5b0] sm:$0xff]
        %v1549 = vld [vmem:[#allocation9 + $0x5b8] sm:$0xff]
        %v1550 = vld [vmem:[#allocation9 + $0x5c0] sm:$0xff]
        %v1551 = vld [vmem:[#allocation9 + $0x5c8] sm:$0xff]
        %v1552 = vld [vmem:[#allocation9 + $0x5d0] sm:$0xff]
        %v1553 = vld [vmem:[#allocation9 + $0x5d8] sm:$0xff]
        %v1554 = vld [vmem:[#allocation9 + $0x5e0] sm:$0xff]
        %v1555 = vld [vmem:[#allocation9 + $0x5e8] sm:$0xff]
        %v1556 = vld [vmem:[#allocation9 + $0x5f0] sm:$0xff]
        %v1557 = vld [vmem:[#allocation9 + $0x5f8] sm:$0xff]
        %v1558 = vld [vmem:[#allocation9 + $0x600] sm:$0xff]
        %v1559 = vld [vmem:[#allocation9 + $0x608] sm:$0xff]
        %v1560 = vld [vmem:[#allocation9 + $0x610] sm:$0xff]
        %v1561 = vld [vmem:[#allocation9 + $0x618] sm:$0xff]
        %v1562 = vld [vmem:[#allocation9 + $0x620] sm:$0xff]
        %v1563 = vld [vmem:[#allocation9 + $0x628] sm:$0xff]
        %v1564 = vld [vmem:[#allocation9 + $0x630] sm:$0xff]
        %v1565 = vld [vmem:[#allocation9 + $0x638] sm:$0xff]
        %v1566 = vld [vmem:[#allocation9 + $0x640] sm:$0xff]
        %v1567 = vld [vmem:[#allocation9 + $0x648] sm:$0xff]
        %v1568 = vld [vmem:[#allocation9 + $0x650] sm:$0xff]
        %v1569 = vld [vmem:[#allocation9 + $0x658] sm:$0xff]
        %v1570 = vld [vmem:[#allocation9 + $0x660] sm:$0xff]
        %v1571 = vld [vmem:[#allocation9 + $0x668] sm:$0xff]
        %v1572 = vld [vmem:[#allocation9 + $0x670] sm:$0xff]
        %v1573 = vld [vmem:[#allocation9 + $0x678] sm:$0xff]
        %v1574 = vld [vmem:[#allocation9 + $0x680] sm:$0xff]
        %v1575 = vld [vmem:[#allocation9 + $0x688] sm:$0xff]
        %v1576 = vld [vmem:[#allocation9 + $0x690] sm:$0xff]
        %v1577 = vld [vmem:[#allocation9 + $0x698] sm:$0xff]
        %v1578 = vld [vmem:[#allocation9 + $0x6a0] sm:$0xff]
        %v1579 = vld [vmem:[#allocation9 + $0x6a8] sm:$0xff]
        %v1580 = vld [vmem:[#allocation9 + $0x6b0] sm:$0xff]
        %v1581 = vld [vmem:[#allocation9 + $0x6b8] sm:$0xff]
        %v1582 = vld [vmem:[#allocation9 + $0x6c0] sm:$0xff]
        %v1583 = vld [vmem:[#allocation9 + $0x6c8] sm:$0xff]
        %v1584 = vld [vmem:[#allocation9 + $0x6d0] sm:$0xff]
        %v1585 = vld [vmem:[#allocation9 + $0x6d8] sm:$0xff]
        %v1586 = vld [vmem:[#allocation9 + $0x6e0] sm:$0xff]
        %v1587 = vld [vmem:[#allocation9 + $0x6e8] sm:$0xff]
        %v1588 = vld [vmem:[#allocation9 + $0x6f0] sm:$0xff]
        %v1589 = vld [vmem:[#allocation9 + $0x6f8] sm:$0xff]
        %v1590 = vld [vmem:[#allocation9 + $0x700] sm:$0xff]
        %v1591 = vld [vmem:[#allocation9 + $0x708] sm:$0xff]
        %v1592 = vld [vmem:[#allocation9 + $0x710] sm:$0xff]
        %v1593 = vld [vmem:[#allocation9 + $0x718] sm:$0xff]
        %v1594 = vld [vmem:[#allocation9 + $0x720] sm:$0xff]
        %v1595 = vld [vmem:[#allocation9 + $0x728] sm:$0xff]
        %v1596 = vld [vmem:[#allocation9 + $0x730] sm:$0xff]
        %v1597 = vld [vmem:[#allocation9 + $0x738] sm:$0xff]
        %v1598 = vld [vmem:[#allocation9 + $0x740] sm:$0xff]
        %v1599 = vld [vmem:[#allocation9 + $0x748] sm:$0xff]
        %v1600 = vld [vmem:[#allocation9 + $0x750] sm:$0xff]
        %v1601 = vld [vmem:[#allocation9 + $0x758] sm:$0xff]
        %v1602 = vld [vmem:[#allocation9 + $0x760] sm:$0xff]
        %v1603 = vld [vmem:[#allocation9 + $0x768] sm:$0xff]
        %v1604 = vld [vmem:[#allocation9 + $0x770] sm:$0xff]
        %v1605 = vld [vmem:[#allocation9 + $0x778] sm:$0xff]
        %v1606 = vld [vmem:[#allocation9 + $0x780] sm:$0xff]
        %v1607 = vld [vmem:[#allocation9 + $0x788] sm:$0xff]
        %v1608 = vld [vmem:[#allocation9 + $0x790] sm:$0xff]
        %v1609 = vld [vmem:[#allocation9 + $0x798] sm:$0xff]
        %v1610 = vld [vmem:[#allocation9 + $0x7a0] sm:$0xff]
        %v1611 = vld [vmem:[#allocation9 + $0x7a8] sm:$0xff]
        %v1612 = vld [vmem:[#allocation9 + $0x7b0] sm:$0xff]
        %v1613 = vld [vmem:[#allocation9 + $0x7b8] sm:$0xff]
        %v1614 = vld [vmem:[#allocation9 + $0x7c0] sm:$0xff]
        %v1615 = vld [vmem:[#allocation9 + $0x7c8] sm:$0xff]
        %v1616 = vld [vmem:[#allocation9 + $0x7d0] sm:$0xff]
        %v1617 = vld [vmem:[#allocation9 + $0x7d8] sm:$0xff]
        %v1618 = vld [vmem:[#allocation9 + $0x7e0] sm:$0xff]
        %v1619 = vld [vmem:[#allocation9 + $0x7e8] sm:$0xff]
        %v1620 = vld [vmem:[#allocation9 + $0x7f0] sm:$0xff]
        %v1621 = vld [vmem:[#allocation9 + $0x7f8] sm:$0xff]
        %v1622 = vld [vmem:[%s4] sm:$0xf]
        %v1624 = vlaneseq
        %v1625 = vshrl.u32 %v1624, 7
        %v1626 = vsub.s32 0, %v1625
        %v1627 = vrot.slane %v1622, %v1626
        %v1628 = vlaneseq
        %v1629 = vshrl.u32 %v1628, 7
        %v1630 = vsub.s32 1, %v1629
        %v1631 = vrot.slane %v1622, %v1630
        %v1632 = vlaneseq
        %v1633 = vshrl.u32 %v1632, 7
        %v1634 = vsub.s32 2, %v1633
        %v1635 = vrot.slane %v1622, %v1634
        %v1636 = vlaneseq
        %v1637 = vshrl.u32 %v1636, 7
        %v1638 = vsub.s32 3, %v1637
        %v1639 = vrot.slane %v1622, %v1638
        %v1900 = vunpack.c.l.b16 %v1366
        %v1901 = vunpack.c.h.b16 %v1366
        %v1902 = vunpack.c.l.b16 %v1367
        %v1903 = vunpack.c.h.b16 %v1367
        %v1904 = vunpack.c.l.b16 %v1368
        %v1905 = vunpack.c.h.b16 %v1368
        %v1906 = vunpack.c.l.b16 %v1369
        %v1907 = vunpack.c.h.b16 %v1369
        %v1908 = vunpack.c.l.b16 %v1370
        %v1909 = vunpack.c.h.b16 %v1370
        %v1910 = vunpack.c.l.b16 %v1371
        %v1911 = vunpack.c.h.b16 %v1371
        %v1912 = vunpack.c.l.b16 %v1372
        %v1913 = vunpack.c.h.b16 %v1372
        %v1914 = vunpack.c.l.b16 %v1373
        %v1915 = vunpack.c.h.b16 %v1373
        %v1916 = vunpack.c.l.b16 %v1374
        %v1917 = vunpack.c.h.b16 %v1374
        %v1918 = vunpack.c.l.b16 %v1375
        %v1919 = vunpack.c.h.b16 %v1375
        %v1920 = vunpack.c.l.b16 %v1376
        %v1921 = vunpack.c.h.b16 %v1376
        %v1922 = vunpack.c.l.b16 %v1377
        %v1923 = vunpack.c.h.b16 %v1377
        %v1924 = vunpack.c.l.b16 %v1378
        %v1925 = vunpack.c.h.b16 %v1378
        %v1926 = vunpack.c.l.b16 %v1379
        %v1927 = vunpack.c.h.b16 %v1379
        %v1928 = vunpack.c.l.b16 %v1380
        %v1929 = vunpack.c.h.b16 %v1380
        %v1930 = vunpack.c.l.b16 %v1381
        %v1931 = vunpack.c.h.b16 %v1381
        %v1932 = vunpack.c.l.b16 %v1382
        %v1933 = vunpack.c.h.b16 %v1382
        %v1934 = vunpack.c.l.b16 %v1383
        %v1935 = vunpack.c.h.b16 %v1383
        %v1936 = vunpack.c.l.b16 %v1384
        %v1937 = vunpack.c.h.b16 %v1384
        %v1938 = vunpack.c.l.b16 %v1385
        %v1939 = vunpack.c.h.b16 %v1385
        %v1940 = vunpack.c.l.b16 %v1386
        %v1941 = vunpack.c.h.b16 %v1386
        %v1942 = vunpack.c.l.b16 %v1387
        %v1943 = vunpack.c.h.b16 %v1387
        %v1944 = vunpack.c.l.b16 %v1388
        %v1945 = vunpack.c.h.b16 %v1388
        %v1946 = vunpack.c.l.b16 %v1389
        %v1947 = vunpack.c.h.b16 %v1389
        %v1948 = vunpack.c.l.b16 %v1390
        %v1949 = vunpack.c.h.b16 %v1390
        %v1950 = vunpack.c.l.b16 %v1391
        %v1951 = vunpack.c.h.b16 %v1391
        %v1952 = vunpack.c.l.b16 %v1392
        %v1953 = vunpack.c.h.b16 %v1392
        %v1954 = vunpack.c.l.b16 %v1393
        %v1955 = vunpack.c.h.b16 %v1393
        %v1956 = vunpack.c.l.b16 %v1394
        %v1957 = vunpack.c.h.b16 %v1394
        %v1958 = vunpack.c.l.b16 %v1395
        %v1959 = vunpack.c.h.b16 %v1395
        %v1960 = vunpack.c.l.b16 %v1396
        %v1961 = vunpack.c.h.b16 %v1396
        %v1962 = vunpack.c.l.b16 %v1397
        %v1963 = vunpack.c.h.b16 %v1397
        %v1964 = vunpack.c.l.b16 %v1398
        %v1965 = vunpack.c.h.b16 %v1398
        %v1966 = vunpack.c.l.b16 %v1399
        %v1967 = vunpack.c.h.b16 %v1399
        %v1968 = vunpack.c.l.b16 %v1400
        %v1969 = vunpack.c.h.b16 %v1400
        %v1970 = vunpack.c.l.b16 %v1401
        %v1971 = vunpack.c.h.b16 %v1401
        %v1972 = vunpack.c.l.b16 %v1402
        %v1973 = vunpack.c.h.b16 %v1402
        %v1974 = vunpack.c.l.b16 %v1403
        %v1975 = vunpack.c.h.b16 %v1403
        %v1976 = vunpack.c.l.b16 %v1404
        %v1977 = vunpack.c.h.b16 %v1404
        %v1978 = vunpack.c.l.b16 %v1405
        %v1979 = vunpack.c.h.b16 %v1405
        %v1980 = vunpack.c.l.b16 %v1406
        %v1981 = vunpack.c.h.b16 %v1406
        %v1982 = vunpack.c.l.b16 %v1407
        %v1983 = vunpack.c.h.b16 %v1407
        %v1984 = vunpack.c.l.b16 %v1408
        %v1985 = vunpack.c.h.b16 %v1408
        %v1986 = vunpack.c.l.b16 %v1409
        %v1987 = vunpack.c.h.b16 %v1409
        %v1988 = vunpack.c.l.b16 %v1410
        %v1989 = vunpack.c.h.b16 %v1410
        %v1990 = vunpack.c.l.b16 %v1411
        %v1991 = vunpack.c.h.b16 %v1411
        %v1992 = vunpack.c.l.b16 %v1412
        %v1993 = vunpack.c.h.b16 %v1412
        %v1994 = vunpack.c.l.b16 %v1413
        %v1995 = vunpack.c.h.b16 %v1413
        %v1996 = vunpack.c.l.b16 %v1414
        %v1997 = vunpack.c.h.b16 %v1414
        %v1998 = vunpack.c.l.b16 %v1415
        %v1999 = vunpack.c.h.b16 %v1415
        %v2000 = vunpack.c.l.b16 %v1416
        %v2001 = vunpack.c.h.b16 %v1416
        %v2002 = vunpack.c.l.b16 %v1417
        %v2003 = vunpack.c.h.b16 %v1417
        %v2004 = vunpack.c.l.b16 %v1418
        %v2005 = vunpack.c.h.b16 %v1418
        %v2006 = vunpack.c.l.b16 %v1419
        %v2007 = vunpack.c.h.b16 %v1419
        %v2008 = vunpack.c.l.b16 %v1420
        %v2009 = vunpack.c.h.b16 %v1420
        %v2010 = vunpack.c.l.b16 %v1421
        %v2011 = vunpack.c.h.b16 %v1421
        %v2012 = vunpack.c.l.b16 %v1422
        %v2013 = vunpack.c.h.b16 %v1422
        %v2014 = vunpack.c.l.b16 %v1423
        %v2015 = vunpack.c.h.b16 %v1423
        %v2016 = vunpack.c.l.b16 %v1424
        %v2017 = vunpack.c.h.b16 %v1424
        %v2018 = vunpack.c.l.b16 %v1425
        %v2019 = vunpack.c.h.b16 %v1425
        %v2020 = vunpack.c.l.b16 %v1426
        %v2021 = vunpack.c.h.b16 %v1426
        %v2022 = vunpack.c.l.b16 %v1427
        %v2023 = vunpack.c.h.b16 %v1427
        %v2024 = vunpack.c.l.b16 %v1428
        %v2025 = vunpack.c.h.b16 %v1428
        %v2026 = vunpack.c.l.b16 %v1429
        %v2027 = vunpack.c.h.b16 %v1429
        %v2028 = vunpack.c.l.b16 %v1430
        %v2029 = vunpack.c.h.b16 %v1430
        %v2030 = vunpack.c.l.b16 %v1431
        %v2031 = vunpack.c.h.b16 %v1431
        %v2032 = vunpack.c.l.b16 %v1432
        %v2033 = vunpack.c.h.b16 %v1432
        %v2034 = vunpack.c.l.b16 %v1433
        %v2035 = vunpack.c.h.b16 %v1433
        %v2036 = vunpack.c.l.b16 %v1434
        %v2037 = vunpack.c.h.b16 %v1434
        %v2038 = vunpack.c.l.b16 %v1435
        %v2039 = vunpack.c.h.b16 %v1435
        %v2040 = vunpack.c.l.b16 %v1436
        %v2041 = vunpack.c.h.b16 %v1436
        %v2042 = vunpack.c.l.b16 %v1437
        %v2043 = vunpack.c.h.b16 %v1437
        %v2044 = vunpack.c.l.b16 %v1438
        %v2045 = vunpack.c.h.b16 %v1438
        %v2046 = vunpack.c.l.b16 %v1439
        %v2047 = vunpack.c.h.b16 %v1439
        %v2048 = vunpack.c.l.b16 %v1440
        %v2049 = vunpack.c.h.b16 %v1440
        %v2050 = vunpack.c.l.b16 %v1441
        %v2051 = vunpack.c.h.b16 %v1441
        %v2052 = vunpack.c.l.b16 %v1442
        %v2053 = vunpack.c.h.b16 %v1442
        %v2054 = vunpack.c.l.b16 %v1443
        %v2055 = vunpack.c.h.b16 %v1443
        %v2056 = vunpack.c.l.b16 %v1444
        %v2057 = vunpack.c.h.b16 %v1444
        %v2058 = vunpack.c.l.b16 %v1445
        %v2059 = vunpack.c.h.b16 %v1445
        %v2060 = vunpack.c.l.b16 %v1446
        %v2061 = vunpack.c.h.b16 %v1446
        %v2062 = vunpack.c.l.b16 %v1447
        %v2063 = vunpack.c.h.b16 %v1447
        %v2064 = vunpack.c.l.b16 %v1448
        %v2065 = vunpack.c.h.b16 %v1448
        %v2066 = vunpack.c.l.b16 %v1449
        %v2067 = vunpack.c.h.b16 %v1449
        %v2068 = vunpack.c.l.b16 %v1450
        %v2069 = vunpack.c.h.b16 %v1450
        %v2070 = vunpack.c.l.b16 %v1451
        %v2071 = vunpack.c.h.b16 %v1451
        %v2072 = vunpack.c.l.b16 %v1452
        %v2073 = vunpack.c.h.b16 %v1452
        %v2074 = vunpack.c.l.b16 %v1453
        %v2075 = vunpack.c.h.b16 %v1453
        %v2076 = vunpack.c.l.b16 %v1454
        %v2077 = vunpack.c.h.b16 %v1454
        %v2078 = vunpack.c.l.b16 %v1455
        %v2079 = vunpack.c.h.b16 %v1455
        %v2080 = vunpack.c.l.b16 %v1456
        %v2081 = vunpack.c.h.b16 %v1456
        %v2082 = vunpack.c.l.b16 %v1457
        %v2083 = vunpack.c.h.b16 %v1457
        %v2084 = vunpack.c.l.b16 %v1458
        %v2085 = vunpack.c.h.b16 %v1458
        %v2086 = vunpack.c.l.b16 %v1459
        %v2087 = vunpack.c.h.b16 %v1459
        %v2088 = vunpack.c.l.b16 %v1460
        %v2089 = vunpack.c.h.b16 %v1460
        %v2090 = vunpack.c.l.b16 %v1461
        %v2091 = vunpack.c.h.b16 %v1461
        %v2092 = vunpack.c.l.b16 %v1462
        %v2093 = vunpack.c.h.b16 %v1462
        %v2094 = vunpack.c.l.b16 %v1463
        %v2095 = vunpack.c.h.b16 %v1463
        %v2096 = vunpack.c.l.b16 %v1464
        %v2097 = vunpack.c.h.b16 %v1464
        %v2098 = vunpack.c.l.b16 %v1465
        %v2099 = vunpack.c.h.b16 %v1465
        %v2100 = vunpack.c.l.b16 %v1466
        %v2101 = vunpack.c.h.b16 %v1466
        %v2102 = vunpack.c.l.b16 %v1467
        %v2103 = vunpack.c.h.b16 %v1467
        %v2104 = vunpack.c.l.b16 %v1468
        %v2105 = vunpack.c.h.b16 %v1468
        %v2106 = vunpack.c.l.b16 %v1469
        %v2107 = vunpack.c.h.b16 %v1469
        %v2108 = vunpack.c.l.b16 %v1470
        %v2109 = vunpack.c.h.b16 %v1470
        %v2110 = vunpack.c.l.b16 %v1471
        %v2111 = vunpack.c.h.b16 %v1471
        %v2112 = vunpack.c.l.b16 %v1472
        %v2113 = vunpack.c.h.b16 %v1472
        %v2114 = vunpack.c.l.b16 %v1473
        %v2115 = vunpack.c.h.b16 %v1473
        %v2116 = vunpack.c.l.b16 %v1474
        %v2117 = vunpack.c.h.b16 %v1474
        %v2118 = vunpack.c.l.b16 %v1475
        %v2119 = vunpack.c.h.b16 %v1475
        %v2120 = vunpack.c.l.b16 %v1476
        %v2121 = vunpack.c.h.b16 %v1476
        %v2122 = vunpack.c.l.b16 %v1477
        %v2123 = vunpack.c.h.b16 %v1477
        %v2124 = vunpack.c.l.b16 %v1478
        %v2125 = vunpack.c.h.b16 %v1478
        %v2126 = vunpack.c.l.b16 %v1479
        %v2127 = vunpack.c.h.b16 %v1479
        %v2128 = vunpack.c.l.b16 %v1480
        %v2129 = vunpack.c.h.b16 %v1480
        %v2130 = vunpack.c.l.b16 %v1481
        %v2131 = vunpack.c.h.b16 %v1481
        %v2132 = vunpack.c.l.b16 %v1482
        %v2133 = vunpack.c.h.b16 %v1482
        %v2134 = vunpack.c.l.b16 %v1483
        %v2135 = vunpack.c.h.b16 %v1483
        %v2136 = vunpack.c.l.b16 %v1484
        %v2137 = vunpack.c.h.b16 %v1484
        %v2138 = vunpack.c.l.b16 %v1485
        %v2139 = vunpack.c.h.b16 %v1485
        %v2140 = vunpack.c.l.b16 %v1486
        %v2141 = vunpack.c.h.b16 %v1486
        %v2142 = vunpack.c.l.b16 %v1487
        %v2143 = vunpack.c.h.b16 %v1487
        %v2144 = vunpack.c.l.b16 %v1488
        %v2145 = vunpack.c.h.b16 %v1488
        %v2146 = vunpack.c.l.b16 %v1489
        %v2147 = vunpack.c.h.b16 %v1489
        %v2148 = vunpack.c.l.b16 %v1490
        %v2149 = vunpack.c.h.b16 %v1490
        %v2150 = vunpack.c.l.b16 %v1491
        %v2151 = vunpack.c.h.b16 %v1491
        %v2152 = vunpack.c.l.b16 %v1492
        %v2153 = vunpack.c.h.b16 %v1492
        %v2154 = vunpack.c.l.b16 %v1493
        %v2155 = vunpack.c.h.b16 %v1493
        %v2156 = vunpack.c.l.b16 %v1494
        %v2157 = vunpack.c.h.b16 %v1494
        %v2158 = vunpack.c.l.b16 %v1495
        %v2159 = vunpack.c.h.b16 %v1495
        %v2160 = vunpack.c.l.b16 %v1496
        %v2161 = vunpack.c.h.b16 %v1496
        %v2162 = vunpack.c.l.b16 %v1497
        %v2163 = vunpack.c.h.b16 %v1497
        %v2164 = vunpack.c.l.b16 %v1498
        %v2165 = vunpack.c.h.b16 %v1498
        %v2166 = vunpack.c.l.b16 %v1499
        %v2167 = vunpack.c.h.b16 %v1499
        %v2168 = vunpack.c.l.b16 %v1500
        %v2169 = vunpack.c.h.b16 %v1500
        %v2170 = vunpack.c.l.b16 %v1501
        %v2171 = vunpack.c.h.b16 %v1501
        %v2172 = vunpack.c.l.b16 %v1502
        %v2173 = vunpack.c.h.b16 %v1502
        %v2174 = vunpack.c.l.b16 %v1503
        %v2175 = vunpack.c.h.b16 %v1503
        %v2176 = vunpack.c.l.b16 %v1504
        %v2177 = vunpack.c.h.b16 %v1504
        %v2178 = vunpack.c.l.b16 %v1505
        %v2179 = vunpack.c.h.b16 %v1505
        %v2180 = vunpack.c.l.b16 %v1506
        %v2181 = vunpack.c.h.b16 %v1506
        %v2182 = vunpack.c.l.b16 %v1507
        %v2183 = vunpack.c.h.b16 %v1507
        %v2184 = vunpack.c.l.b16 %v1508
        %v2185 = vunpack.c.h.b16 %v1508
        %v2186 = vunpack.c.l.b16 %v1509
        %v2187 = vunpack.c.h.b16 %v1509
        %v2188 = vunpack.c.l.b16 %v1510
        %v2189 = vunpack.c.h.b16 %v1510
        %v2190 = vunpack.c.l.b16 %v1511
        %v2191 = vunpack.c.h.b16 %v1511
        %v2192 = vunpack.c.l.b16 %v1512
        %v2193 = vunpack.c.h.b16 %v1512
        %v2194 = vunpack.c.l.b16 %v1513
        %v2195 = vunpack.c.h.b16 %v1513
        %v2196 = vunpack.c.l.b16 %v1514
        %v2197 = vunpack.c.h.b16 %v1514
        %v2198 = vunpack.c.l.b16 %v1515
        %v2199 = vunpack.c.h.b16 %v1515
        %v2200 = vunpack.c.l.b16 %v1516
        %v2201 = vunpack.c.h.b16 %v1516
        %v2202 = vunpack.c.l.b16 %v1517
        %v2203 = vunpack.c.h.b16 %v1517
        %v2204 = vunpack.c.l.b16 %v1518
        %v2205 = vunpack.c.h.b16 %v1518
        %v2206 = vunpack.c.l.b16 %v1519
        %v2207 = vunpack.c.h.b16 %v1519
        %v2208 = vunpack.c.l.b16 %v1520
        %v2209 = vunpack.c.h.b16 %v1520
        %v2210 = vunpack.c.l.b16 %v1521
        %v2211 = vunpack.c.h.b16 %v1521
        %v2212 = vunpack.c.l.b16 %v1522
        %v2213 = vunpack.c.h.b16 %v1522
        %v2214 = vunpack.c.l.b16 %v1523
        %v2215 = vunpack.c.h.b16 %v1523
        %v2216 = vunpack.c.l.b16 %v1524
        %v2217 = vunpack.c.h.b16 %v1524
        %v2218 = vunpack.c.l.b16 %v1525
        %v2219 = vunpack.c.h.b16 %v1525
        %v2220 = vunpack.c.l.b16 %v1526
        %v2221 = vunpack.c.h.b16 %v1526
        %v2222 = vunpack.c.l.b16 %v1527
        %v2223 = vunpack.c.h.b16 %v1527
        %v2224 = vunpack.c.l.b16 %v1528
        %v2225 = vunpack.c.h.b16 %v1528
        %v2226 = vunpack.c.l.b16 %v1529
        %v2227 = vunpack.c.h.b16 %v1529
        %v2228 = vunpack.c.l.b16 %v1530
        %v2229 = vunpack.c.h.b16 %v1530
        %v2230 = vunpack.c.l.b16 %v1531
        %v2231 = vunpack.c.h.b16 %v1531
        %v2232 = vunpack.c.l.b16 %v1532
        %v2233 = vunpack.c.h.b16 %v1532
        %v2234 = vunpack.c.l.b16 %v1533
        %v2235 = vunpack.c.h.b16 %v1533
        %v2236 = vunpack.c.l.b16 %v1534
        %v2237 = vunpack.c.h.b16 %v1534
        %v2238 = vunpack.c.l.b16 %v1535
        %v2239 = vunpack.c.h.b16 %v1535
        %v2240 = vunpack.c.l.b16 %v1536
        %v2241 = vunpack.c.h.b16 %v1536
        %v2242 = vunpack.c.l.b16 %v1537
        %v2243 = vunpack.c.h.b16 %v1537
        %v2244 = vunpack.c.l.b16 %v1538
        %v2245 = vunpack.c.h.b16 %v1538
        %v2246 = vunpack.c.l.b16 %v1539
        %v2247 = vunpack.c.h.b16 %v1539
        %v2248 = vunpack.c.l.b16 %v1540
        %v2249 = vunpack.c.h.b16 %v1540
        %v2250 = vunpack.c.l.b16 %v1541
        %v2251 = vunpack.c.h.b16 %v1541
        %v2252 = vunpack.c.l.b16 %v1542
        %v2253 = vunpack.c.h.b16 %v1542
        %v2254 = vunpack.c.l.b16 %v1543
        %v2255 = vunpack.c.h.b16 %v1543
        %v2256 = vunpack.c.l.b16 %v1544
        %v2257 = vunpack.c.h.b16 %v1544
        %v2258 = vunpack.c.l.b16 %v1545
        %v2259 = vunpack.c.h.b16 %v1545
        %v2260 = vunpack.c.l.b16 %v1546
        %v2261 = vunpack.c.h.b16 %v1546
        %v2262 = vunpack.c.l.b16 %v1547
        %v2263 = vunpack.c.h.b16 %v1547
        %v2264 = vunpack.c.l.b16 %v1548
        %v2265 = vunpack.c.h.b16 %v1548
        %v2266 = vunpack.c.l.b16 %v1549
        %v2267 = vunpack.c.h.b16 %v1549
        %v2268 = vunpack.c.l.b16 %v1550
        %v2269 = vunpack.c.h.b16 %v1550
        %v2270 = vunpack.c.l.b16 %v1551
        %v2271 = vunpack.c.h.b16 %v1551
        %v2272 = vunpack.c.l.b16 %v1552
        %v2273 = vunpack.c.h.b16 %v1552
        %v2274 = vunpack.c.l.b16 %v1553
        %v2275 = vunpack.c.h.b16 %v1553
        %v2276 = vunpack.c.l.b16 %v1554
        %v2277 = vunpack.c.h.b16 %v1554
        %v2278 = vunpack.c.l.b16 %v1555
        %v2279 = vunpack.c.h.b16 %v1555
        %v2280 = vunpack.c.l.b16 %v1556
        %v2281 = vunpack.c.h.b16 %v1556
        %v2282 = vunpack.c.l.b16 %v1557
        %v2283 = vunpack.c.h.b16 %v1557
        %v2284 = vunpack.c.l.b16 %v1558
        %v2285 = vunpack.c.h.b16 %v1558
        %v2286 = vunpack.c.l.b16 %v1559
        %v2287 = vunpack.c.h.b16 %v1559
        %v2288 = vunpack.c.l.b16 %v1560
        %v2289 = vunpack.c.h.b16 %v1560
        %v2290 = vunpack.c.l.b16 %v1561
        %v2291 = vunpack.c.h.b16 %v1561
        %v2292 = vunpack.c.l.b16 %v1562
        %v2293 = vunpack.c.h.b16 %v1562
        %v2294 = vunpack.c.l.b16 %v1563
        %v2295 = vunpack.c.h.b16 %v1563
        %v2296 = vunpack.c.l.b16 %v1564
        %v2297 = vunpack.c.h.b16 %v1564
        %v2298 = vunpack.c.l.b16 %v1565
        %v2299 = vunpack.c.h.b16 %v1565
        %v2300 = vunpack.c.l.b16 %v1566
        %v2301 = vunpack.c.h.b16 %v1566
        %v2302 = vunpack.c.l.b16 %v1567
        %v2303 = vunpack.c.h.b16 %v1567
        %v2304 = vunpack.c.l.b16 %v1568
        %v2305 = vunpack.c.h.b16 %v1568
        %v2306 = vunpack.c.l.b16 %v1569
        %v2307 = vunpack.c.h.b16 %v1569
        %v2308 = vunpack.c.l.b16 %v1570
        %v2309 = vunpack.c.h.b16 %v1570
        %v2310 = vunpack.c.l.b16 %v1571
        %v2311 = vunpack.c.h.b16 %v1571
        %v2312 = vunpack.c.l.b16 %v1572
        %v2313 = vunpack.c.h.b16 %v1572
        %v2314 = vunpack.c.l.b16 %v1573
        %v2315 = vunpack.c.h.b16 %v1573
        %v2316 = vunpack.c.l.b16 %v1574
        %v2317 = vunpack.c.h.b16 %v1574
        %v2318 = vunpack.c.l.b16 %v1575
        %v2319 = vunpack.c.h.b16 %v1575
        %v2320 = vunpack.c.l.b16 %v1576
        %v2321 = vunpack.c.h.b16 %v1576
        %v2322 = vunpack.c.l.b16 %v1577
        %v2323 = vunpack.c.h.b16 %v1577
        %v2324 = vunpack.c.l.b16 %v1578
        %v2325 = vunpack.c.h.b16 %v1578
        %v2326 = vunpack.c.l.b16 %v1579
        %v2327 = vunpack.c.h.b16 %v1579
        %v2328 = vunpack.c.l.b16 %v1580
        %v2329 = vunpack.c.h.b16 %v1580
        %v2330 = vunpack.c.l.b16 %v1581
        %v2331 = vunpack.c.h.b16 %v1581
        %v2332 = vunpack.c.l.b16 %v1582
        %v2333 = vunpack.c.h.b16 %v1582
        %v2334 = vunpack.c.l.b16 %v1583
        %v2335 = vunpack.c.h.b16 %v1583
        %v2336 = vunpack.c.l.b16 %v1584
        %v2337 = vunpack.c.h.b16 %v1584
        %v2338 = vunpack.c.l.b16 %v1585
        %v2339 = vunpack.c.h.b16 %v1585
        %v2340 = vunpack.c.l.b16 %v1586
        %v2341 = vunpack.c.h.b16 %v1586
        %v2342 = vunpack.c.l.b16 %v1587
        %v2343 = vunpack.c.h.b16 %v1587
        %v2344 = vunpack.c.l.b16 %v1588
        %v2345 = vunpack.c.h.b16 %v1588
        %v2346 = vunpack.c.l.b16 %v1589
        %v2347 = vunpack.c.h.b16 %v1589
        %v2348 = vunpack.c.l.b16 %v1590
        %v2349 = vunpack.c.h.b16 %v1590
        %v2350 = vunpack.c.l.b16 %v1591
        %v2351 = vunpack.c.h.b16 %v1591
        %v2352 = vunpack.c.l.b16 %v1592
        %v2353 = vunpack.c.h.b16 %v1592
        %v2354 = vunpack.c.l.b16 %v1593
        %v2355 = vunpack.c.h.b16 %v1593
        %v2356 = vunpack.c.l.b16 %v1594
        %v2357 = vunpack.c.h.b16 %v1594
        %v2358 = vunpack.c.l.b16 %v1595
        %v2359 = vunpack.c.h.b16 %v1595
        %v2360 = vunpack.c.l.b16 %v1596
        %v2361 = vunpack.c.h.b16 %v1596
        %v2362 = vunpack.c.l.b16 %v1597
        %v2363 = vunpack.c.h.b16 %v1597
        %v2364 = vunpack.c.l.b16 %v1598
        %v2365 = vunpack.c.h.b16 %v1598
        %v2366 = vunpack.c.l.b16 %v1599
        %v2367 = vunpack.c.h.b16 %v1599
        %v2368 = vunpack.c.l.b16 %v1600
        %v2369 = vunpack.c.h.b16 %v1600
        %v2370 = vunpack.c.l.b16 %v1601
        %v2371 = vunpack.c.h.b16 %v1601
        %v2372 = vunpack.c.l.b16 %v1602
        %v2373 = vunpack.c.h.b16 %v1602
        %v2374 = vunpack.c.l.b16 %v1603
        %v2375 = vunpack.c.h.b16 %v1603
        %v2376 = vunpack.c.l.b16 %v1604
        %v2377 = vunpack.c.h.b16 %v1604
        %v2378 = vunpack.c.l.b16 %v1605
        %v2379 = vunpack.c.h.b16 %v1605
        %v2380 = vunpack.c.l.b16 %v1606
        %v2381 = vunpack.c.h.b16 %v1606
        %v2382 = vunpack.c.l.b16 %v1607
        %v2383 = vunpack.c.h.b16 %v1607
        %v2384 = vunpack.c.l.b16 %v1608
        %v2385 = vunpack.c.h.b16 %v1608
        %v2386 = vunpack.c.l.b16 %v1609
        %v2387 = vunpack.c.h.b16 %v1609
        %v2388 = vunpack.c.l.b16 %v1610
        %v2389 = vunpack.c.h.b16 %v1610
        %v2390 = vunpack.c.l.b16 %v1611
        %v2391 = vunpack.c.h.b16 %v1611
        %v2392 = vunpack.c.l.b16 %v1612
        %v2393 = vunpack.c.h.b16 %v1612
        %v2394 = vunpack.c.l.b16 %v1613
        %v2395 = vunpack.c.h.b16 %v1613
        %v2396 = vunpack.c.l.b16 %v1614
        %v2397 = vunpack.c.h.b16 %v1614
        %v2398 = vunpack.c.l.b16 %v1615
        %v2399 = vunpack.c.h.b16 %v1615
        %v2400 = vunpack.c.l.b16 %v1616
        %v2401 = vunpack.c.h.b16 %v1616
        %v2402 = vunpack.c.l.b16 %v1617
        %v2403 = vunpack.c.h.b16 %v1617
        %v2404 = vunpack.c.l.b16 %v1618
        %v2405 = vunpack.c.h.b16 %v1618
        %v2406 = vunpack.c.l.b16 %v1619
        %v2407 = vunpack.c.h.b16 %v1619
        %v2408 = vunpack.c.l.b16 %v1620
        %v2409 = vunpack.c.h.b16 %v1620
        %v2410 = vunpack.c.l.b16 %v1621
        %v2411 = vunpack.c.h.b16 %v1621
        %v2412 = vpack.c.b16 %v1904, %v1900
        %v2413 = vpack.c.b16 %v1905, %v1901
        %v2414 = vpack.c.b16 %v1906, %v1902
        %v2415 = vpack.c.b16 %v1907, %v1903
        %v2416 = vpack.c.b16 %v1912, %v1908
        %v2417 = vpack.c.b16 %v1913, %v1909
        %v2418 = vpack.c.b16 %v1914, %v1910
        %v2419 = vpack.c.b16 %v1915, %v1911
        %v2420 = vpack.c.b16 %v1920, %v1916
        %v2421 = vpack.c.b16 %v1921, %v1917
        %v2422 = vpack.c.b16 %v1922, %v1918
        %v2423 = vpack.c.b16 %v1923, %v1919
        %v2424 = vpack.c.b16 %v1928, %v1924
        %v2425 = vpack.c.b16 %v1929, %v1925
        %v2426 = vpack.c.b16 %v1930, %v1926
        %v2427 = vpack.c.b16 %v1931, %v1927
        %v2428 = vpack.c.b16 %v1936, %v1932
        %v2429 = vpack.c.b16 %v1937, %v1933
        %v2430 = vpack.c.b16 %v1938, %v1934
        %v2431 = vpack.c.b16 %v1939, %v1935
        %v2432 = vpack.c.b16 %v1944, %v1940
        %v2433 = vpack.c.b16 %v1945, %v1941
        %v2434 = vpack.c.b16 %v1946, %v1942
        %v2435 = vpack.c.b16 %v1947, %v1943
        %v2436 = vpack.c.b16 %v1952, %v1948
        %v2437 = vpack.c.b16 %v1953, %v1949
        %v2438 = vpack.c.b16 %v1954, %v1950
        %v2439 = vpack.c.b16 %v1955, %v1951
        %v2440 = vpack.c.b16 %v1960, %v1956
        %v2441 = vpack.c.b16 %v1961, %v1957
        %v2442 = vpack.c.b16 %v1962, %v1958
        %v2443 = vpack.c.b16 %v1963, %v1959
        %v2444 = vpack.c.b16 %v1968, %v1964
        %v2445 = vpack.c.b16 %v1969, %v1965
        %v2446 = vpack.c.b16 %v1970, %v1966
        %v2447 = vpack.c.b16 %v1971, %v1967
        %v2448 = vpack.c.b16 %v1976, %v1972
        %v2449 = vpack.c.b16 %v1977, %v1973
        %v2450 = vpack.c.b16 %v1978, %v1974
        %v2451 = vpack.c.b16 %v1979, %v1975
        %v2452 = vpack.c.b16 %v1984, %v1980
        %v2453 = vpack.c.b16 %v1985, %v1981
        %v2454 = vpack.c.b16 %v1986, %v1982
        %v2455 = vpack.c.b16 %v1987, %v1983
        %v2456 = vpack.c.b16 %v1992, %v1988
        %v2457 = vpack.c.b16 %v1993, %v1989
        %v2458 = vpack.c.b16 %v1994, %v1990
        %v2459 = vpack.c.b16 %v1995, %v1991
        %v2460 = vpack.c.b16 %v2000, %v1996
        %v2461 = vpack.c.b16 %v2001, %v1997
        %v2462 = vpack.c.b16 %v2002, %v1998
        %v2463 = vpack.c.b16 %v2003, %v1999
        %v2464 = vpack.c.b16 %v2008, %v2004
        %v2465 = vpack.c.b16 %v2009, %v2005
        %v2466 = vpack.c.b16 %v2010, %v2006
        %v2467 = vpack.c.b16 %v2011, %v2007
        %v2468 = vpack.c.b16 %v2016, %v2012
        %v2469 = vpack.c.b16 %v2017, %v2013
        %v2470 = vpack.c.b16 %v2018, %v2014
        %v2471 = vpack.c.b16 %v2019, %v2015
        %v2472 = vpack.c.b16 %v2024, %v2020
        %v2473 = vpack.c.b16 %v2025, %v2021
        %v2474 = vpack.c.b16 %v2026, %v2022
        %v2475 = vpack.c.b16 %v2027, %v2023
        %v2476 = vpack.c.b16 %v2032, %v2028
        %v2477 = vpack.c.b16 %v2033, %v2029
        %v2478 = vpack.c.b16 %v2034, %v2030
        %v2479 = vpack.c.b16 %v2035, %v2031
        %v2480 = vpack.c.b16 %v2040, %v2036
        %v2481 = vpack.c.b16 %v2041, %v2037
        %v2482 = vpack.c.b16 %v2042, %v2038
        %v2483 = vpack.c.b16 %v2043, %v2039
        %v2484 = vpack.c.b16 %v2048, %v2044
        %v2485 = vpack.c.b16 %v2049, %v2045
        %v2486 = vpack.c.b16 %v2050, %v2046
        %v2487 = vpack.c.b16 %v2051, %v2047
        %v2488 = vpack.c.b16 %v2056, %v2052
        %v2489 = vpack.c.b16 %v2057, %v2053
        %v2490 = vpack.c.b16 %v2058, %v2054
        %v2491 = vpack.c.b16 %v2059, %v2055
        %v2492 = vpack.c.b16 %v2064, %v2060
        %v2493 = vpack.c.b16 %v2065, %v2061
        %v2494 = vpack.c.b16 %v2066, %v2062
        %v2495 = vpack.c.b16 %v2067, %v2063
        %v2496 = vpack.c.b16 %v2072, %v2068
        %v2497 = vpack.c.b16 %v2073, %v2069
        %v2498 = vpack.c.b16 %v2074, %v2070
        %v2499 = vpack.c.b16 %v2075, %v2071
        %v2500 = vpack.c.b16 %v2080, %v2076
        %v2501 = vpack.c.b16 %v2081, %v2077
        %v2502 = vpack.c.b16 %v2082, %v2078
        %v2503 = vpack.c.b16 %v2083, %v2079
        %v2504 = vpack.c.b16 %v2088, %v2084
        %v2505 = vpack.c.b16 %v2089, %v2085
        %v2506 = vpack.c.b16 %v2090, %v2086
        %v2507 = vpack.c.b16 %v2091, %v2087
        %v2508 = vpack.c.b16 %v2096, %v2092
        %v2509 = vpack.c.b16 %v2097, %v2093
        %v2510 = vpack.c.b16 %v2098, %v2094
        %v2511 = vpack.c.b16 %v2099, %v2095
        %v2512 = vpack.c.b16 %v2104, %v2100
        %v2513 = vpack.c.b16 %v2105, %v2101
        %v2514 = vpack.c.b16 %v2106, %v2102
        %v2515 = vpack.c.b16 %v2107, %v2103
        %v2516 = vpack.c.b16 %v2112, %v2108
        %v2517 = vpack.c.b16 %v2113, %v2109
        %v2518 = vpack.c.b16 %v2114, %v2110
        %v2519 = vpack.c.b16 %v2115, %v2111
        %v2520 = vpack.c.b16 %v2120, %v2116
        %v2521 = vpack.c.b16 %v2121, %v2117
        %v2522 = vpack.c.b16 %v2122, %v2118
        %v2523 = vpack.c.b16 %v2123, %v2119
        %v2524 = vpack.c.b16 %v2128, %v2124
        %v2525 = vpack.c.b16 %v2129, %v2125
        %v2526 = vpack.c.b16 %v2130, %v2126
        %v2527 = vpack.c.b16 %v2131, %v2127
        %v2528 = vpack.c.b16 %v2136, %v2132
        %v2529 = vpack.c.b16 %v2137, %v2133
        %v2530 = vpack.c.b16 %v2138, %v2134
        %v2531 = vpack.c.b16 %v2139, %v2135
        %v2532 = vpack.c.b16 %v2144, %v2140
        %v2533 = vpack.c.b16 %v2145, %v2141
        %v2534 = vpack.c.b16 %v2146, %v2142
        %v2535 = vpack.c.b16 %v2147, %v2143
        %v2536 = vpack.c.b16 %v2152, %v2148
        %v2537 = vpack.c.b16 %v2153, %v2149
        %v2538 = vpack.c.b16 %v2154, %v2150
        %v2539 = vpack.c.b16 %v2155, %v2151
        %v2540 = vpack.c.b16 %v2160, %v2156
        %v2541 = vpack.c.b16 %v2161, %v2157
        %v2542 = vpack.c.b16 %v2162, %v2158
        %v2543 = vpack.c.b16 %v2163, %v2159
        %v2544 = vpack.c.b16 %v2168, %v2164
        %v2545 = vpack.c.b16 %v2169, %v2165
        %v2546 = vpack.c.b16 %v2170, %v2166
        %v2547 = vpack.c.b16 %v2171, %v2167
        %v2548 = vpack.c.b16 %v2176, %v2172
        %v2549 = vpack.c.b16 %v2177, %v2173
        %v2550 = vpack.c.b16 %v2178, %v2174
        %v2551 = vpack.c.b16 %v2179, %v2175
        %v2552 = vpack.c.b16 %v2184, %v2180
        %v2553 = vpack.c.b16 %v2185, %v2181
        %v2554 = vpack.c.b16 %v2186, %v2182
        %v2555 = vpack.c.b16 %v2187, %v2183
        %v2556 = vpack.c.b16 %v2192, %v2188
        %v2557 = vpack.c.b16 %v2193, %v2189
        %v2558 = vpack.c.b16 %v2194, %v2190
        %v2559 = vpack.c.b16 %v2195, %v2191
        %v2560 = vpack.c.b16 %v2200, %v2196
        %v2561 = vpack.c.b16 %v2201, %v2197
        %v2562 = vpack.c.b16 %v2202, %v2198
        %v2563 = vpack.c.b16 %v2203, %v2199
        %v2564 = vpack.c.b16 %v2208, %v2204
        %v2565 = vpack.c.b16 %v2209, %v2205
        %v2566 = vpack.c.b16 %v2210, %v2206
        %v2567 = vpack.c.b16 %v2211, %v2207
        %v2568 = vpack.c.b16 %v2216, %v2212
        %v2569 = vpack.c.b16 %v2217, %v2213
        %v2570 = vpack.c.b16 %v2218, %v2214
        %v2571 = vpack.c.b16 %v2219, %v2215
        %v2572 = vpack.c.b16 %v2224, %v2220
        %v2573 = vpack.c.b16 %v2225, %v2221
        %v2574 = vpack.c.b16 %v2226, %v2222
        %v2575 = vpack.c.b16 %v2227, %v2223
        %v2576 = vpack.c.b16 %v2232, %v2228
        %v2577 = vpack.c.b16 %v2233, %v2229
        %v2578 = vpack.c.b16 %v2234, %v2230
        %v2579 = vpack.c.b16 %v2235, %v2231
        %v2580 = vpack.c.b16 %v2240, %v2236
        %v2581 = vpack.c.b16 %v2241, %v2237
        %v2582 = vpack.c.b16 %v2242, %v2238
        %v2583 = vpack.c.b16 %v2243, %v2239
        %v2584 = vpack.c.b16 %v2248, %v2244
        %v2585 = vpack.c.b16 %v2249, %v2245
        %v2586 = vpack.c.b16 %v2250, %v2246
        %v2587 = vpack.c.b16 %v2251, %v2247
        %v2588 = vpack.c.b16 %v2256, %v2252
        %v2589 = vpack.c.b16 %v2257, %v2253
        %v2590 = vpack.c.b16 %v2258, %v2254
        %v2591 = vpack.c.b16 %v2259, %v2255
        %v2592 = vpack.c.b16 %v2264, %v2260
        %v2593 = vpack.c.b16 %v2265, %v2261
        %v2594 = vpack.c.b16 %v2266, %v2262
        %v2595 = vpack.c.b16 %v2267, %v2263
        %v2596 = vpack.c.b16 %v2272, %v2268
        %v2597 = vpack.c.b16 %v2273, %v2269
        %v2598 = vpack.c.b16 %v2274, %v2270
        %v2599 = vpack.c.b16 %v2275, %v2271
        %v2600 = vpack.c.b16 %v2280, %v2276
        %v2601 = vpack.c.b16 %v2281, %v2277
        %v2602 = vpack.c.b16 %v2282, %v2278
        %v2603 = vpack.c.b16 %v2283, %v2279
        %v2604 = vpack.c.b16 %v2288, %v2284
        %v2605 = vpack.c.b16 %v2289, %v2285
        %v2606 = vpack.c.b16 %v2290, %v2286
        %v2607 = vpack.c.b16 %v2291, %v2287
        %v2608 = vpack.c.b16 %v2296, %v2292
        %v2609 = vpack.c.b16 %v2297, %v2293
        %v2610 = vpack.c.b16 %v2298, %v2294
        %v2611 = vpack.c.b16 %v2299, %v2295
        %v2612 = vpack.c.b16 %v2304, %v2300
        %v2613 = vpack.c.b16 %v2305, %v2301
        %v2614 = vpack.c.b16 %v2306, %v2302
        %v2615 = vpack.c.b16 %v2307, %v2303
        %v2616 = vpack.c.b16 %v2312, %v2308
        %v2617 = vpack.c.b16 %v2313, %v2309
        %v2618 = vpack.c.b16 %v2314, %v2310
        %v2619 = vpack.c.b16 %v2315, %v2311
        %v2620 = vpack.c.b16 %v2320, %v2316
        %v2621 = vpack.c.b16 %v2321, %v2317
        %v2622 = vpack.c.b16 %v2322, %v2318
        %v2623 = vpack.c.b16 %v2323, %v2319
        %v2624 = vpack.c.b16 %v2328, %v2324
        %v2625 = vpack.c.b16 %v2329, %v2325
        %v2626 = vpack.c.b16 %v2330, %v2326
        %v2627 = vpack.c.b16 %v2331, %v2327
        %v2628 = vpack.c.b16 %v2336, %v2332
        %v2629 = vpack.c.b16 %v2337, %v2333
        %v2630 = vpack.c.b16 %v2338, %v2334
        %v2631 = vpack.c.b16 %v2339, %v2335
        %v2632 = vpack.c.b16 %v2344, %v2340
        %v2633 = vpack.c.b16 %v2345, %v2341
        %v2634 = vpack.c.b16 %v2346, %v2342
        %v2635 = vpack.c.b16 %v2347, %v2343
        %v2636 = vpack.c.b16 %v2352, %v2348
        %v2637 = vpack.c.b16 %v2353, %v2349
        %v2638 = vpack.c.b16 %v2354, %v2350
        %v2639 = vpack.c.b16 %v2355, %v2351
        %v2640 = vpack.c.b16 %v2360, %v2356
        %v2641 = vpack.c.b16 %v2361, %v2357
        %v2642 = vpack.c.b16 %v2362, %v2358
        %v2643 = vpack.c.b16 %v2363, %v2359
        %v2644 = vpack.c.b16 %v2368, %v2364
        %v2645 = vpack.c.b16 %v2369, %v2365
        %v2646 = vpack.c.b16 %v2370, %v2366
        %v2647 = vpack.c.b16 %v2371, %v2367
        %v2648 = vpack.c.b16 %v2376, %v2372
        %v2649 = vpack.c.b16 %v2377, %v2373
        %v2650 = vpack.c.b16 %v2378, %v2374
        %v2651 = vpack.c.b16 %v2379, %v2375
        %v2652 = vpack.c.b16 %v2384, %v2380
        %v2653 = vpack.c.b16 %v2385, %v2381
        %v2654 = vpack.c.b16 %v2386, %v2382
        %v2655 = vpack.c.b16 %v2387, %v2383
        %v2656 = vpack.c.b16 %v2392, %v2388
        %v2657 = vpack.c.b16 %v2393, %v2389
        %v2658 = vpack.c.b16 %v2394, %v2390
        %v2659 = vpack.c.b16 %v2395, %v2391
        %v2660 = vpack.c.b16 %v2400, %v2396
        %v2661 = vpack.c.b16 %v2401, %v2397
        %v2662 = vpack.c.b16 %v2402, %v2398
        %v2663 = vpack.c.b16 %v2403, %v2399
        %v2664 = vpack.c.b16 %v2408, %v2404
        %v2665 = vpack.c.b16 %v2409, %v2405
        %v2666 = vpack.c.b16 %v2410, %v2406
        %v2667 = vpack.c.b16 %v2411, %v2407
        %2924 = vmatprep.subr.bf16.mxu0 %v2413
        %2925 = vmatpush1.bf16.msra.mxu0 %v2412
        %2926 = vmatprep.subr.bf16.mxu0 %v2417
        %2927 = vmatpush1.bf16.msra.mxu0 %v2416
        %2928 = vmatprep.subr.bf16.mxu0 %v2421
        %2929 = vmatpush1.bf16.msra.mxu0 %v2420
        %2930 = vmatprep.subr.bf16.mxu0 %v2425
        %2931 = vmatpush1.bf16.msra.mxu0 %v2424
        %2932 = vmatprep.subr.bf16.mxu0 %v2429
        %2933 = vmatpush1.bf16.msra.mxu0 %v2428
        %2934 = vmatprep.subr.bf16.mxu0 %v2433
        %2935 = vmatpush1.bf16.msra.mxu0 %v2432
        %2936 = vmatprep.subr.bf16.mxu0 %v2437
        %2937 = vmatpush1.bf16.msra.mxu0 %v2436
        %2938 = vmatprep.subr.bf16.mxu0 %v2441
        %2939 = vmatpush1.bf16.msra.mxu0 %v2440
        %2940 = vmatprep.subr.bf16.mxu0 %v2445
        %2941 = vmatpush1.bf16.msra.mxu0 %v2444
        %2942 = vmatprep.subr.bf16.mxu0 %v2449
        %2943 = vmatpush1.bf16.msra.mxu0 %v2448
        %2944 = vmatprep.subr.bf16.mxu0 %v2453
        %2945 = vmatpush1.bf16.msra.mxu0 %v2452
        %2946 = vmatprep.subr.bf16.mxu0 %v2457
        %2947 = vmatpush1.bf16.msra.mxu0 %v2456
        %2948 = vmatprep.subr.bf16.mxu0 %v2461
        %2949 = vmatpush1.bf16.msra.mxu0 %v2460
        %2950 = vmatprep.subr.bf16.mxu0 %v2465
        %2951 = vmatpush1.bf16.msra.mxu0 %v2464
        %2952 = vmatprep.subr.bf16.mxu0 %v2469
        %2953 = vmatpush1.bf16.msra.mxu0 %v2468
        %2954 = vmatprep.subr.bf16.mxu0 %v2473
        %2955 = vmatpush1.bf16.msra.mxu0 %v2472
        %2956 = vmatprep.mubr.bf16.mxu0 %v1303
        %2957 = vmatmul.mubr.bf16.gmra.mrb[0].mxu0 %v1302
        %v2958 = vpop.f32.mrb[0].mxu0
        %v2959 = vadd.f32 %v1627, %v2958
        %v2960 = vpop.f32.mrb[0].mxu0
        %v2961 = vadd.f32 %v1631, %v2960
        %v2962 = vpop.f32.mrb[0].mxu0
        %v2963 = vadd.f32 %v1627, %v2962
        %v2964 = vpop.f32.mrb[0].mxu0
        %v2965 = vadd.f32 %v1631, %v2964
        %2966 = vmatprep.mubr.bf16.mxu0 %v1311
        %2967 = vmatmul.mubr.bf16.gmra.mrb[0].mxu0 %v1310
        %v2968 = vpop.f32.mrb[0].mxu0
        %v2969 = vadd.f32 %v1627, %v2968
        %v2970 = vpop.f32.mrb[0].mxu0
        %v2971 = vadd.f32 %v1631, %v2970
        %v2972 = vpop.f32.mrb[0].mxu0
        %v2973 = vadd.f32 %v1627, %v2972
        %v2974 = vpop.f32.mrb[0].mxu0
        %v2975 = vadd.f32 %v1631, %v2974
        %2976 = vmatprep.mubr.bf16.mxu0 %v1319
        %2977 = vmatmul.mubr.bf16.gmra.mrb[0].mxu0 %v1318
        %v2978 = vpop.f32.mrb[0].mxu0
        %v2979 = vadd.f32 %v1627, %v2978
        %v2980 = vpop.f32.mrb[0].mxu0
        %v2981 = vadd.f32 %v1631, %v2980
        %v2982 = vpop.f32.mrb[0].mxu0
        %v2983 = vadd.f32 %v1627, %v2982
        %v2984 = vpop.f32.mrb[0].mxu0
        %v2985 = vadd.f32 %v1631, %v2984
        %2986 = vmatprep.mubr.bf16.mxu0 %v1327
        %2987 = vmatmul.mubr.bf16.gmra.mrb[0].mxu0 %v1326
        %v2988 = vpop.f32.mrb[0].mxu0
        %v2989 = vadd.f32 %v1627, %v2988
        %v2990 = vpop.f32.mrb[0].mxu0
        %v2991 = vadd.f32 %v1631, %v2990
        %v2992 = vpop.f32.mrb[0].mxu0
        %v2993 = vadd.f32 %v1627, %v2992
        %v2994 = vpop.f32.mrb[0].mxu0
        %v2995 = vadd.f32 %v1631, %v2994
        %2996 = vmatprep.mubr.bf16.mxu0 %v1335
        %2997 = vmatmul.mubr.bf16.gmra.mrb[0].mxu0 %v1334
        %v2998 = vpop.f32.mrb[0].mxu0
        %v2999 = vadd.f32 %v1627, %v2998
        %v3000 = vpop.f32.mrb[0].mxu0
        %v3001 = vadd.f32 %v1631, %v3000
        %v3002 = vpop.f32.mrb[0].mxu0
        %v3003 = vadd.f32 %v1627, %v3002
        %v3004 = vpop.f32.mrb[0].mxu0
        %v3005 = vadd.f32 %v1631, %v3004
        %3006 = vmatprep.mubr.bf16.mxu0 %v1343
        %3007 = vmatmul.mubr.bf16.gmra.mrb[0].mxu0 %v1342
        %v3008 = vpop.f32.mrb[0].mxu0
        %v3009 = vadd.f32 %v1627, %v3008
        %v3010 = vpop.f32.mrb[0].mxu0
        %v3011 = vadd.f32 %v1631, %v3010
        %v3012 = vpop.f32.mrb[0].mxu0
        %v3013 = vadd.f32 %v1627, %v3012
        %v3014 = vpop.f32.mrb[0].mxu0
        %v3015 = vadd.f32 %v1631, %v3014
        %3016 = vmatprep.mubr.bf16.mxu0 %v1351
        %3017 = vmatmul.mubr.bf16.gmra.mrb[0].mxu0 %v1350
        %v3018 = vpop.f32.mrb[0].mxu0
        %v3019 = vadd.f32 %v1627, %v3018
        %v3020 = vpop.f32.mrb[0].mxu0
        %v3021 = vadd.f32 %v1631, %v3020
        %v3022 = vpop.f32.mrb[0].mxu0
        %v3023 = vadd.f32 %v1627, %v3022
        %v3024 = vpop.f32.mrb[0].mxu0
        %v3025 = vadd.f32 %v1631, %v3024
        %3026 = vmatprep.mubr.bf16.mxu0 %v1359
        %3027 = vmatmul.mubr.bf16.gmra.mrb[0].mxu0 %v1358
        %v3028 = vpop.f32.mrb[0].mxu0
        %v3029 = vadd.f32 %v1627, %v3028
        %v3030 = vpop.f32.mrb[0].mxu0
        %v3031 = vadd.f32 %v1631, %v3030
        %v3032 = vpop.f32.mrb[0].mxu0
        %v3033 = vadd.f32 %v1627, %v3032
        %v3034 = vpop.f32.mrb[0].mxu0
        %v3035 = vadd.f32 %v1631, %v3034
        %3036 = vdwg.mxu0
        %3037 = vmatprep.subr.bf16.mxu0 %v2477
        %3038 = vmatpush1.bf16.msra.mxu0 %v2476
        %3039 = vmatprep.subr.bf16.mxu0 %v2481
        %3040 = vmatpush1.bf16.msra.mxu0 %v2480
        %3041 = vmatprep.subr.bf16.mxu0 %v2485
        %3042 = vmatpush1.bf16.msra.mxu0 %v2484
        %3043 = vmatprep.subr.bf16.mxu0 %v2489
        %3044 = vmatpush1.bf16.msra.mxu0 %v2488
        %3045 = vmatprep.subr.bf16.mxu0 %v2493
        %3046 = vmatpush1.bf16.msra.mxu0 %v2492
        %3047 = vmatprep.subr.bf16.mxu0 %v2497
        %3048 = vmatpush1.bf16.msra.mxu0 %v2496
        %3049 = vmatprep.subr.bf16.mxu0 %v2501
        %3050 = vmatpush1.bf16.msra.mxu0 %v2500
        %3051 = vmatprep.subr.bf16.mxu0 %v2505
        %3052 = vmatpush1.bf16.msra.mxu0 %v2504
        %3053 = vmatprep.subr.bf16.mxu0 %v2509
        %3054 = vmatpush1.bf16.msra.mxu0 %v2508
        %3055 = vmatprep.subr.bf16.mxu0 %v2513
        %3056 = vmatpush1.bf16.msra.mxu0 %v2512
        %3057 = vmatprep.subr.bf16.mxu0 %v2517
        %3058 = vmatpush1.bf16.msra.mxu0 %v2516
        %3059 = vmatprep.subr.bf16.mxu0 %v2521
        %3060 = vmatpush1.bf16.msra.mxu0 %v2520
        %3061 = vmatprep.subr.bf16.mxu0 %v2525
        %3062 = vmatpush1.bf16.msra.mxu0 %v2524
        %3063 = vmatprep.subr.bf16.mxu0 %v2529
        %3064 = vmatpush1.bf16.msra.mxu0 %v2528
        %3065 = vmatprep.subr.bf16.mxu0 %v2533
        %3066 = vmatpush1.bf16.msra.mxu0 %v2532
        %3067 = vmatprep.subr.bf16.mxu0 %v2537
        %3068 = vmatpush1.bf16.msra.mxu0 %v2536
        %3069 = vmatprep.mubr.bf16.mxu0 %v1305
        %3070 = vmatmul.mubr.bf16.gmra.mrb[0].mxu0 %v1304
        %v3071 = vpop.f32.mrb[0].mxu0
        %v3072 = vadd.f32 %v2959, %v3071
        %v3073 = vpop.f32.mrb[0].mxu0
        %v3074 = vadd.f32 %v2961, %v3073
        %v3075 = vpop.f32.mrb[0].mxu0
        %v3076 = vadd.f32 %v2963, %v3075
        %v3077 = vpop.f32.mrb[0].mxu0
        %v3078 = vadd.f32 %v2965, %v3077
        %3079 = vmatprep.mubr.bf16.mxu0 %v1313
        %3080 = vmatmul.mubr.bf16.gmra.mrb[0].mxu0 %v1312
        %v3081 = vpop.f32.mrb[0].mxu0
        %v3082 = vadd.f32 %v2969, %v3081
        %v3083 = vpop.f32.mrb[0].mxu0
        %v3084 = vadd.f32 %v2971, %v3083
        %v3085 = vpop.f32.mrb[0].mxu0
        %v3086 = vadd.f32 %v2973, %v3085
        %v3087 = vpop.f32.mrb[0].mxu0
        %v3088 = vadd.f32 %v2975, %v3087
        %3089 = vmatprep.mubr.bf16.mxu0 %v1321
        %3090 = vmatmul.mubr.bf16.gmra.mrb[0].mxu0 %v1320
        %v3091 = vpop.f32.mrb[0].mxu0
        %v3092 = vadd.f32 %v2979, %v3091
        %v3093 = vpop.f32.mrb[0].mxu0
        %v3094 = vadd.f32 %v2981, %v3093
        %v3095 = vpop.f32.mrb[0].mxu0
        %v3096 = vadd.f32 %v2983, %v3095
        %v3097 = vpop.f32.mrb[0].mxu0
        %v3098 = vadd.f32 %v2985, %v3097
        %3099 = vmatprep.mubr.bf16.mxu0 %v1329
        %3100 = vmatmul.mubr.bf16.gmra.mrb[0].mxu0 %v1328
        %v3101 = vpop.f32.mrb[0].mxu0
        %v3102 = vadd.f32 %v2989, %v3101
        %v3103 = vpop.f32.mrb[0].mxu0
        %v3104 = vadd.f32 %v2991, %v3103
        %v3105 = vpop.f32.mrb[0].mxu0
        %v3106 = vadd.f32 %v2993, %v3105
        %v3107 = vpop.f32.mrb[0].mxu0
        %v3108 = vadd.f32 %v2995, %v3107
        %3109 = vmatprep.mubr.bf16.mxu0 %v1337
        %3110 = vmatmul.mubr.bf16.gmra.mrb[0].mxu0 %v1336
        %v3111 = vpop.f32.mrb[0].mxu0
        %v3112 = vadd.f32 %v2999, %v3111
        %v3113 = vpop.f32.mrb[0].mxu0
        %v3114 = vadd.f32 %v3001, %v3113
        %v3115 = vpop.f32.mrb[0].mxu0
        %v3116 = vadd.f32 %v3003, %v3115
        %v3117 = vpop.f32.mrb[0].mxu0
        %v3118 = vadd.f32 %v3005, %v3117
        %3119 = vmatprep.mubr.bf16.mxu0 %v1345
        %3120 = vmatmul.mubr.bf16.gmra.mrb[0].mxu0 %v1344
        %v3121 = vpop.f32.mrb[0].mxu0
        %v3122 = vadd.f32 %v3009, %v3121
        %v3123 = vpop.f32.mrb[0].mxu0
        %v3124 = vadd.f32 %v3011, %v3123
        %v3125 = vpop.f32.mrb[0].mxu0
        %v3126 = vadd.f32 %v3013, %v3125
        %v3127 = vpop.f32.mrb[0].mxu0
        %v3128 = vadd.f32 %v3015, %v3127
        %3129 = vmatprep.mubr.bf16.mxu0 %v1353
        %3130 = vmatmul.mubr.bf16.gmra.mrb[0].mxu0 %v1352
        %v3131 = vpop.f32.mrb[0].mxu0
        %v3132 = vadd.f32 %v3019, %v3131
        %v3133 = vpop.f32.mrb[0].mxu0
        %v3134 = vadd.f32 %v3021, %v3133
        %v3135 = vpop.f32.mrb[0].mxu0
        %v3136 = vadd.f32 %v3023, %v3135
        %v3137 = vpop.f32.mrb[0].mxu0
        %v3138 = vadd.f32 %v3025, %v3137
        %3139 = vmatprep.mubr.bf16.mxu0 %v1361
        %3140 = vmatmul.mubr.bf16.gmra.mrb[0].mxu0 %v1360
        %v3141 = vpop.f32.mrb[0].mxu0
        %v3142 = vadd.f32 %v3029, %v3141
        %v3143 = vpop.f32.mrb[0].mxu0
        %v3144 = vadd.f32 %v3031, %v3143
        %v3145 = vpop.f32.mrb[0].mxu0
        %v3146 = vadd.f32 %v3033, %v3145
        %v3147 = vpop.f32.mrb[0].mxu0
        %v3148 = vadd.f32 %v3035, %v3147
        %3149 = vdwg.mxu0
        %3150 = vmatprep.subr.bf16.mxu0 %v2541
        %3151 = vmatpush1.bf16.msra.mxu0 %v2540
        %3152 = vmatprep.subr.bf16.mxu0 %v2545
        %3153 = vmatpush1.bf16.msra.mxu0 %v2544
        %3154 = vmatprep.subr.bf16.mxu0 %v2549
        %3155 = vmatpush1.bf16.msra.mxu0 %v2548
        %3156 = vmatprep.subr.bf16.mxu0 %v2553
        %3157 = vmatpush1.bf16.msra.mxu0 %v2552
        %3158 = vmatprep.subr.bf16.mxu0 %v2557
        %3159 = vmatpush1.bf16.msra.mxu0 %v2556
        %3160 = vmatprep.subr.bf16.mxu0 %v2561
        %3161 = vmatpush1.bf16.msra.mxu0 %v2560
        %3162 = vmatprep.subr.bf16.mxu0 %v2565
        %3163 = vmatpush1.bf16.msra.mxu0 %v2564
        %3164 = vmatprep.subr.bf16.mxu0 %v2569
        %3165 = vmatpush1.bf16.msra.mxu0 %v2568
        %3166 = vmatprep.subr.bf16.mxu0 %v2573
        %3167 = vmatpush1.bf16.msra.mxu0 %v2572
        %3168 = vmatprep.subr.bf16.mxu0 %v2577
        %3169 = vmatpush1.bf16.msra.mxu0 %v2576
        %3170 = vmatprep.subr.bf16.mxu0 %v2581
        %3171 = vmatpush1.bf16.msra.mxu0 %v2580
        %3172 = vmatprep.subr.bf16.mxu0 %v2585
        %3173 = vmatpush1.bf16.msra.mxu0 %v2584
        %3174 = vmatprep.subr.bf16.mxu0 %v2589
        %3175 = vmatpush1.bf16.msra.mxu0 %v2588
        %3176 = vmatprep.subr.bf16.mxu0 %v2593
        %3177 = vmatpush1.bf16.msra.mxu0 %v2592
        %3178 = vmatprep.subr.bf16.mxu0 %v2597
        %3179 = vmatpush1.bf16.msra.mxu0 %v2596
        %3180 = vmatprep.subr.bf16.mxu0 %v2601
        %3181 = vmatpush1.bf16.msra.mxu0 %v2600
        %3182 = vmatprep.mubr.bf16.mxu0 %v1307
        %3183 = vmatmul.mubr.bf16.gmra.mrb[0].mxu0 %v1306
        %v3184 = vpop.f32.mrb[0].mxu0
        %v3185 = vadd.f32 %v3072, %v3184
        %v3186 = vpop.f32.mrb[0].mxu0
        %v3187 = vadd.f32 %v3074, %v3186
        %v3188 = vpop.f32.mrb[0].mxu0
        %v3189 = vadd.f32 %v3076, %v3188
        %v3190 = vpop.f32.mrb[0].mxu0
        %v3191 = vadd.f32 %v3078, %v3190
        %3192 = vmatprep.mubr.bf16.mxu0 %v1315
        %3193 = vmatmul.mubr.bf16.gmra.mrb[0].mxu0 %v1314
        %v3194 = vpop.f32.mrb[0].mxu0
        %v3195 = vadd.f32 %v3082, %v3194
        %v3196 = vpop.f32.mrb[0].mxu0
        %v3197 = vadd.f32 %v3084, %v3196
        %v3198 = vpop.f32.mrb[0].mxu0
        %v3199 = vadd.f32 %v3086, %v3198
        %v3200 = vpop.f32.mrb[0].mxu0
        %v3201 = vadd.f32 %v3088, %v3200
        %3202 = vmatprep.mubr.bf16.mxu0 %v1323
        %3203 = vmatmul.mubr.bf16.gmra.mrb[0].mxu0 %v1322
        %v3204 = vpop.f32.mrb[0].mxu0
        %v3205 = vadd.f32 %v3092, %v3204
        %v3206 = vpop.f32.mrb[0].mxu0
        %v3207 = vadd.f32 %v3094, %v3206
        %v3208 = vpop.f32.mrb[0].mxu0
        %v3209 = vadd.f32 %v3096, %v3208
        %v3210 = vpop.f32.mrb[0].mxu0
        %v3211 = vadd.f32 %v3098, %v3210
        %3212 = vmatprep.mubr.bf16.mxu0 %v1331
        %3213 = vmatmul.mubr.bf16.gmra.mrb[0].mxu0 %v1330
        %v3214 = vpop.f32.mrb[0].mxu0
        %v3215 = vadd.f32 %v3102, %v3214
        %v3216 = vpop.f32.mrb[0].mxu0
        %v3217 = vadd.f32 %v3104, %v3216
        %v3218 = vpop.f32.mrb[0].mxu0
        %v3219 = vadd.f32 %v3106, %v3218
        %v3220 = vpop.f32.mrb[0].mxu0
        %v3221 = vadd.f32 %v3108, %v3220
        %3222 = vmatprep.mubr.bf16.mxu0 %v1339
        %3223 = vmatmul.mubr.bf16.gmra.mrb[0].mxu0 %v1338
        %v3224 = vpop.f32.mrb[0].mxu0
        %v3225 = vadd.f32 %v3112, %v3224
        %v3226 = vpop.f32.mrb[0].mxu0
        %v3227 = vadd.f32 %v3114, %v3226
        %v3228 = vpop.f32.mrb[0].mxu0
        %v3229 = vadd.f32 %v3116, %v3228
        %v3230 = vpop.f32.mrb[0].mxu0
        %v3231 = vadd.f32 %v3118, %v3230
        %3232 = vmatprep.mubr.bf16.mxu0 %v1347
        %3233 = vmatmul.mubr.bf16.gmra.mrb[0].mxu0 %v1346
        %v3234 = vpop.f32.mrb[0].mxu0
        %v3235 = vadd.f32 %v3122, %v3234
        %v3236 = vpop.f32.mrb[0].mxu0
        %v3237 = vadd.f32 %v3124, %v3236
        %v3238 = vpop.f32.mrb[0].mxu0
        %v3239 = vadd.f32 %v3126, %v3238
        %v3240 = vpop.f32.mrb[0].mxu0
        %v3241 = vadd.f32 %v3128, %v3240
        %3242 = vmatprep.mubr.bf16.mxu0 %v1355
        %3243 = vmatmul.mubr.bf16.gmra.mrb[0].mxu0 %v1354
        %v3244 = vpop.f32.mrb[0].mxu0
        %v3245 = vadd.f32 %v3132, %v3244
        %v3246 = vpop.f32.mrb[0].mxu0
        %v3247 = vadd.f32 %v3134, %v3246
        %v3248 = vpop.f32.mrb[0].mxu0
        %v3249 = vadd.f32 %v3136, %v3248
        %v3250 = vpop.f32.mrb[0].mxu0
        %v3251 = vadd.f32 %v3138, %v3250
        %3252 = vmatprep.mubr.bf16.mxu0 %v1363
        %3253 = vmatmul.mubr.bf16.gmra.mrb[0].mxu0 %v1362
        %v3254 = vpop.f32.mrb[0].mxu0
        %v3255 = vadd.f32 %v3142, %v3254
        %v3256 = vpop.f32.mrb[0].mxu0
        %v3257 = vadd.f32 %v3144, %v3256
        %v3258 = vpop.f32.mrb[0].mxu0
        %v3259 = vadd.f32 %v3146, %v3258
        %v3260 = vpop.f32.mrb[0].mxu0
        %v3261 = vadd.f32 %v3148, %v3260
        %3262 = vdwg.mxu0
        %3263 = vmatprep.subr.bf16.mxu0 %v2605
        %3264 = vmatpush1.bf16.msra.mxu0 %v2604
        %3265 = vmatprep.subr.bf16.mxu0 %v2609
        %3266 = vmatpush1.bf16.msra.mxu0 %v2608
        %3267 = vmatprep.subr.bf16.mxu0 %v2613
        %3268 = vmatpush1.bf16.msra.mxu0 %v2612
        %3269 = vmatprep.subr.bf16.mxu0 %v2617
        %3270 = vmatpush1.bf16.msra.mxu0 %v2616
        %3271 = vmatprep.subr.bf16.mxu0 %v2621
        %3272 = vmatpush1.bf16.msra.mxu0 %v2620
        %3273 = vmatprep.subr.bf16.mxu0 %v2625
        %3274 = vmatpush1.bf16.msra.mxu0 %v2624
        %3275 = vmatprep.subr.bf16.mxu0 %v2629
        %3276 = vmatpush1.bf16.msra.mxu0 %v2628
        %3277 = vmatprep.subr.bf16.mxu0 %v2633
        %3278 = vmatpush1.bf16.msra.mxu0 %v2632
        %3279 = vmatprep.subr.bf16.mxu0 %v2637
        %3280 = vmatpush1.bf16.msra.mxu0 %v2636
        %3281 = vmatprep.subr.bf16.mxu0 %v2641
        %3282 = vmatpush1.bf16.msra.mxu0 %v2640
        %3283 = vmatprep.subr.bf16.mxu0 %v2645
        %3284 = vmatpush1.bf16.msra.mxu0 %v2644
        %3285 = vmatprep.subr.bf16.mxu0 %v2649
        %3286 = vmatpush1.bf16.msra.mxu0 %v2648
        %3287 = vmatprep.subr.bf16.mxu0 %v2653
        %3288 = vmatpush1.bf16.msra.mxu0 %v2652
        %3289 = vmatprep.subr.bf16.mxu0 %v2657
        %3290 = vmatpush1.bf16.msra.mxu0 %v2656
        %3291 = vmatprep.subr.bf16.mxu0 %v2661
        %3292 = vmatpush1.bf16.msra.mxu0 %v2660
        %3293 = vmatprep.subr.bf16.mxu0 %v2665
        %3294 = vmatpush1.bf16.msra.mxu0 %v2664
        %3295 = vmatprep.mubr.bf16.mxu0 %v1309
        %3296 = vmatmul.mubr.bf16.gmra.mrb[0].mxu0 %v1308
        %v3297 = vpop.f32.mrb[0].mxu0
        %v3298 = vadd.f32 %v3185, %v3297
        %v3299 = vpop.f32.mrb[0].mxu0
        %v3300 = vadd.f32 %v3187, %v3299
        %v3301 = vpop.f32.mrb[0].mxu0
        %v3302 = vadd.f32 %v3189, %v3301
        %v3303 = vpop.f32.mrb[0].mxu0
        %v3304 = vadd.f32 %v3191, %v3303
        %3305 = vmatprep.mubr.bf16.mxu0 %v1317
        %3306 = vmatmul.mubr.bf16.gmra.mrb[0].mxu0 %v1316
        %v3307 = vpop.f32.mrb[0].mxu0
        %v3308 = vadd.f32 %v3195, %v3307
        %v3309 = vpop.f32.mrb[0].mxu0
        %v3310 = vadd.f32 %v3197, %v3309
        %v3311 = vpop.f32.mrb[0].mxu0
        %v3312 = vadd.f32 %v3199, %v3311
        %v3313 = vpop.f32.mrb[0].mxu0
        %v3314 = vadd.f32 %v3201, %v3313
        %3315 = vmatprep.mubr.bf16.mxu0 %v1325
        %3316 = vmatmul.mubr.bf16.gmra.mrb[0].mxu0 %v1324
        %v3317 = vpop.f32.mrb[0].mxu0
        %v3318 = vadd.f32 %v3205, %v3317
        %v3319 = vpop.f32.mrb[0].mxu0
        %v3320 = vadd.f32 %v3207, %v3319
        %v3321 = vpop.f32.mrb[0].mxu0
        %v3322 = vadd.f32 %v3209, %v3321
        %v3323 = vpop.f32.mrb[0].mxu0
        %v3324 = vadd.f32 %v3211, %v3323
        %3325 = vmatprep.mubr.bf16.mxu0 %v1333
        %3326 = vmatmul.mubr.bf16.gmra.mrb[0].mxu0 %v1332
        %v3327 = vpop.f32.mrb[0].mxu0
        %v3328 = vadd.f32 %v3215, %v3327
        %v3329 = vpop.f32.mrb[0].mxu0
        %v3330 = vadd.f32 %v3217, %v3329
        %v3331 = vpop.f32.mrb[0].mxu0
        %v3332 = vadd.f32 %v3219, %v3331
        %v3333 = vpop.f32.mrb[0].mxu0
        %v3334 = vadd.f32 %v3221, %v3333
        %3335 = vmatprep.mubr.bf16.mxu0 %v1341
        %3336 = vmatmul.mubr.bf16.gmra.mrb[0].mxu0 %v1340
        %v3337 = vpop.f32.mrb[0].mxu0
        %v3338 = vadd.f32 %v3225, %v3337
        %v3339 = vpop.f32.mrb[0].mxu0
        %v3340 = vadd.f32 %v3227, %v3339
        %v3341 = vpop.f32.mrb[0].mxu0
        %v3342 = vadd.f32 %v3229, %v3341
        %v3343 = vpop.f32.mrb[0].mxu0
        %v3344 = vadd.f32 %v3231, %v3343
        %3345 = vmatprep.mubr.bf16.mxu0 %v1349
        %3346 = vmatmul.mubr.bf16.gmra.mrb[0].mxu0 %v1348
        %v3347 = vpop.f32.mrb[0].mxu0
        %v3348 = vadd.f32 %v3235, %v3347
        %v3349 = vpop.f32.mrb[0].mxu0
        %v3350 = vadd.f32 %v3237, %v3349
        %v3351 = vpop.f32.mrb[0].mxu0
        %v3352 = vadd.f32 %v3239, %v3351
        %v3353 = vpop.f32.mrb[0].mxu0
        %v3354 = vadd.f32 %v3241, %v3353
        %3355 = vmatprep.mubr.bf16.mxu0 %v1357
        %3356 = vmatmul.mubr.bf16.gmra.mrb[0].mxu0 %v1356
        %v3357 = vpop.f32.mrb[0].mxu0
        %v3358 = vadd.f32 %v3245, %v3357
        %v3359 = vpop.f32.mrb[0].mxu0
        %v3360 = vadd.f32 %v3247, %v3359
        %v3361 = vpop.f32.mrb[0].mxu0
        %v3362 = vadd.f32 %v3249, %v3361
        %v3363 = vpop.f32.mrb[0].mxu0
        %v3364 = vadd.f32 %v3251, %v3363
        %3365 = vmatprep.mubr.bf16.mxu0 %v1365
        %3366 = vmatmul.mubr.bf16.gmra.mrb[0].mxu0 %v1364
        %v3367 = vpop.f32.mrb[0].mxu0
        %v3368 = vadd.f32 %v3255, %v3367
        %v3369 = vpop.f32.mrb[0].mxu0
        %v3370 = vadd.f32 %v3257, %v3369
        %v3371 = vpop.f32.mrb[0].mxu0
        %v3372 = vadd.f32 %v3259, %v3371
        %v3373 = vpop.f32.mrb[0].mxu0
        %v3374 = vadd.f32 %v3261, %v3373
        %3375 = vdwg.mxu0
        %3376 = vmatprep.subr.bf16.mxu0 %v2415
        %3377 = vmatpush1.bf16.msra.mxu0 %v2414
        %3378 = vmatprep.subr.bf16.mxu0 %v2419
        %3379 = vmatpush1.bf16.msra.mxu0 %v2418
        %3380 = vmatprep.subr.bf16.mxu0 %v2423
        %3381 = vmatpush1.bf16.msra.mxu0 %v2422
        %3382 = vmatprep.subr.bf16.mxu0 %v2427
        %3383 = vmatpush1.bf16.msra.mxu0 %v2426
        %3384 = vmatprep.subr.bf16.mxu0 %v2431
        %3385 = vmatpush1.bf16.msra.mxu0 %v2430
        %3386 = vmatprep.subr.bf16.mxu0 %v2435
        %3387 = vmatpush1.bf16.msra.mxu0 %v2434
        %3388 = vmatprep.subr.bf16.mxu0 %v2439
        %3389 = vmatpush1.bf16.msra.mxu0 %v2438
        %3390 = vmatprep.subr.bf16.mxu0 %v2443
        %3391 = vmatpush1.bf16.msra.mxu0 %v2442
        %3392 = vmatprep.subr.bf16.mxu0 %v2447
        %3393 = vmatpush1.bf16.msra.mxu0 %v2446
        %3394 = vmatprep.subr.bf16.mxu0 %v2451
        %3395 = vmatpush1.bf16.msra.mxu0 %v2450
        %3396 = vmatprep.subr.bf16.mxu0 %v2455
        %3397 = vmatpush1.bf16.msra.mxu0 %v2454
        %3398 = vmatprep.subr.bf16.mxu0 %v2459
        %3399 = vmatpush1.bf16.msra.mxu0 %v2458
        %3400 = vmatprep.subr.bf16.mxu0 %v2463
        %3401 = vmatpush1.bf16.msra.mxu0 %v2462
        %3402 = vmatprep.subr.bf16.mxu0 %v2467
        %3403 = vmatpush1.bf16.msra.mxu0 %v2466
        %3404 = vmatprep.subr.bf16.mxu0 %v2471
        %3405 = vmatpush1.bf16.msra.mxu0 %v2470
        %3406 = vmatprep.subr.bf16.mxu0 %v2475
        %3407 = vmatpush1.bf16.msra.mxu0 %v2474
        %3408 = vmatprep.mubr.bf16.mxu0 %v1303
        %3409 = vmatmul.mubr.bf16.gmra.mrb[0].mxu0 %v1302
        %v3410 = vpop.f32.mrb[0].mxu0
        %v3411 = vadd.f32 %v1635, %v3410
        %v3412 = vpop.f32.mrb[0].mxu0
        %v3413 = vadd.f32 %v1639, %v3412
        %v3414 = vpop.f32.mrb[0].mxu0
        %v3415 = vadd.f32 %v1635, %v3414
        %v3416 = vpop.f32.mrb[0].mxu0
        %v3417 = vadd.f32 %v1639, %v3416
        %3418 = vmatprep.mubr.bf16.mxu0 %v1311
        %3419 = vmatmul.mubr.bf16.gmra.mrb[0].mxu0 %v1310
        %v3420 = vpop.f32.mrb[0].mxu0
        %v3421 = vadd.f32 %v1635, %v3420
        %v3422 = vpop.f32.mrb[0].mxu0
        %v3423 = vadd.f32 %v1639, %v3422
        %v3424 = vpop.f32.mrb[0].mxu0
        %v3425 = vadd.f32 %v1635, %v3424
        %v3426 = vpop.f32.mrb[0].mxu0
        %v3427 = vadd.f32 %v1639, %v3426
        %3428 = vmatprep.mubr.bf16.mxu0 %v1319
        %3429 = vmatmul.mubr.bf16.gmra.mrb[0].mxu0 %v1318
        %v3430 = vpop.f32.mrb[0].mxu0
        %v3431 = vadd.f32 %v1635, %v3430
        %v3432 = vpop.f32.mrb[0].mxu0
        %v3433 = vadd.f32 %v1639, %v3432
        %v3434 = vpop.f32.mrb[0].mxu0
        %v3435 = vadd.f32 %v1635, %v3434
        %v3436 = vpop.f32.mrb[0].mxu0
        %v3437 = vadd.f32 %v1639, %v3436
        %3438 = vmatprep.mubr.bf16.mxu0 %v1327
        %3439 = vmatmul.mubr.bf16.gmra.mrb[0].mxu0 %v1326
        %v3440 = vpop.f32.mrb[0].mxu0
        %v3441 = vadd.f32 %v1635, %v3440
        %v3442 = vpop.f32.mrb[0].mxu0
        %v3443 = vadd.f32 %v1639, %v3442
        %v3444 = vpop.f32.mrb[0].mxu0
        %v3445 = vadd.f32 %v1635, %v3444
        %v3446 = vpop.f32.mrb[0].mxu0
        %v3447 = vadd.f32 %v1639, %v3446
        %3448 = vmatprep.mubr.bf16.mxu0 %v1335
        %3449 = vmatmul.mubr.bf16.gmra.mrb[0].mxu0 %v1334
        %v3450 = vpop.f32.mrb[0].mxu0
        %v3451 = vadd.f32 %v1635, %v3450
        %v3452 = vpop.f32.mrb[0].mxu0
        %v3453 = vadd.f32 %v1639, %v3452
        %v3454 = vpop.f32.mrb[0].mxu0
        %v3455 = vadd.f32 %v1635, %v3454
        %v3456 = vpop.f32.mrb[0].mxu0
        %v3457 = vadd.f32 %v1639, %v3456
        %3458 = vmatprep.mubr.bf16.mxu0 %v1343
        %3459 = vmatmul.mubr.bf16.gmra.mrb[0].mxu0 %v1342
        %v3460 = vpop.f32.mrb[0].mxu0
        %v3461 = vadd.f32 %v1635, %v3460
        %v3462 = vpop.f32.mrb[0].mxu0
        %v3463 = vadd.f32 %v1639, %v3462
        %v3464 = vpop.f32.mrb[0].mxu0
        %v3465 = vadd.f32 %v1635, %v3464
        %v3466 = vpop.f32.mrb[0].mxu0
        %v3467 = vadd.f32 %v1639, %v3466
        %3468 = vmatprep.mubr.bf16.mxu0 %v1351
        %3469 = vmatmul.mubr.bf16.gmra.mrb[0].mxu0 %v1350
        %v3470 = vpop.f32.mrb[0].mxu0
        %v3471 = vadd.f32 %v1635, %v3470
        %v3472 = vpop.f32.mrb[0].mxu0
        %v3473 = vadd.f32 %v1639, %v3472
        %v3474 = vpop.f32.mrb[0].mxu0
        %v3475 = vadd.f32 %v1635, %v3474
        %v3476 = vpop.f32.mrb[0].mxu0
        %v3477 = vadd.f32 %v1639, %v3476
        %3478 = vmatprep.mubr.bf16.mxu0 %v1359
        %3479 = vmatmul.mubr.bf16.gmra.mrb[0].mxu0 %v1358
        %v3480 = vpop.f32.mrb[0].mxu0
        %v3481 = vadd.f32 %v1635, %v3480
        %v3482 = vpop.f32.mrb[0].mxu0
        %v3483 = vadd.f32 %v1639, %v3482
        %v3484 = vpop.f32.mrb[0].mxu0
        %v3485 = vadd.f32 %v1635, %v3484
        %v3486 = vpop.f32.mrb[0].mxu0
        %v3487 = vadd.f32 %v1639, %v3486
        %3488 = vdwg.mxu0
        %3489 = vmatprep.subr.bf16.mxu0 %v2479
        %3490 = vmatpush1.bf16.msra.mxu0 %v2478
        %3491 = vmatprep.subr.bf16.mxu0 %v2483
        %3492 = vmatpush1.bf16.msra.mxu0 %v2482
        %3493 = vmatprep.subr.bf16.mxu0 %v2487
        %3494 = vmatpush1.bf16.msra.mxu0 %v2486
        %3495 = vmatprep.subr.bf16.mxu0 %v2491
        %3496 = vmatpush1.bf16.msra.mxu0 %v2490
        %3497 = vmatprep.subr.bf16.mxu0 %v2495
        %3498 = vmatpush1.bf16.msra.mxu0 %v2494
        %3499 = vmatprep.subr.bf16.mxu0 %v2499
        %3500 = vmatpush1.bf16.msra.mxu0 %v2498
        %3501 = vmatprep.subr.bf16.mxu0 %v2503
        %3502 = vmatpush1.bf16.msra.mxu0 %v2502
        %3503 = vmatprep.subr.bf16.mxu0 %v2507
        %3504 = vmatpush1.bf16.msra.mxu0 %v2506
        %3505 = vmatprep.subr.bf16.mxu0 %v2511
        %3506 = vmatpush1.bf16.msra.mxu0 %v2510
        %3507 = vmatprep.subr.bf16.mxu0 %v2515
        %3508 = vmatpush1.bf16.msra.mxu0 %v2514
        %3509 = vmatprep.subr.bf16.mxu0 %v2519
        %3510 = vmatpush1.bf16.msra.mxu0 %v2518
        %3511 = vmatprep.subr.bf16.mxu0 %v2523
        %3512 = vmatpush1.bf16.msra.mxu0 %v2522
        %3513 = vmatprep.subr.bf16.mxu0 %v2527
        %3514 = vmatpush1.bf16.msra.mxu0 %v2526
        %3515 = vmatprep.subr.bf16.mxu0 %v2531
        %3516 = vmatpush1.bf16.msra.mxu0 %v2530
        %3517 = vmatprep.subr.bf16.mxu0 %v2535
        %3518 = vmatpush1.bf16.msra.mxu0 %v2534
        %3519 = vmatprep.subr.bf16.mxu0 %v2539
        %3520 = vmatpush1.bf16.msra.mxu0 %v2538
        %3521 = vmatprep.mubr.bf16.mxu0 %v1305
        %3522 = vmatmul.mubr.bf16.gmra.mrb[0].mxu0 %v1304
        %v3523 = vpop.f32.mrb[0].mxu0
        %v3524 = vadd.f32 %v3411, %v3523
        %v3525 = vpop.f32.mrb[0].mxu0
        %v3526 = vadd.f32 %v3413, %v3525
        %v3527 = vpop.f32.mrb[0].mxu0
        %v3528 = vadd.f32 %v3415, %v3527
        %v3529 = vpop.f32.mrb[0].mxu0
        %v3530 = vadd.f32 %v3417, %v3529
        %3531 = vmatprep.mubr.bf16.mxu0 %v1313
        %3532 = vmatmul.mubr.bf16.gmra.mrb[0].mxu0 %v1312
        %v3533 = vpop.f32.mrb[0].mxu0
        %v3534 = vadd.f32 %v3421, %v3533
        %v3535 = vpop.f32.mrb[0].mxu0
        %v3536 = vadd.f32 %v3423, %v3535
        %v3537 = vpop.f32.mrb[0].mxu0
        %v3538 = vadd.f32 %v3425, %v3537
        %v3539 = vpop.f32.mrb[0].mxu0
        %v3540 = vadd.f32 %v3427, %v3539
        %3541 = vmatprep.mubr.bf16.mxu0 %v1321
        %3542 = vmatmul.mubr.bf16.gmra.mrb[0].mxu0 %v1320
        %v3543 = vpop.f32.mrb[0].mxu0
        %v3544 = vadd.f32 %v3431, %v3543
        %v3545 = vpop.f32.mrb[0].mxu0
        %v3546 = vadd.f32 %v3433, %v3545
        %v3547 = vpop.f32.mrb[0].mxu0
        %v3548 = vadd.f32 %v3435, %v3547
        %v3549 = vpop.f32.mrb[0].mxu0
        %v3550 = vadd.f32 %v3437, %v3549
        %3551 = vmatprep.mubr.bf16.mxu0 %v1329
        %3552 = vmatmul.mubr.bf16.gmra.mrb[0].mxu0 %v1328
        %v3553 = vpop.f32.mrb[0].mxu0
        %v3554 = vadd.f32 %v3441, %v3553
        %v3555 = vpop.f32.mrb[0].mxu0
        %v3556 = vadd.f32 %v3443, %v3555
        %v3557 = vpop.f32.mrb[0].mxu0
        %v3558 = vadd.f32 %v3445, %v3557
        %v3559 = vpop.f32.mrb[0].mxu0
        %v3560 = vadd.f32 %v3447, %v3559
        %3561 = vmatprep.mubr.bf16.mxu0 %v1337
        %3562 = vmatmul.mubr.bf16.gmra.mrb[0].mxu0 %v1336
        %v3563 = vpop.f32.mrb[0].mxu0
        %v3564 = vadd.f32 %v3451, %v3563
        %v3565 = vpop.f32.mrb[0].mxu0
        %v3566 = vadd.f32 %v3453, %v3565
        %v3567 = vpop.f32.mrb[0].mxu0
        %v3568 = vadd.f32 %v3455, %v3567
        %v3569 = vpop.f32.mrb[0].mxu0
        %v3570 = vadd.f32 %v3457, %v3569
        %3571 = vmatprep.mubr.bf16.mxu0 %v1345
        %3572 = vmatmul.mubr.bf16.gmra.mrb[0].mxu0 %v1344
        %v3573 = vpop.f32.mrb[0].mxu0
        %v3574 = vadd.f32 %v3461, %v3573
        %v3575 = vpop.f32.mrb[0].mxu0
        %v3576 = vadd.f32 %v3463, %v3575
        %v3577 = vpop.f32.mrb[0].mxu0
        %v3578 = vadd.f32 %v3465, %v3577
        %v3579 = vpop.f32.mrb[0].mxu0
        %v3580 = vadd.f32 %v3467, %v3579
        %3581 = vmatprep.mubr.bf16.mxu0 %v1353
        %3582 = vmatmul.mubr.bf16.gmra.mrb[0].mxu0 %v1352
        %v3583 = vpop.f32.mrb[0].mxu0
        %v3584 = vadd.f32 %v3471, %v3583
        %v3585 = vpop.f32.mrb[0].mxu0
        %v3586 = vadd.f32 %v3473, %v3585
        %v3587 = vpop.f32.mrb[0].mxu0
        %v3588 = vadd.f32 %v3475, %v3587
        %v3589 = vpop.f32.mrb[0].mxu0
        %v3590 = vadd.f32 %v3477, %v3589
        %3591 = vmatprep.mubr.bf16.mxu0 %v1361
        %3592 = vmatmul.mubr.bf16.gmra.mrb[0].mxu0 %v1360
        %v3593 = vpop.f32.mrb[0].mxu0
        %v3594 = vadd.f32 %v3481, %v3593
        %v3595 = vpop.f32.mrb[0].mxu0
        %v3596 = vadd.f32 %v3483, %v3595
        %v3597 = vpop.f32.mrb[0].mxu0
        %v3598 = vadd.f32 %v3485, %v3597
        %v3599 = vpop.f32.mrb[0].mxu0
        %v3600 = vadd.f32 %v3487, %v3599
        %3601 = vdwg.mxu0
        %3602 = vmatprep.subr.bf16.mxu0 %v2543
        %3603 = vmatpush1.bf16.msra.mxu0 %v2542
        %3604 = vmatprep.subr.bf16.mxu0 %v2547
        %3605 = vmatpush1.bf16.msra.mxu0 %v2546
        %3606 = vmatprep.subr.bf16.mxu0 %v2551
        %3607 = vmatpush1.bf16.msra.mxu0 %v2550
        %3608 = vmatprep.subr.bf16.mxu0 %v2555
        %3609 = vmatpush1.bf16.msra.mxu0 %v2554
        %3610 = vmatprep.subr.bf16.mxu0 %v2559
        %3611 = vmatpush1.bf16.msra.mxu0 %v2558
        %3612 = vmatprep.subr.bf16.mxu0 %v2563
        %3613 = vmatpush1.bf16.msra.mxu0 %v2562
        %3614 = vmatprep.subr.bf16.mxu0 %v2567
        %3615 = vmatpush1.bf16.msra.mxu0 %v2566
        %3616 = vmatprep.subr.bf16.mxu0 %v2571
        %3617 = vmatpush1.bf16.msra.mxu0 %v2570
        %3618 = vmatprep.subr.bf16.mxu0 %v2575
        %3619 = vmatpush1.bf16.msra.mxu0 %v2574
        %3620 = vmatprep.subr.bf16.mxu0 %v2579
        %3621 = vmatpush1.bf16.msra.mxu0 %v2578
        %3622 = vmatprep.subr.bf16.mxu0 %v2583
        %3623 = vmatpush1.bf16.msra.mxu0 %v2582
        %3624 = vmatprep.subr.bf16.mxu0 %v2587
        %3625 = vmatpush1.bf16.msra.mxu0 %v2586
        %3626 = vmatprep.subr.bf16.mxu0 %v2591
        %3627 = vmatpush1.bf16.msra.mxu0 %v2590
        %3628 = vmatprep.subr.bf16.mxu0 %v2595
        %3629 = vmatpush1.bf16.msra.mxu0 %v2594
        %3630 = vmatprep.subr.bf16.mxu0 %v2599
        %3631 = vmatpush1.bf16.msra.mxu0 %v2598
        %3632 = vmatprep.subr.bf16.mxu0 %v2603
        %3633 = vmatpush1.bf16.msra.mxu0 %v2602
        %3634 = vmatprep.mubr.bf16.mxu0 %v1307
        %3635 = vmatmul.mubr.bf16.gmra.mrb[0].mxu0 %v1306
        %v3636 = vpop.f32.mrb[0].mxu0
        %v3637 = vadd.f32 %v3524, %v3636
        %v3638 = vpop.f32.mrb[0].mxu0
        %v3639 = vadd.f32 %v3526, %v3638
        %v3640 = vpop.f32.mrb[0].mxu0
        %v3641 = vadd.f32 %v3528, %v3640
        %v3642 = vpop.f32.mrb[0].mxu0
        %v3643 = vadd.f32 %v3530, %v3642
        %3644 = vmatprep.mubr.bf16.mxu0 %v1315
        %3645 = vmatmul.mubr.bf16.gmra.mrb[0].mxu0 %v1314
        %v3646 = vpop.f32.mrb[0].mxu0
        %v3647 = vadd.f32 %v3534, %v3646
        %v3648 = vpop.f32.mrb[0].mxu0
        %v3649 = vadd.f32 %v3536, %v3648
        %v3650 = vpop.f32.mrb[0].mxu0
        %v3651 = vadd.f32 %v3538, %v3650
        %v3652 = vpop.f32.mrb[0].mxu0
        %v3653 = vadd.f32 %v3540, %v3652
        %3654 = vmatprep.mubr.bf16.mxu0 %v1323
        %3655 = vmatmul.mubr.bf16.gmra.mrb[0].mxu0 %v1322
        %v3656 = vpop.f32.mrb[0].mxu0
        %v3657 = vadd.f32 %v3544, %v3656
        %v3658 = vpop.f32.mrb[0].mxu0
        %v3659 = vadd.f32 %v3546, %v3658
        %v3660 = vpop.f32.mrb[0].mxu0
        %v3661 = vadd.f32 %v3548, %v3660
        %v3662 = vpop.f32.mrb[0].mxu0
        %v3663 = vadd.f32 %v3550, %v3662
        %3664 = vmatprep.mubr.bf16.mxu0 %v1331
        %3665 = vmatmul.mubr.bf16.gmra.mrb[0].mxu0 %v1330
        %v3666 = vpop.f32.mrb[0].mxu0
        %v3667 = vadd.f32 %v3554, %v3666
        %v3668 = vpop.f32.mrb[0].mxu0
        %v3669 = vadd.f32 %v3556, %v3668
        %v3670 = vpop.f32.mrb[0].mxu0
        %v3671 = vadd.f32 %v3558, %v3670
        %v3672 = vpop.f32.mrb[0].mxu0
        %v3673 = vadd.f32 %v3560, %v3672
        %3674 = vmatprep.mubr.bf16.mxu0 %v1339
        %3675 = vmatmul.mubr.bf16.gmra.mrb[0].mxu0 %v1338
        %v3676 = vpop.f32.mrb[0].mxu0
        %v3677 = vadd.f32 %v3564, %v3676
        %v3678 = vpop.f32.mrb[0].mxu0
        %v3679 = vadd.f32 %v3566, %v3678
        %v3680 = vpop.f32.mrb[0].mxu0
        %v3681 = vadd.f32 %v3568, %v3680
        %v3682 = vpop.f32.mrb[0].mxu0
        %v3683 = vadd.f32 %v3570, %v3682
        %3684 = vmatprep.mubr.bf16.mxu0 %v1347
        %3685 = vmatmul.mubr.bf16.gmra.mrb[0].mxu0 %v1346
        %v3686 = vpop.f32.mrb[0].mxu0
        %v3687 = vadd.f32 %v3574, %v3686
        %v3688 = vpop.f32.mrb[0].mxu0
        %v3689 = vadd.f32 %v3576, %v3688
        %v3690 = vpop.f32.mrb[0].mxu0
        %v3691 = vadd.f32 %v3578, %v3690
        %v3692 = vpop.f32.mrb[0].mxu0
        %v3693 = vadd.f32 %v3580, %v3692
        %3694 = vmatprep.mubr.bf16.mxu0 %v1355
        %3695 = vmatmul.mubr.bf16.gmra.mrb[0].mxu0 %v1354
        %v3696 = vpop.f32.mrb[0].mxu0
        %v3697 = vadd.f32 %v3584, %v3696
        %v3698 = vpop.f32.mrb[0].mxu0
        %v3699 = vadd.f32 %v3586, %v3698
        %v3700 = vpop.f32.mrb[0].mxu0
        %v3701 = vadd.f32 %v3588, %v3700
        %v3702 = vpop.f32.mrb[0].mxu0
        %v3703 = vadd.f32 %v3590, %v3702
        %3704 = vmatprep.mubr.bf16.mxu0 %v1363
        %3705 = vmatmul.mubr.bf16.gmra.mrb[0].mxu0 %v1362
        %v3706 = vpop.f32.mrb[0].mxu0
        %v3707 = vadd.f32 %v3594, %v3706
        %v3708 = vpop.f32.mrb[0].mxu0
        %v3709 = vadd.f32 %v3596, %v3708
        %v3710 = vpop.f32.mrb[0].mxu0
        %v3711 = vadd.f32 %v3598, %v3710
        %v3712 = vpop.f32.mrb[0].mxu0
        %v3713 = vadd.f32 %v3600, %v3712
        %3714 = vdwg.mxu0
        %3715 = vmatprep.subr.bf16.mxu0 %v2607
        %3716 = vmatpush1.bf16.msra.mxu0 %v2606
        %3717 = vmatprep.subr.bf16.mxu0 %v2611
        %3718 = vmatpush1.bf16.msra.mxu0 %v2610
        %3719 = vmatprep.subr.bf16.mxu0 %v2615
        %3720 = vmatpush1.bf16.msra.mxu0 %v2614
        %3721 = vmatprep.subr.bf16.mxu0 %v2619
        %3722 = vmatpush1.bf16.msra.mxu0 %v2618
        %3723 = vmatprep.subr.bf16.mxu0 %v2623
        %3724 = vmatpush1.bf16.msra.mxu0 %v2622
        %3725 = vmatprep.subr.bf16.mxu0 %v2627
        %3726 = vmatpush1.bf16.msra.mxu0 %v2626
        %3727 = vmatprep.subr.bf16.mxu0 %v2631
        %3728 = vmatpush1.bf16.msra.mxu0 %v2630
        %3729 = vmatprep.subr.bf16.mxu0 %v2635
        %3730 = vmatpush1.bf16.msra.mxu0 %v2634
        %3731 = vmatprep.subr.bf16.mxu0 %v2639
        %3732 = vmatpush1.bf16.msra.mxu0 %v2638
        %3733 = vmatprep.subr.bf16.mxu0 %v2643
        %3734 = vmatpush1.bf16.msra.mxu0 %v2642
        %3735 = vmatprep.subr.bf16.mxu0 %v2647
        %3736 = vmatpush1.bf16.msra.mxu0 %v2646
        %3737 = vmatprep.subr.bf16.mxu0 %v2651
        %3738 = vmatpush1.bf16.msra.mxu0 %v2650
        %3739 = vmatprep.subr.bf16.mxu0 %v2655
        %3740 = vmatpush1.bf16.msra.mxu0 %v2654
        %3741 = vmatprep.subr.bf16.mxu0 %v2659
        %3742 = vmatpush1.bf16.msra.mxu0 %v2658
        %3743 = vmatprep.subr.bf16.mxu0 %v2663
        %3744 = vmatpush1.bf16.msra.mxu0 %v2662
        %3745 = vmatprep.subr.bf16.mxu0 %v2667
        %3746 = vmatpush1.bf16.msra.mxu0 %v2666
        %3747 = vmatprep.mubr.bf16.mxu0 %v1309
        %3748 = vmatmul.mubr.bf16.gmra.mrb[0].mxu0 %v1308
        %v3749 = vpop.f32.mrb[0].mxu0
        %v3750 = vadd.f32 %v3637, %v3749
        %v3751 = vpop.f32.mrb[0].mxu0
        %v3752 = vadd.f32 %v3639, %v3751
        %v3753 = vpop.f32.mrb[0].mxu0
        %v3754 = vadd.f32 %v3641, %v3753
        %v3755 = vpop.f32.mrb[0].mxu0
        %v3756 = vadd.f32 %v3643, %v3755
        %3757 = vmatprep.mubr.bf16.mxu0 %v1317
        %3758 = vmatmul.mubr.bf16.gmra.mrb[0].mxu0 %v1316
        %v3759 = vpop.f32.mrb[0].mxu0
        %v3760 = vadd.f32 %v3647, %v3759
        %v3761 = vpop.f32.mrb[0].mxu0
        %v3762 = vadd.f32 %v3649, %v3761
        %v3763 = vpop.f32.mrb[0].mxu0
        %v3764 = vadd.f32 %v3651, %v3763
        %v3765 = vpop.f32.mrb[0].mxu0
        %v3766 = vadd.f32 %v3653, %v3765
        %3767 = vmatprep.mubr.bf16.mxu0 %v1325
        %3768 = vmatmul.mubr.bf16.gmra.mrb[0].mxu0 %v1324
        %v3769 = vpop.f32.mrb[0].mxu0
        %v3770 = vadd.f32 %v3657, %v3769
        %v3771 = vpop.f32.mrb[0].mxu0
        %v3772 = vadd.f32 %v3659, %v3771
        %v3773 = vpop.f32.mrb[0].mxu0
        %v3774 = vadd.f32 %v3661, %v3773
        %v3775 = vpop.f32.mrb[0].mxu0
        %v3776 = vadd.f32 %v3663, %v3775
        %3777 = vmatprep.mubr.bf16.mxu0 %v1333
        %3778 = vmatmul.mubr.bf16.gmra.mrb[0].mxu0 %v1332
        %v3779 = vpop.f32.mrb[0].mxu0
        %v3780 = vadd.f32 %v3667, %v3779
        %v3781 = vpop.f32.mrb[0].mxu0
        %v3782 = vadd.f32 %v3669, %v3781
        %v3783 = vpop.f32.mrb[0].mxu0
        %v3784 = vadd.f32 %v3671, %v3783
        %v3785 = vpop.f32.mrb[0].mxu0
        %v3786 = vadd.f32 %v3673, %v3785
        %3787 = vmatprep.mubr.bf16.mxu0 %v1341
        %3788 = vmatmul.mubr.bf16.gmra.mrb[0].mxu0 %v1340
        %v3789 = vpop.f32.mrb[0].mxu0
        %v3790 = vadd.f32 %v3677, %v3789
        %v3791 = vpop.f32.mrb[0].mxu0
        %v3792 = vadd.f32 %v3679, %v3791
        %v3793 = vpop.f32.mrb[0].mxu0
        %v3794 = vadd.f32 %v3681, %v3793
        %v3795 = vpop.f32.mrb[0].mxu0
        %v3796 = vadd.f32 %v3683, %v3795
        %3797 = vmatprep.mubr.bf16.mxu0 %v1349
        %3798 = vmatmul.mubr.bf16.gmra.mrb[0].mxu0 %v1348
        %v3799 = vpop.f32.mrb[0].mxu0
        %v3800 = vadd.f32 %v3687, %v3799
        %v3801 = vpop.f32.mrb[0].mxu0
        %v3802 = vadd.f32 %v3689, %v3801
        %v3803 = vpop.f32.mrb[0].mxu0
        %v3804 = vadd.f32 %v3691, %v3803
        %v3805 = vpop.f32.mrb[0].mxu0
        %v3806 = vadd.f32 %v3693, %v3805
        %3807 = vmatprep.mubr.bf16.mxu0 %v1357
        %3808 = vmatmul.mubr.bf16.gmra.mrb[0].mxu0 %v1356
        %v3809 = vpop.f32.mrb[0].mxu0
        %v3810 = vadd.f32 %v3697, %v3809
        %v3811 = vpop.f32.mrb[0].mxu0
        %v3812 = vadd.f32 %v3699, %v3811
        %v3813 = vpop.f32.mrb[0].mxu0
        %v3814 = vadd.f32 %v3701, %v3813
        %v3815 = vpop.f32.mrb[0].mxu0
        %v3816 = vadd.f32 %v3703, %v3815
        %3817 = vmatprep.mubr.bf16.mxu0 %v1365
        %3818 = vmatmul.mubr.bf16.gmra.mrb[0].mxu0 %v1364
        %v3819 = vpop.f32.mrb[0].mxu0
        %v3820 = vadd.f32 %v3707, %v3819
        %v3821 = vpop.f32.mrb[0].mxu0
        %v3822 = vadd.f32 %v3709, %v3821
        %v3823 = vpop.f32.mrb[0].mxu0
        %v3824 = vadd.f32 %v3711, %v3823
        %v3825 = vpop.f32.mrb[0].mxu0
        %v3826 = vadd.f32 %v3713, %v3825
        %3827 = vdwg.mxu0
        %v3828 = vmax.f32 %v3298, 0.0
        %v3829 = vmax.f32 %v3300, 0.0
        %v3830 = vmax.f32 %v3750, 0.0
        %v3831 = vmax.f32 %v3752, 0.0
        %v3832 = vmax.f32 %v3302, 0.0
        %v3833 = vmax.f32 %v3304, 0.0
        %v3834 = vmax.f32 %v3754, 0.0
        %v3835 = vmax.f32 %v3756, 0.0
        %v3836 = vmax.f32 %v3308, 0.0
        %v3837 = vmax.f32 %v3310, 0.0
        %v3838 = vmax.f32 %v3760, 0.0
        %v3839 = vmax.f32 %v3762, 0.0
        %v3840 = vmax.f32 %v3312, 0.0
        %v3841 = vmax.f32 %v3314, 0.0
        %v3842 = vmax.f32 %v3764, 0.0
        %v3843 = vmax.f32 %v3766, 0.0
        %v3844 = vmax.f32 %v3318, 0.0
        %v3845 = vmax.f32 %v3320, 0.0
        %v3846 = vmax.f32 %v3770, 0.0
        %v3847 = vmax.f32 %v3772, 0.0
        %v3848 = vmax.f32 %v3322, 0.0
        %v3849 = vmax.f32 %v3324, 0.0
        %v3850 = vmax.f32 %v3774, 0.0
        %v3851 = vmax.f32 %v3776, 0.0
        %v3852 = vmax.f32 %v3328, 0.0
        %v3853 = vmax.f32 %v3330, 0.0
        %v3854 = vmax.f32 %v3780, 0.0
        %v3855 = vmax.f32 %v3782, 0.0
        %v3856 = vmax.f32 %v3332, 0.0
        %v3857 = vmax.f32 %v3334, 0.0
        %v3858 = vmax.f32 %v3784, 0.0
        %v3859 = vmax.f32 %v3786, 0.0
        %v3860 = vmax.f32 %v3338, 0.0
        %v3861 = vmax.f32 %v3340, 0.0
        %v3862 = vmax.f32 %v3790, 0.0
        %v3863 = vmax.f32 %v3792, 0.0
        %v3864 = vmax.f32 %v3342, 0.0
        %v3865 = vmax.f32 %v3344, 0.0
        %v3866 = vmax.f32 %v3794, 0.0
        %v3867 = vmax.f32 %v3796, 0.0
        %v3868 = vmax.f32 %v3348, 0.0
        %v3869 = vmax.f32 %v3350, 0.0
        %v3870 = vmax.f32 %v3800, 0.0
        %v3871 = vmax.f32 %v3802, 0.0
        %v3872 = vmax.f32 %v3352, 0.0
        %v3873 = vmax.f32 %v3354, 0.0
        %v3874 = vmax.f32 %v3804, 0.0
        %v3875 = vmax.f32 %v3806, 0.0
        %v3876 = vmax.f32 %v3358, 0.0
        %v3877 = vmax.f32 %v3360, 0.0
        %v3878 = vmax.f32 %v3810, 0.0
        %v3879 = vmax.f32 %v3812, 0.0
        %v3880 = vmax.f32 %v3362, 0.0
        %v3881 = vmax.f32 %v3364, 0.0
        %v3882 = vmax.f32 %v3814, 0.0
        %v3883 = vmax.f32 %v3816, 0.0
        %v3884 = vmax.f32 %v3368, 0.0
        %v3885 = vmax.f32 %v3370, 0.0
        %v3886 = vmax.f32 %v3820, 0.0
        %v3887 = vmax.f32 %v3822, 0.0
        %v3888 = vmax.f32 %v3372, 0.0
        %v3889 = vmax.f32 %v3374, 0.0
        %v3890 = vmax.f32 %v3824, 0.0
        %v3891 = vmax.f32 %v3826, 0.0
        %v3892 = vpack.c.bf16 %v3832, %v3828
        %v3893 = vpack.c.bf16 %v3833, %v3829
        %v3894 = vpack.c.bf16 %v3834, %v3830
        %v3895 = vpack.c.bf16 %v3835, %v3831
        %v3896 = vpack.c.bf16 %v3840, %v3836
        %v3897 = vpack.c.bf16 %v3841, %v3837
        %v3898 = vpack.c.bf16 %v3842, %v3838
        %v3899 = vpack.c.bf16 %v3843, %v3839
        %v3900 = vpack.c.bf16 %v3848, %v3844
        %v3901 = vpack.c.bf16 %v3849, %v3845
        %v3902 = vpack.c.bf16 %v3850, %v3846
        %v3903 = vpack.c.bf16 %v3851, %v3847
        %v3904 = vpack.c.bf16 %v3856, %v3852
        %v3905 = vpack.c.bf16 %v3857, %v3853
        %v3906 = vpack.c.bf16 %v3858, %v3854
        %v3907 = vpack.c.bf16 %v3859, %v3855
        %v3908 = vpack.c.bf16 %v3864, %v3860
        %v3909 = vpack.c.bf16 %v3865, %v3861
        %v3910 = vpack.c.bf16 %v3866, %v3862
        %v3911 = vpack.c.bf16 %v3867, %v3863
        %v3912 = vpack.c.bf16 %v3872, %v3868
        %v3913 = vpack.c.bf16 %v3873, %v3869
        %v3914 = vpack.c.bf16 %v3874, %v3870
        %v3915 = vpack.c.bf16 %v3875, %v3871
        %v3916 = vpack.c.bf16 %v3880, %v3876
        %v3917 = vpack.c.bf16 %v3881, %v3877
        %v3918 = vpack.c.bf16 %v3882, %v3878
        %v3919 = vpack.c.bf16 %v3883, %v3879
        %v3920 = vpack.c.bf16 %v3888, %v3884
        %v3921 = vpack.c.bf16 %v3889, %v3885
        %v3922 = vpack.c.bf16 %v3890, %v3886
        %v3923 = vpack.c.bf16 %v3891, %v3887
        %v3924 = vld [vmem:[#allocation10] sm:$0xff]
        %v3925 = vld [vmem:[#allocation10 + $0x8] sm:$0xff]
        %v3926 = vld [vmem:[#allocation10 + $0x10] sm:$0xff]
        %v3927 = vld [vmem:[#allocation10 + $0x18] sm:$0xff]
        %v3928 = vld [vmem:[#allocation10 + $0x20] sm:$0xff]
        %v3929 = vld [vmem:[#allocation10 + $0x28] sm:$0xff]
        %v3930 = vld [vmem:[#allocation10 + $0x30] sm:$0xff]
        %v3931 = vld [vmem:[#allocation10 + $0x38] sm:$0xff]
        %v3932 = vld [vmem:[#allocation10 + $0x40] sm:$0xff]
        %v3933 = vld [vmem:[#allocation10 + $0x48] sm:$0xff]
        %v3934 = vld [vmem:[#allocation10 + $0x50] sm:$0xff]
        %v3935 = vld [vmem:[#allocation10 + $0x58] sm:$0xff]
        %v3936 = vld [vmem:[#allocation10 + $0x60] sm:$0xff]
        %v3937 = vld [vmem:[#allocation10 + $0x68] sm:$0xff]
        %v3938 = vld [vmem:[#allocation10 + $0x70] sm:$0xff]
        %v3939 = vld [vmem:[#allocation10 + $0x78] sm:$0xff]
        %v3940 = vld [vmem:[#allocation10 + $0x80] sm:$0xff]
        %v3941 = vld [vmem:[#allocation10 + $0x88] sm:$0xff]
        %v3942 = vld [vmem:[#allocation10 + $0x90] sm:$0xff]
        %v3943 = vld [vmem:[#allocation10 + $0x98] sm:$0xff]
        %v3944 = vld [vmem:[#allocation10 + $0xa0] sm:$0xff]
        %v3945 = vld [vmem:[#allocation10 + $0xa8] sm:$0xff]
        %v3946 = vld [vmem:[#allocation10 + $0xb0] sm:$0xff]
        %v3947 = vld [vmem:[#allocation10 + $0xb8] sm:$0xff]
        %v3948 = vld [vmem:[#allocation10 + $0xc0] sm:$0xff]
        %v3949 = vld [vmem:[#allocation10 + $0xc8] sm:$0xff]
        %v3950 = vld [vmem:[#allocation10 + $0xd0] sm:$0xff]
        %v3951 = vld [vmem:[#allocation10 + $0xd8] sm:$0xff]
        %v3952 = vld [vmem:[#allocation10 + $0xe0] sm:$0xff]
        %v3953 = vld [vmem:[#allocation10 + $0xe8] sm:$0xff]
        %v3954 = vld [vmem:[#allocation10 + $0xf0] sm:$0xff]
        %v3955 = vld [vmem:[#allocation10 + $0xf8] sm:$0xff]
        %v3956 = vld [vmem:[#allocation10 + $0x100] sm:$0xff]
        %v3957 = vld [vmem:[#allocation10 + $0x108] sm:$0xff]
        %v3958 = vld [vmem:[#allocation10 + $0x110] sm:$0xff]
        %v3959 = vld [vmem:[#allocation10 + $0x118] sm:$0xff]
        %v3960 = vld [vmem:[#allocation10 + $0x120] sm:$0xff]
        %v3961 = vld [vmem:[#allocation10 + $0x128] sm:$0xff]
        %v3962 = vld [vmem:[#allocation10 + $0x130] sm:$0xff]
        %v3963 = vld [vmem:[#allocation10 + $0x138] sm:$0xff]
        %v3964 = vld [vmem:[#allocation10 + $0x140] sm:$0xff]
        %v3965 = vld [vmem:[#allocation10 + $0x148] sm:$0xff]
        %v3966 = vld [vmem:[#allocation10 + $0x150] sm:$0xff]
        %v3967 = vld [vmem:[#allocation10 + $0x158] sm:$0xff]
        %v3968 = vld [vmem:[#allocation10 + $0x160] sm:$0xff]
        %v3969 = vld [vmem:[#allocation10 + $0x168] sm:$0xff]
        %v3970 = vld [vmem:[#allocation10 + $0x170] sm:$0xff]
        %v3971 = vld [vmem:[#allocation10 + $0x178] sm:$0xff]
        %v3972 = vld [vmem:[#allocation10 + $0x180] sm:$0xff]
        %v3973 = vld [vmem:[#allocation10 + $0x188] sm:$0xff]
        %v3974 = vld [vmem:[#allocation10 + $0x190] sm:$0xff]
        %v3975 = vld [vmem:[#allocation10 + $0x198] sm:$0xff]
        %v3976 = vld [vmem:[#allocation10 + $0x1a0] sm:$0xff]
        %v3977 = vld [vmem:[#allocation10 + $0x1a8] sm:$0xff]
        %v3978 = vld [vmem:[#allocation10 + $0x1b0] sm:$0xff]
        %v3979 = vld [vmem:[#allocation10 + $0x1b8] sm:$0xff]
        %v3980 = vld [vmem:[#allocation10 + $0x1c0] sm:$0xff]
        %v3981 = vld [vmem:[#allocation10 + $0x1c8] sm:$0xff]
        %v3982 = vld [vmem:[#allocation10 + $0x1d0] sm:$0xff]
        %v3983 = vld [vmem:[#allocation10 + $0x1d8] sm:$0xff]
        %v3984 = vld [vmem:[#allocation10 + $0x1e0] sm:$0xff]
        %v3985 = vld [vmem:[#allocation10 + $0x1e8] sm:$0xff]
        %v3986 = vld [vmem:[#allocation10 + $0x1f0] sm:$0xff]
        %v3987 = vld [vmem:[#allocation10 + $0x1f8] sm:$0xff]
        %v3988 = vld [vmem:[#allocation10 + $0x200] sm:$0xff]
        %v3989 = vld [vmem:[#allocation10 + $0x208] sm:$0xff]
        %v3990 = vld [vmem:[#allocation10 + $0x210] sm:$0xff]
        %v3991 = vld [vmem:[#allocation10 + $0x218] sm:$0xff]
        %v3992 = vld [vmem:[#allocation10 + $0x220] sm:$0xff]
        %v3993 = vld [vmem:[#allocation10 + $0x228] sm:$0xff]
        %v3994 = vld [vmem:[#allocation10 + $0x230] sm:$0xff]
        %v3995 = vld [vmem:[#allocation10 + $0x238] sm:$0xff]
        %v3996 = vld [vmem:[#allocation10 + $0x240] sm:$0xff]
        %v3997 = vld [vmem:[#allocation10 + $0x248] sm:$0xff]
        %v3998 = vld [vmem:[#allocation10 + $0x250] sm:$0xff]
        %v3999 = vld [vmem:[#allocation10 + $0x258] sm:$0xff]
        %v4000 = vld [vmem:[#allocation10 + $0x260] sm:$0xff]
        %v4001 = vld [vmem:[#allocation10 + $0x268] sm:$0xff]
        %v4002 = vld [vmem:[#allocation10 + $0x270] sm:$0xff]
        %v4003 = vld [vmem:[#allocation10 + $0x278] sm:$0xff]
        %v4004 = vld [vmem:[#allocation10 + $0x280] sm:$0xff]
        %v4005 = vld [vmem:[#allocation10 + $0x288] sm:$0xff]
        %v4006 = vld [vmem:[#allocation10 + $0x290] sm:$0xff]
        %v4007 = vld [vmem:[#allocation10 + $0x298] sm:$0xff]
        %v4008 = vld [vmem:[#allocation10 + $0x2a0] sm:$0xff]
        %v4009 = vld [vmem:[#allocation10 + $0x2a8] sm:$0xff]
        %v4010 = vld [vmem:[#allocation10 + $0x2b0] sm:$0xff]
        %v4011 = vld [vmem:[#allocation10 + $0x2b8] sm:$0xff]
        %v4012 = vld [vmem:[#allocation10 + $0x2c0] sm:$0xff]
        %v4013 = vld [vmem:[#allocation10 + $0x2c8] sm:$0xff]
        %v4014 = vld [vmem:[#allocation10 + $0x2d0] sm:$0xff]
        %v4015 = vld [vmem:[#allocation10 + $0x2d8] sm:$0xff]
        %v4016 = vld [vmem:[#allocation10 + $0x2e0] sm:$0xff]
        %v4017 = vld [vmem:[#allocation10 + $0x2e8] sm:$0xff]
        %v4018 = vld [vmem:[#allocation10 + $0x2f0] sm:$0xff]
        %v4019 = vld [vmem:[#allocation10 + $0x2f8] sm:$0xff]
        %v4020 = vld [vmem:[#allocation10 + $0x300] sm:$0xff]
        %v4021 = vld [vmem:[#allocation10 + $0x308] sm:$0xff]
        %v4022 = vld [vmem:[#allocation10 + $0x310] sm:$0xff]
        %v4023 = vld [vmem:[#allocation10 + $0x318] sm:$0xff]
        %v4024 = vld [vmem:[#allocation10 + $0x320] sm:$0xff]
        %v4025 = vld [vmem:[#allocation10 + $0x328] sm:$0xff]
        %v4026 = vld [vmem:[#allocation10 + $0x330] sm:$0xff]
        %v4027 = vld [vmem:[#allocation10 + $0x338] sm:$0xff]
        %v4028 = vld [vmem:[#allocation10 + $0x340] sm:$0xff]
        %v4029 = vld [vmem:[#allocation10 + $0x348] sm:$0xff]
        %v4030 = vld [vmem:[#allocation10 + $0x350] sm:$0xff]
        %v4031 = vld [vmem:[#allocation10 + $0x358] sm:$0xff]
        %v4032 = vld [vmem:[#allocation10 + $0x360] sm:$0xff]
        %v4033 = vld [vmem:[#allocation10 + $0x368] sm:$0xff]
        %v4034 = vld [vmem:[#allocation10 + $0x370] sm:$0xff]
        %v4035 = vld [vmem:[#allocation10 + $0x378] sm:$0xff]
        %v4036 = vld [vmem:[#allocation10 + $0x380] sm:$0xff]
        %v4037 = vld [vmem:[#allocation10 + $0x388] sm:$0xff]
        %v4038 = vld [vmem:[#allocation10 + $0x390] sm:$0xff]
        %v4039 = vld [vmem:[#allocation10 + $0x398] sm:$0xff]
        %v4040 = vld [vmem:[#allocation10 + $0x3a0] sm:$0xff]
        %v4041 = vld [vmem:[#allocation10 + $0x3a8] sm:$0xff]
        %v4042 = vld [vmem:[#allocation10 + $0x3b0] sm:$0xff]
        %v4043 = vld [vmem:[#allocation10 + $0x3b8] sm:$0xff]
        %v4044 = vld [vmem:[#allocation10 + $0x3c0] sm:$0xff]
        %v4045 = vld [vmem:[#allocation10 + $0x3c8] sm:$0xff]
        %v4046 = vld [vmem:[#allocation10 + $0x3d0] sm:$0xff]
        %v4047 = vld [vmem:[#allocation10 + $0x3d8] sm:$0xff]
        %v4048 = vld [vmem:[#allocation10 + $0x3e0] sm:$0xff]
        %v4049 = vld [vmem:[#allocation10 + $0x3e8] sm:$0xff]
        %v4050 = vld [vmem:[#allocation10 + $0x3f0] sm:$0xff]
        %v4051 = vld [vmem:[#allocation10 + $0x3f8] sm:$0xff]
        %v4180 = vunpack.c.l.b16 %v3924
        %v4181 = vunpack.c.h.b16 %v3924
        %v4182 = vunpack.c.l.b16 %v3925
        %v4183 = vunpack.c.h.b16 %v3925
        %v4184 = vunpack.c.l.b16 %v3926
        %v4185 = vunpack.c.h.b16 %v3926
        %v4186 = vunpack.c.l.b16 %v3927
        %v4187 = vunpack.c.h.b16 %v3927
        %v4188 = vunpack.c.l.b16 %v3928
        %v4189 = vunpack.c.h.b16 %v3928
        %v4190 = vunpack.c.l.b16 %v3929
        %v4191 = vunpack.c.h.b16 %v3929
        %v4192 = vunpack.c.l.b16 %v3930
        %v4193 = vunpack.c.h.b16 %v3930
        %v4194 = vunpack.c.l.b16 %v3931
        %v4195 = vunpack.c.h.b16 %v3931
        %v4196 = vunpack.c.l.b16 %v3932
        %v4197 = vunpack.c.h.b16 %v3932
        %v4198 = vunpack.c.l.b16 %v3933
        %v4199 = vunpack.c.h.b16 %v3933
        %v4200 = vunpack.c.l.b16 %v3934
        %v4201 = vunpack.c.h.b16 %v3934
        %v4202 = vunpack.c.l.b16 %v3935
        %v4203 = vunpack.c.h.b16 %v3935
        %v4204 = vunpack.c.l.b16 %v3936
        %v4205 = vunpack.c.h.b16 %v3936
        %v4206 = vunpack.c.l.b16 %v3937
        %v4207 = vunpack.c.h.b16 %v3937
        %v4208 = vunpack.c.l.b16 %v3938
        %v4209 = vunpack.c.h.b16 %v3938
        %v4210 = vunpack.c.l.b16 %v3939
        %v4211 = vunpack.c.h.b16 %v3939
        %v4212 = vunpack.c.l.b16 %v3940
        %v4213 = vunpack.c.h.b16 %v3940
        %v4214 = vunpack.c.l.b16 %v3941
        %v4215 = vunpack.c.h.b16 %v3941
        %v4216 = vunpack.c.l.b16 %v3942
        %v4217 = vunpack.c.h.b16 %v3942
        %v4218 = vunpack.c.l.b16 %v3943
        %v4219 = vunpack.c.h.b16 %v3943
        %v4220 = vunpack.c.l.b16 %v3944
        %v4221 = vunpack.c.h.b16 %v3944
        %v4222 = vunpack.c.l.b16 %v3945
        %v4223 = vunpack.c.h.b16 %v3945
        %v4224 = vunpack.c.l.b16 %v3946
        %v4225 = vunpack.c.h.b16 %v3946
        %v4226 = vunpack.c.l.b16 %v3947
        %v4227 = vunpack.c.h.b16 %v3947
        %v4228 = vunpack.c.l.b16 %v3948
        %v4229 = vunpack.c.h.b16 %v3948
        %v4230 = vunpack.c.l.b16 %v3949
        %v4231 = vunpack.c.h.b16 %v3949
        %v4232 = vunpack.c.l.b16 %v3950
        %v4233 = vunpack.c.h.b16 %v3950
        %v4234 = vunpack.c.l.b16 %v3951
        %v4235 = vunpack.c.h.b16 %v3951
        %v4236 = vunpack.c.l.b16 %v3952
        %v4237 = vunpack.c.h.b16 %v3952
        %v4238 = vunpack.c.l.b16 %v3953
        %v4239 = vunpack.c.h.b16 %v3953
        %v4240 = vunpack.c.l.b16 %v3954
        %v4241 = vunpack.c.h.b16 %v3954
        %v4242 = vunpack.c.l.b16 %v3955
        %v4243 = vunpack.c.h.b16 %v3955
        %v4244 = vunpack.c.l.b16 %v3956
        %v4245 = vunpack.c.h.b16 %v3956
        %v4246 = vunpack.c.l.b16 %v3957
        %v4247 = vunpack.c.h.b16 %v3957
        %v4248 = vunpack.c.l.b16 %v3958
        %v4249 = vunpack.c.h.b16 %v3958
        %v4250 = vunpack.c.l.b16 %v3959
        %v4251 = vunpack.c.h.b16 %v3959
        %v4252 = vunpack.c.l.b16 %v3960
        %v4253 = vunpack.c.h.b16 %v3960
        %v4254 = vunpack.c.l.b16 %v3961
        %v4255 = vunpack.c.h.b16 %v3961
        %v4256 = vunpack.c.l.b16 %v3962
        %v4257 = vunpack.c.h.b16 %v3962
        %v4258 = vunpack.c.l.b16 %v3963
        %v4259 = vunpack.c.h.b16 %v3963
        %v4260 = vunpack.c.l.b16 %v3964
        %v4261 = vunpack.c.h.b16 %v3964
        %v4262 = vunpack.c.l.b16 %v3965
        %v4263 = vunpack.c.h.b16 %v3965
        %v4264 = vunpack.c.l.b16 %v3966
        %v4265 = vunpack.c.h.b16 %v3966
        %v4266 = vunpack.c.l.b16 %v3967
        %v4267 = vunpack.c.h.b16 %v3967
        %v4268 = vunpack.c.l.b16 %v3968
        %v4269 = vunpack.c.h.b16 %v3968
        %v4270 = vunpack.c.l.b16 %v3969
        %v4271 = vunpack.c.h.b16 %v3969
        %v4272 = vunpack.c.l.b16 %v3970
        %v4273 = vunpack.c.h.b16 %v3970
        %v4274 = vunpack.c.l.b16 %v3971
        %v4275 = vunpack.c.h.b16 %v3971
        %v4276 = vunpack.c.l.b16 %v3972
        %v4277 = vunpack.c.h.b16 %v3972
        %v4278 = vunpack.c.l.b16 %v3973
        %v4279 = vunpack.c.h.b16 %v3973
        %v4280 = vunpack.c.l.b16 %v3974
        %v4281 = vunpack.c.h.b16 %v3974
        %v4282 = vunpack.c.l.b16 %v3975
        %v4283 = vunpack.c.h.b16 %v3975
        %v4284 = vunpack.c.l.b16 %v3976
        %v4285 = vunpack.c.h.b16 %v3976
        %v4286 = vunpack.c.l.b16 %v3977
        %v4287 = vunpack.c.h.b16 %v3977
        %v4288 = vunpack.c.l.b16 %v3978
        %v4289 = vunpack.c.h.b16 %v3978
        %v4290 = vunpack.c.l.b16 %v3979
        %v4291 = vunpack.c.h.b16 %v3979
        %v4292 = vunpack.c.l.b16 %v3980
        %v4293 = vunpack.c.h.b16 %v3980
        %v4294 = vunpack.c.l.b16 %v3981
        %v4295 = vunpack.c.h.b16 %v3981
        %v4296 = vunpack.c.l.b16 %v3982
        %v4297 = vunpack.c.h.b16 %v3982
        %v4298 = vunpack.c.l.b16 %v3983
        %v4299 = vunpack.c.h.b16 %v3983
        %v4300 = vunpack.c.l.b16 %v3984
        %v4301 = vunpack.c.h.b16 %v3984
        %v4302 = vunpack.c.l.b16 %v3985
        %v4303 = vunpack.c.h.b16 %v3985
        %v4304 = vunpack.c.l.b16 %v3986
        %v4305 = vunpack.c.h.b16 %v3986
        %v4306 = vunpack.c.l.b16 %v3987
        %v4307 = vunpack.c.h.b16 %v3987
        %v4308 = vunpack.c.l.b16 %v3988
        %v4309 = vunpack.c.h.b16 %v3988
        %v4310 = vunpack.c.l.b16 %v3989
        %v4311 = vunpack.c.h.b16 %v3989
        %v4312 = vunpack.c.l.b16 %v3990
        %v4313 = vunpack.c.h.b16 %v3990
        %v4314 = vunpack.c.l.b16 %v3991
        %v4315 = vunpack.c.h.b16 %v3991
        %v4316 = vunpack.c.l.b16 %v3992
        %v4317 = vunpack.c.h.b16 %v3992
        %v4318 = vunpack.c.l.b16 %v3993
        %v4319 = vunpack.c.h.b16 %v3993
        %v4320 = vunpack.c.l.b16 %v3994
        %v4321 = vunpack.c.h.b16 %v3994
        %v4322 = vunpack.c.l.b16 %v3995
        %v4323 = vunpack.c.h.b16 %v3995
        %v4324 = vunpack.c.l.b16 %v3996
        %v4325 = vunpack.c.h.b16 %v3996
        %v4326 = vunpack.c.l.b16 %v3997
        %v4327 = vunpack.c.h.b16 %v3997
        %v4328 = vunpack.c.l.b16 %v3998
        %v4329 = vunpack.c.h.b16 %v3998
        %v4330 = vunpack.c.l.b16 %v3999
        %v4331 = vunpack.c.h.b16 %v3999
        %v4332 = vunpack.c.l.b16 %v4000
        %v4333 = vunpack.c.h.b16 %v4000
        %v4334 = vunpack.c.l.b16 %v4001
        %v4335 = vunpack.c.h.b16 %v4001
        %v4336 = vunpack.c.l.b16 %v4002
        %v4337 = vunpack.c.h.b16 %v4002
        %v4338 = vunpack.c.l.b16 %v4003
        %v4339 = vunpack.c.h.b16 %v4003
        %v4340 = vunpack.c.l.b16 %v4004
        %v4341 = vunpack.c.h.b16 %v4004
        %v4342 = vunpack.c.l.b16 %v4005
        %v4343 = vunpack.c.h.b16 %v4005
        %v4344 = vunpack.c.l.b16 %v4006
        %v4345 = vunpack.c.h.b16 %v4006
        %v4346 = vunpack.c.l.b16 %v4007
        %v4347 = vunpack.c.h.b16 %v4007
        %v4348 = vunpack.c.l.b16 %v4008
        %v4349 = vunpack.c.h.b16 %v4008
        %v4350 = vunpack.c.l.b16 %v4009
        %v4351 = vunpack.c.h.b16 %v4009
        %v4352 = vunpack.c.l.b16 %v4010
        %v4353 = vunpack.c.h.b16 %v4010
        %v4354 = vunpack.c.l.b16 %v4011
        %v4355 = vunpack.c.h.b16 %v4011
        %v4356 = vunpack.c.l.b16 %v4012
        %v4357 = vunpack.c.h.b16 %v4012
        %v4358 = vunpack.c.l.b16 %v4013
        %v4359 = vunpack.c.h.b16 %v4013
        %v4360 = vunpack.c.l.b16 %v4014
        %v4361 = vunpack.c.h.b16 %v4014
        %v4362 = vunpack.c.l.b16 %v4015
        %v4363 = vunpack.c.h.b16 %v4015
        %v4364 = vunpack.c.l.b16 %v4016
        %v4365 = vunpack.c.h.b16 %v4016
        %v4366 = vunpack.c.l.b16 %v4017
        %v4367 = vunpack.c.h.b16 %v4017
        %v4368 = vunpack.c.l.b16 %v4018
        %v4369 = vunpack.c.h.b16 %v4018
        %v4370 = vunpack.c.l.b16 %v4019
        %v4371 = vunpack.c.h.b16 %v4019
        %v4372 = vunpack.c.l.b16 %v4020
        %v4373 = vunpack.c.h.b16 %v4020
        %v4374 = vunpack.c.l.b16 %v4021
        %v4375 = vunpack.c.h.b16 %v4021
        %v4376 = vunpack.c.l.b16 %v4022
        %v4377 = vunpack.c.h.b16 %v4022
        %v4378 = vunpack.c.l.b16 %v4023
        %v4379 = vunpack.c.h.b16 %v4023
        %v4380 = vunpack.c.l.b16 %v4024
        %v4381 = vunpack.c.h.b16 %v4024
        %v4382 = vunpack.c.l.b16 %v4025
        %v4383 = vunpack.c.h.b16 %v4025
        %v4384 = vunpack.c.l.b16 %v4026
        %v4385 = vunpack.c.h.b16 %v4026
        %v4386 = vunpack.c.l.b16 %v4027
        %v4387 = vunpack.c.h.b16 %v4027
        %v4388 = vunpack.c.l.b16 %v4028
        %v4389 = vunpack.c.h.b16 %v4028
        %v4390 = vunpack.c.l.b16 %v4029
        %v4391 = vunpack.c.h.b16 %v4029
        %v4392 = vunpack.c.l.b16 %v4030
        %v4393 = vunpack.c.h.b16 %v4030
        %v4394 = vunpack.c.l.b16 %v4031
        %v4395 = vunpack.c.h.b16 %v4031
        %v4396 = vunpack.c.l.b16 %v4032
        %v4397 = vunpack.c.h.b16 %v4032
        %v4398 = vunpack.c.l.b16 %v4033
        %v4399 = vunpack.c.h.b16 %v4033
        %v4400 = vunpack.c.l.b16 %v4034
        %v4401 = vunpack.c.h.b16 %v4034
        %v4402 = vunpack.c.l.b16 %v4035
        %v4403 = vunpack.c.h.b16 %v4035
        %v4404 = vunpack.c.l.b16 %v4036
        %v4405 = vunpack.c.h.b16 %v4036
        %v4406 = vunpack.c.l.b16 %v4037
        %v4407 = vunpack.c.h.b16 %v4037
        %v4408 = vunpack.c.l.b16 %v4038
        %v4409 = vunpack.c.h.b16 %v4038
        %v4410 = vunpack.c.l.b16 %v4039
        %v4411 = vunpack.c.h.b16 %v4039
        %v4412 = vunpack.c.l.b16 %v4040
        %v4413 = vunpack.c.h.b16 %v4040
        %v4414 = vunpack.c.l.b16 %v4041
        %v4415 = vunpack.c.h.b16 %v4041
        %v4416 = vunpack.c.l.b16 %v4042
        %v4417 = vunpack.c.h.b16 %v4042
        %v4418 = vunpack.c.l.b16 %v4043
        %v4419 = vunpack.c.h.b16 %v4043
        %v4420 = vunpack.c.l.b16 %v4044
        %v4421 = vunpack.c.h.b16 %v4044
        %v4422 = vunpack.c.l.b16 %v4045
        %v4423 = vunpack.c.h.b16 %v4045
        %v4424 = vunpack.c.l.b16 %v4046
        %v4425 = vunpack.c.h.b16 %v4046
        %v4426 = vunpack.c.l.b16 %v4047
        %v4427 = vunpack.c.h.b16 %v4047
        %v4428 = vunpack.c.l.b16 %v4048
        %v4429 = vunpack.c.h.b16 %v4048
        %v4430 = vunpack.c.l.b16 %v4049
        %v4431 = vunpack.c.h.b16 %v4049
        %v4432 = vunpack.c.l.b16 %v4050
        %v4433 = vunpack.c.h.b16 %v4050
        %v4434 = vunpack.c.l.b16 %v4051
        %v4435 = vunpack.c.h.b16 %v4051
        %v4436 = vpack.c.b16 %v4184, %v4180
        %v4437 = vpack.c.b16 %v4185, %v4181
        %v4438 = vpack.c.b16 %v4186, %v4182
        %v4439 = vpack.c.b16 %v4187, %v4183
        %v4440 = vpack.c.b16 %v4192, %v4188
        %v4441 = vpack.c.b16 %v4193, %v4189
        %v4442 = vpack.c.b16 %v4194, %v4190
        %v4443 = vpack.c.b16 %v4195, %v4191
        %v4444 = vpack.c.b16 %v4200, %v4196
        %v4445 = vpack.c.b16 %v4201, %v4197
        %v4446 = vpack.c.b16 %v4202, %v4198
        %v4447 = vpack.c.b16 %v4203, %v4199
        %v4448 = vpack.c.b16 %v4208, %v4204
        %v4449 = vpack.c.b16 %v4209, %v4205
        %v4450 = vpack.c.b16 %v4210, %v4206
        %v4451 = vpack.c.b16 %v4211, %v4207
        %v4452 = vpack.c.b16 %v4216, %v4212
        %v4453 = vpack.c.b16 %v4217, %v4213
        %v4454 = vpack.c.b16 %v4218, %v4214
        %v4455 = vpack.c.b16 %v4219, %v4215
        %v4456 = vpack.c.b16 %v4224, %v4220
        %v4457 = vpack.c.b16 %v4225, %v4221
        %v4458 = vpack.c.b16 %v4226, %v4222
        %v4459 = vpack.c.b16 %v4227, %v4223
        %v4460 = vpack.c.b16 %v4232, %v4228
        %v4461 = vpack.c.b16 %v4233, %v4229
        %v4462 = vpack.c.b16 %v4234, %v4230
        %v4463 = vpack.c.b16 %v4235, %v4231
        %v4464 = vpack.c.b16 %v4240, %v4236
        %v4465 = vpack.c.b16 %v4241, %v4237
        %v4466 = vpack.c.b16 %v4242, %v4238
        %v4467 = vpack.c.b16 %v4243, %v4239
        %v4468 = vpack.c.b16 %v4248, %v4244
        %v4469 = vpack.c.b16 %v4249, %v4245
        %v4470 = vpack.c.b16 %v4250, %v4246
        %v4471 = vpack.c.b16 %v4251, %v4247
        %v4472 = vpack.c.b16 %v4256, %v4252
        %v4473 = vpack.c.b16 %v4257, %v4253
        %v4474 = vpack.c.b16 %v4258, %v4254
        %v4475 = vpack.c.b16 %v4259, %v4255
        %v4476 = vpack.c.b16 %v4264, %v4260
        %v4477 = vpack.c.b16 %v4265, %v4261
        %v4478 = vpack.c.b16 %v4266, %v4262
        %v4479 = vpack.c.b16 %v4267, %v4263
        %v4480 = vpack.c.b16 %v4272, %v4268
        %v4481 = vpack.c.b16 %v4273, %v4269
        %v4482 = vpack.c.b16 %v4274, %v4270
        %v4483 = vpack.c.b16 %v4275, %v4271
        %v4484 = vpack.c.b16 %v4280, %v4276
        %v4485 = vpack.c.b16 %v4281, %v4277
        %v4486 = vpack.c.b16 %v4282, %v4278
        %v4487 = vpack.c.b16 %v4283, %v4279
        %v4488 = vpack.c.b16 %v4288, %v4284
        %v4489 = vpack.c.b16 %v4289, %v4285
        %v4490 = vpack.c.b16 %v4290, %v4286
        %v4491 = vpack.c.b16 %v4291, %v4287
        %v4492 = vpack.c.b16 %v4296, %v4292
        %v4493 = vpack.c.b16 %v4297, %v4293
        %v4494 = vpack.c.b16 %v4298, %v4294
        %v4495 = vpack.c.b16 %v4299, %v4295
        %v4496 = vpack.c.b16 %v4304, %v4300
        %v4497 = vpack.c.b16 %v4305, %v4301
        %v4498 = vpack.c.b16 %v4306, %v4302
        %v4499 = vpack.c.b16 %v4307, %v4303
        %v4500 = vpack.c.b16 %v4312, %v4308
        %v4501 = vpack.c.b16 %v4313, %v4309
        %v4502 = vpack.c.b16 %v4314, %v4310
        %v4503 = vpack.c.b16 %v4315, %v4311
        %v4504 = vpack.c.b16 %v4320, %v4316
        %v4505 = vpack.c.b16 %v4321, %v4317
        %v4506 = vpack.c.b16 %v4322, %v4318
        %v4507 = vpack.c.b16 %v4323, %v4319
        %v4508 = vpack.c.b16 %v4328, %v4324
        %v4509 = vpack.c.b16 %v4329, %v4325
        %v4510 = vpack.c.b16 %v4330, %v4326
        %v4511 = vpack.c.b16 %v4331, %v4327
        %v4512 = vpack.c.b16 %v4336, %v4332
        %v4513 = vpack.c.b16 %v4337, %v4333
        %v4514 = vpack.c.b16 %v4338, %v4334
        %v4515 = vpack.c.b16 %v4339, %v4335
        %v4516 = vpack.c.b16 %v4344, %v4340
        %v4517 = vpack.c.b16 %v4345, %v4341
        %v4518 = vpack.c.b16 %v4346, %v4342
        %v4519 = vpack.c.b16 %v4347, %v4343
        %v4520 = vpack.c.b16 %v4352, %v4348
        %v4521 = vpack.c.b16 %v4353, %v4349
        %v4522 = vpack.c.b16 %v4354, %v4350
        %v4523 = vpack.c.b16 %v4355, %v4351
        %v4524 = vpack.c.b16 %v4360, %v4356
        %v4525 = vpack.c.b16 %v4361, %v4357
        %v4526 = vpack.c.b16 %v4362, %v4358
        %v4527 = vpack.c.b16 %v4363, %v4359
        %v4528 = vpack.c.b16 %v4368, %v4364
        %v4529 = vpack.c.b16 %v4369, %v4365
        %v4530 = vpack.c.b16 %v4370, %v4366
        %v4531 = vpack.c.b16 %v4371, %v4367
        %v4532 = vpack.c.b16 %v4376, %v4372
        %v4533 = vpack.c.b16 %v4377, %v4373
        %v4534 = vpack.c.b16 %v4378, %v4374
        %v4535 = vpack.c.b16 %v4379, %v4375
        %v4536 = vpack.c.b16 %v4384, %v4380
        %v4537 = vpack.c.b16 %v4385, %v4381
        %v4538 = vpack.c.b16 %v4386, %v4382
        %v4539 = vpack.c.b16 %v4387, %v4383
        %v4540 = vpack.c.b16 %v4392, %v4388
        %v4541 = vpack.c.b16 %v4393, %v4389
        %v4542 = vpack.c.b16 %v4394, %v4390
        %v4543 = vpack.c.b16 %v4395, %v4391
        %v4544 = vpack.c.b16 %v4400, %v4396
        %v4545 = vpack.c.b16 %v4401, %v4397
        %v4546 = vpack.c.b16 %v4402, %v4398
        %v4547 = vpack.c.b16 %v4403, %v4399
        %v4548 = vpack.c.b16 %v4408, %v4404
        %v4549 = vpack.c.b16 %v4409, %v4405
        %v4550 = vpack.c.b16 %v4410, %v4406
        %v4551 = vpack.c.b16 %v4411, %v4407
        %v4552 = vpack.c.b16 %v4416, %v4412
        %v4553 = vpack.c.b16 %v4417, %v4413
        %v4554 = vpack.c.b16 %v4418, %v4414
        %v4555 = vpack.c.b16 %v4419, %v4415
        %v4556 = vpack.c.b16 %v4424, %v4420
        %v4557 = vpack.c.b16 %v4425, %v4421
        %v4558 = vpack.c.b16 %v4426, %v4422
        %v4559 = vpack.c.b16 %v4427, %v4423
        %v4560 = vpack.c.b16 %v4432, %v4428
        %v4561 = vpack.c.b16 %v4433, %v4429
        %v4562 = vpack.c.b16 %v4434, %v4430
        %v4563 = vpack.c.b16 %v4435, %v4431
        %4692 = vmatprep.subr.bf16.mxu0 %v4437
        %4693 = vmatpush1.bf16.msra.mxu0 %v4436
        %4694 = vmatprep.subr.bf16.mxu0 %v4441
        %4695 = vmatpush1.bf16.msra.mxu0 %v4440
        %4696 = vmatprep.subr.bf16.mxu0 %v4445
        %4697 = vmatpush1.bf16.msra.mxu0 %v4444
        %4698 = vmatprep.subr.bf16.mxu0 %v4449
        %4699 = vmatpush1.bf16.msra.mxu0 %v4448
        %4700 = vmatprep.subr.bf16.mxu0 %v4453
        %4701 = vmatpush1.bf16.msra.mxu0 %v4452
        %4702 = vmatprep.subr.bf16.mxu0 %v4457
        %4703 = vmatpush1.bf16.msra.mxu0 %v4456
        %4704 = vmatprep.subr.bf16.mxu0 %v4461
        %4705 = vmatpush1.bf16.msra.mxu0 %v4460
        %4706 = vmatprep.subr.bf16.mxu0 %v4465
        %4707 = vmatpush1.bf16.msra.mxu0 %v4464
        %4708 = vmatprep.subr.bf16.mxu0 %v4469
        %4709 = vmatpush1.bf16.msra.mxu0 %v4468
        %4710 = vmatprep.subr.bf16.mxu0 %v4473
        %4711 = vmatpush1.bf16.msra.mxu0 %v4472
        %4712 = vmatprep.subr.bf16.mxu0 %v4477
        %4713 = vmatpush1.bf16.msra.mxu0 %v4476
        %4714 = vmatprep.subr.bf16.mxu0 %v4481
        %4715 = vmatpush1.bf16.msra.mxu0 %v4480
        %4716 = vmatprep.subr.bf16.mxu0 %v4485
        %4717 = vmatpush1.bf16.msra.mxu0 %v4484
        %4718 = vmatprep.subr.bf16.mxu0 %v4489
        %4719 = vmatpush1.bf16.msra.mxu0 %v4488
        %4720 = vmatprep.subr.bf16.mxu0 %v4493
        %4721 = vmatpush1.bf16.msra.mxu0 %v4492
        %4722 = vmatprep.subr.bf16.mxu0 %v4497
        %4723 = vmatpush1.bf16.msra.mxu0 %v4496
        %4724 = vmatprep.mubr.bf16.mxu0 %v3893
        %4725 = vmatmul.mubr.bf16.gmra.mrb[0].mxu0 %v3892
        %v4726 = vpop.f32.mrb[0].mxu0
        %v4727 = vadd.f32 0.0, %v4726
        %v4728 = vpop.f32.mrb[0].mxu0
        %v4729 = vadd.f32 0.0, %v4728
        %v4730 = vpop.f32.mrb[0].mxu0
        %v4731 = vadd.f32 0.0, %v4730
        %v4732 = vpop.f32.mrb[0].mxu0
        %v4733 = vadd.f32 0.0, %v4732
        %4734 = vmatprep.mubr.bf16.mxu0 %v3897
        %4735 = vmatmul.mubr.bf16.gmra.mrb[0].mxu0 %v3896
        %v4736 = vpop.f32.mrb[0].mxu0
        %v4737 = vadd.f32 0.0, %v4736
        %v4738 = vpop.f32.mrb[0].mxu0
        %v4739 = vadd.f32 0.0, %v4738
        %v4740 = vpop.f32.mrb[0].mxu0
        %v4741 = vadd.f32 0.0, %v4740
        %v4742 = vpop.f32.mrb[0].mxu0
        %v4743 = vadd.f32 0.0, %v4742
        %4744 = vmatprep.mubr.bf16.mxu0 %v3901
        %4745 = vmatmul.mubr.bf16.gmra.mrb[0].mxu0 %v3900
        %v4746 = vpop.f32.mrb[0].mxu0
        %v4747 = vadd.f32 0.0, %v4746
        %v4748 = vpop.f32.mrb[0].mxu0
        %v4749 = vadd.f32 0.0, %v4748
        %v4750 = vpop.f32.mrb[0].mxu0
        %v4751 = vadd.f32 0.0, %v4750
        %v4752 = vpop.f32.mrb[0].mxu0
        %v4753 = vadd.f32 0.0, %v4752
        %4754 = vmatprep.mubr.bf16.mxu0 %v3905
        %4755 = vmatmul.mubr.bf16.gmra.mrb[0].mxu0 %v3904
        %v4756 = vpop.f32.mrb[0].mxu0
        %v4757 = vadd.f32 0.0, %v4756
        %v4758 = vpop.f32.mrb[0].mxu0
        %v4759 = vadd.f32 0.0, %v4758
        %v4760 = vpop.f32.mrb[0].mxu0
        %v4761 = vadd.f32 0.0, %v4760
        %v4762 = vpop.f32.mrb[0].mxu0
        %v4763 = vadd.f32 0.0, %v4762
        %4764 = vmatprep.mubr.bf16.mxu0 %v3909
        %4765 = vmatmul.mubr.bf16.gmra.mrb[0].mxu0 %v3908
        %v4766 = vpop.f32.mrb[0].mxu0
        %v4767 = vadd.f32 0.0, %v4766
        %v4768 = vpop.f32.mrb[0].mxu0
        %v4769 = vadd.f32 0.0, %v4768
        %v4770 = vpop.f32.mrb[0].mxu0
        %v4771 = vadd.f32 0.0, %v4770
        %v4772 = vpop.f32.mrb[0].mxu0
        %v4773 = vadd.f32 0.0, %v4772
        %4774 = vmatprep.mubr.bf16.mxu0 %v3913
        %4775 = vmatmul.mubr.bf16.gmra.mrb[0].mxu0 %v3912
        %v4776 = vpop.f32.mrb[0].mxu0
        %v4777 = vadd.f32 0.0, %v4776
        %v4778 = vpop.f32.mrb[0].mxu0
        %v4779 = vadd.f32 0.0, %v4778
        %v4780 = vpop.f32.mrb[0].mxu0
        %v4781 = vadd.f32 0.0, %v4780
        %v4782 = vpop.f32.mrb[0].mxu0
        %v4783 = vadd.f32 0.0, %v4782
        %4784 = vmatprep.mubr.bf16.mxu0 %v3917
        %4785 = vmatmul.mubr.bf16.gmra.mrb[0].mxu0 %v3916
        %v4786 = vpop.f32.mrb[0].mxu0
        %v4787 = vadd.f32 0.0, %v4786
        %v4788 = vpop.f32.mrb[0].mxu0
        %v4789 = vadd.f32 0.0, %v4788
        %v4790 = vpop.f32.mrb[0].mxu0
        %v4791 = vadd.f32 0.0, %v4790
        %v4792 = vpop.f32.mrb[0].mxu0
        %v4793 = vadd.f32 0.0, %v4792
        %4794 = vmatprep.mubr.bf16.mxu0 %v3921
        %4795 = vmatmul.mubr.bf16.gmra.mrb[0].mxu0 %v3920
        %v4796 = vpop.f32.mrb[0].mxu0
        %v4797 = vadd.f32 0.0, %v4796
        %v4798 = vpop.f32.mrb[0].mxu0
        %v4799 = vadd.f32 0.0, %v4798
        %v4800 = vpop.f32.mrb[0].mxu0
        %v4801 = vadd.f32 0.0, %v4800
        %v4802 = vpop.f32.mrb[0].mxu0
        %v4803 = vadd.f32 0.0, %v4802
        %4804 = vdwg.mxu0
        %4805 = vmatprep.subr.bf16.mxu0 %v4501
        %4806 = vmatpush1.bf16.msra.mxu0 %v4500
        %4807 = vmatprep.subr.bf16.mxu0 %v4505
        %4808 = vmatpush1.bf16.msra.mxu0 %v4504
        %4809 = vmatprep.subr.bf16.mxu0 %v4509
        %4810 = vmatpush1.bf16.msra.mxu0 %v4508
        %4811 = vmatprep.subr.bf16.mxu0 %v4513
        %4812 = vmatpush1.bf16.msra.mxu0 %v4512
        %4813 = vmatprep.subr.bf16.mxu0 %v4517
        %4814 = vmatpush1.bf16.msra.mxu0 %v4516
        %4815 = vmatprep.subr.bf16.mxu0 %v4521
        %4816 = vmatpush1.bf16.msra.mxu0 %v4520
        %4817 = vmatprep.subr.bf16.mxu0 %v4525
        %4818 = vmatpush1.bf16.msra.mxu0 %v4524
        %4819 = vmatprep.subr.bf16.mxu0 %v4529
        %4820 = vmatpush1.bf16.msra.mxu0 %v4528
        %4821 = vmatprep.subr.bf16.mxu0 %v4533
        %4822 = vmatpush1.bf16.msra.mxu0 %v4532
        %4823 = vmatprep.subr.bf16.mxu0 %v4537
        %4824 = vmatpush1.bf16.msra.mxu0 %v4536
        %4825 = vmatprep.subr.bf16.mxu0 %v4541
        %4826 = vmatpush1.bf16.msra.mxu0 %v4540
        %4827 = vmatprep.subr.bf16.mxu0 %v4545
        %4828 = vmatpush1.bf16.msra.mxu0 %v4544
        %4829 = vmatprep.subr.bf16.mxu0 %v4549
        %4830 = vmatpush1.bf16.msra.mxu0 %v4548
        %4831 = vmatprep.subr.bf16.mxu0 %v4553
        %4832 = vmatpush1.bf16.msra.mxu0 %v4552
        %4833 = vmatprep.subr.bf16.mxu0 %v4557
        %4834 = vmatpush1.bf16.msra.mxu0 %v4556
        %4835 = vmatprep.subr.bf16.mxu0 %v4561
        %4836 = vmatpush1.bf16.msra.mxu0 %v4560
        %4837 = vmatprep.mubr.bf16.mxu0 %v3895
        %4838 = vmatmul.mubr.bf16.gmra.mrb[0].mxu0 %v3894
        %v4839 = vpop.f32.mrb[0].mxu0
        %v4840 = vadd.f32 %v4727, %v4839
        %v4841 = vpop.f32.mrb[0].mxu0
        %v4842 = vadd.f32 %v4729, %v4841
        %v4843 = vpop.f32.mrb[0].mxu0
        %v4844 = vadd.f32 %v4731, %v4843
        %v4845 = vpop.f32.mrb[0].mxu0
        %v4846 = vadd.f32 %v4733, %v4845
        %4847 = vmatprep.mubr.bf16.mxu0 %v3899
        %4848 = vmatmul.mubr.bf16.gmra.mrb[0].mxu0 %v3898
        %v4849 = vpop.f32.mrb[0].mxu0
        %v4850 = vadd.f32 %v4737, %v4849
        %v4851 = vpop.f32.mrb[0].mxu0
        %v4852 = vadd.f32 %v4739, %v4851
        %v4853 = vpop.f32.mrb[0].mxu0
        %v4854 = vadd.f32 %v4741, %v4853
        %v4855 = vpop.f32.mrb[0].mxu0
        %v4856 = vadd.f32 %v4743, %v4855
        %4857 = vmatprep.mubr.bf16.mxu0 %v3903
        %4858 = vmatmul.mubr.bf16.gmra.mrb[0].mxu0 %v3902
        %v4859 = vpop.f32.mrb[0].mxu0
        %v4860 = vadd.f32 %v4747, %v4859
        %v4861 = vpop.f32.mrb[0].mxu0
        %v4862 = vadd.f32 %v4749, %v4861
        %v4863 = vpop.f32.mrb[0].mxu0
        %v4864 = vadd.f32 %v4751, %v4863
        %v4865 = vpop.f32.mrb[0].mxu0
        %v4866 = vadd.f32 %v4753, %v4865
        %4867 = vmatprep.mubr.bf16.mxu0 %v3907
        %4868 = vmatmul.mubr.bf16.gmra.mrb[0].mxu0 %v3906
        %v4869 = vpop.f32.mrb[0].mxu0
        %v4870 = vadd.f32 %v4757, %v4869
        %v4871 = vpop.f32.mrb[0].mxu0
        %v4872 = vadd.f32 %v4759, %v4871
        %v4873 = vpop.f32.mrb[0].mxu0
        %v4874 = vadd.f32 %v4761, %v4873
        %v4875 = vpop.f32.mrb[0].mxu0
        %v4876 = vadd.f32 %v4763, %v4875
        %4877 = vmatprep.mubr.bf16.mxu0 %v3911
        %4878 = vmatmul.mubr.bf16.gmra.mrb[0].mxu0 %v3910
        %v4879 = vpop.f32.mrb[0].mxu0
        %v4880 = vadd.f32 %v4767, %v4879
        %v4881 = vpop.f32.mrb[0].mxu0
        %v4882 = vadd.f32 %v4769, %v4881
        %v4883 = vpop.f32.mrb[0].mxu0
        %v4884 = vadd.f32 %v4771, %v4883
        %v4885 = vpop.f32.mrb[0].mxu0
        %v4886 = vadd.f32 %v4773, %v4885
        %4887 = vmatprep.mubr.bf16.mxu0 %v3915
        %4888 = vmatmul.mubr.bf16.gmra.mrb[0].mxu0 %v3914
        %v4889 = vpop.f32.mrb[0].mxu0
        %v4890 = vadd.f32 %v4777, %v4889
        %v4891 = vpop.f32.mrb[0].mxu0
        %v4892 = vadd.f32 %v4779, %v4891
        %v4893 = vpop.f32.mrb[0].mxu0
        %v4894 = vadd.f32 %v4781, %v4893
        %v4895 = vpop.f32.mrb[0].mxu0
        %v4896 = vadd.f32 %v4783, %v4895
        %4897 = vmatprep.mubr.bf16.mxu0 %v3919
        %4898 = vmatmul.mubr.bf16.gmra.mrb[0].mxu0 %v3918
        %v4899 = vpop.f32.mrb[0].mxu0
        %v4900 = vadd.f32 %v4787, %v4899
        %v4901 = vpop.f32.mrb[0].mxu0
        %v4902 = vadd.f32 %v4789, %v4901
        %v4903 = vpop.f32.mrb[0].mxu0
        %v4904 = vadd.f32 %v4791, %v4903
        %v4905 = vpop.f32.mrb[0].mxu0
        %v4906 = vadd.f32 %v4793, %v4905
        %4907 = vmatprep.mubr.bf16.mxu0 %v3923
        %4908 = vmatmul.mubr.bf16.gmra.mrb[0].mxu0 %v3922
        %v4909 = vpop.f32.mrb[0].mxu0
        %v4910 = vadd.f32 %v4797, %v4909
        %v4911 = vpop.f32.mrb[0].mxu0
        %v4912 = vadd.f32 %v4799, %v4911
        %v4913 = vpop.f32.mrb[0].mxu0
        %v4914 = vadd.f32 %v4801, %v4913
        %v4915 = vpop.f32.mrb[0].mxu0
        %v4916 = vadd.f32 %v4803, %v4915
        %4917 = vdwg.mxu0
        %4918 = vmatprep.subr.bf16.mxu0 %v4439
        %4919 = vmatpush1.bf16.msra.mxu0 %v4438
        %4920 = vmatprep.subr.bf16.mxu0 %v4443
        %4921 = vmatpush1.bf16.msra.mxu0 %v4442
        %4922 = vmatprep.subr.bf16.mxu0 %v4447
        %4923 = vmatpush1.bf16.msra.mxu0 %v4446
        %4924 = vmatprep.subr.bf16.mxu0 %v4451
        %4925 = vmatpush1.bf16.msra.mxu0 %v4450
        %4926 = vmatprep.subr.bf16.mxu0 %v4455
        %4927 = vmatpush1.bf16.msra.mxu0 %v4454
        %4928 = vmatprep.subr.bf16.mxu0 %v4459
        %4929 = vmatpush1.bf16.msra.mxu0 %v4458
        %4930 = vmatprep.subr.bf16.mxu0 %v4463
        %4931 = vmatpush1.bf16.msra.mxu0 %v4462
        %4932 = vmatprep.subr.bf16.mxu0 %v4467
        %4933 = vmatpush1.bf16.msra.mxu0 %v4466
        %4934 = vmatprep.subr.bf16.mxu0 %v4471
        %4935 = vmatpush1.bf16.msra.mxu0 %v4470
        %4936 = vmatprep.subr.bf16.mxu0 %v4475
        %4937 = vmatpush1.bf16.msra.mxu0 %v4474
        %4938 = vmatprep.subr.bf16.mxu0 %v4479
        %4939 = vmatpush1.bf16.msra.mxu0 %v4478
        %4940 = vmatprep.subr.bf16.mxu0 %v4483
        %4941 = vmatpush1.bf16.msra.mxu0 %v4482
        %4942 = vmatprep.subr.bf16.mxu0 %v4487
        %4943 = vmatpush1.bf16.msra.mxu0 %v4486
        %4944 = vmatprep.subr.bf16.mxu0 %v4491
        %4945 = vmatpush1.bf16.msra.mxu0 %v4490
        %4946 = vmatprep.subr.bf16.mxu0 %v4495
        %4947 = vmatpush1.bf16.msra.mxu0 %v4494
        %4948 = vmatprep.subr.bf16.mxu0 %v4499
        %4949 = vmatpush1.bf16.msra.mxu0 %v4498
        %4950 = vmatprep.mubr.bf16.mxu0 %v3893
        %4951 = vmatmul.mubr.bf16.gmra.mrb[0].mxu0 %v3892
        %v4952 = vpop.f32.mrb[0].mxu0
        %v4953 = vadd.f32 0.0, %v4952
        %v4954 = vpop.f32.mrb[0].mxu0
        %v4955 = vadd.f32 0.0, %v4954
        %v4956 = vpop.f32.mrb[0].mxu0
        %v4957 = vadd.f32 0.0, %v4956
        %v4958 = vpop.f32.mrb[0].mxu0
        %v4959 = vadd.f32 0.0, %v4958
        %4960 = vmatprep.mubr.bf16.mxu0 %v3897
        %4961 = vmatmul.mubr.bf16.gmra.mrb[0].mxu0 %v3896
        %v4962 = vpop.f32.mrb[0].mxu0
        %v4963 = vadd.f32 0.0, %v4962
        %v4964 = vpop.f32.mrb[0].mxu0
        %v4965 = vadd.f32 0.0, %v4964
        %v4966 = vpop.f32.mrb[0].mxu0
        %v4967 = vadd.f32 0.0, %v4966
        %v4968 = vpop.f32.mrb[0].mxu0
        %v4969 = vadd.f32 0.0, %v4968
        %4970 = vmatprep.mubr.bf16.mxu0 %v3901
        %4971 = vmatmul.mubr.bf16.gmra.mrb[0].mxu0 %v3900
        %v4972 = vpop.f32.mrb[0].mxu0
        %v4973 = vadd.f32 0.0, %v4972
        %v4974 = vpop.f32.mrb[0].mxu0
        %v4975 = vadd.f32 0.0, %v4974
        %v4976 = vpop.f32.mrb[0].mxu0
        %v4977 = vadd.f32 0.0, %v4976
        %v4978 = vpop.f32.mrb[0].mxu0
        %v4979 = vadd.f32 0.0, %v4978
        %4980 = vmatprep.mubr.bf16.mxu0 %v3905
        %4981 = vmatmul.mubr.bf16.gmra.mrb[0].mxu0 %v3904
        %v4982 = vpop.f32.mrb[0].mxu0
        %v4983 = vadd.f32 0.0, %v4982
        %v4984 = vpop.f32.mrb[0].mxu0
        %v4985 = vadd.f32 0.0, %v4984
        %v4986 = vpop.f32.mrb[0].mxu0
        %v4987 = vadd.f32 0.0, %v4986
        %v4988 = vpop.f32.mrb[0].mxu0
        %v4989 = vadd.f32 0.0, %v4988
        %4990 = vmatprep.mubr.bf16.mxu0 %v3909
        %4991 = vmatmul.mubr.bf16.gmra.mrb[0].mxu0 %v3908
        %v4992 = vpop.f32.mrb[0].mxu0
        %v4993 = vadd.f32 0.0, %v4992
        %v4994 = vpop.f32.mrb[0].mxu0
        %v4995 = vadd.f32 0.0, %v4994
        %v4996 = vpop.f32.mrb[0].mxu0
        %v4997 = vadd.f32 0.0, %v4996
        %v4998 = vpop.f32.mrb[0].mxu0
        %v4999 = vadd.f32 0.0, %v4998
        %5000 = vmatprep.mubr.bf16.mxu0 %v3913
        %5001 = vmatmul.mubr.bf16.gmra.mrb[0].mxu0 %v3912
        %v5002 = vpop.f32.mrb[0].mxu0
        %v5003 = vadd.f32 0.0, %v5002
        %v5004 = vpop.f32.mrb[0].mxu0
        %v5005 = vadd.f32 0.0, %v5004
        %v5006 = vpop.f32.mrb[0].mxu0
        %v5007 = vadd.f32 0.0, %v5006
        %v5008 = vpop.f32.mrb[0].mxu0
        %v5009 = vadd.f32 0.0, %v5008
        %5010 = vmatprep.mubr.bf16.mxu0 %v3917
        %5011 = vmatmul.mubr.bf16.gmra.mrb[0].mxu0 %v3916
        %v5012 = vpop.f32.mrb[0].mxu0
        %v5013 = vadd.f32 0.0, %v5012
        %v5014 = vpop.f32.mrb[0].mxu0
        %v5015 = vadd.f32 0.0, %v5014
        %v5016 = vpop.f32.mrb[0].mxu0
        %v5017 = vadd.f32 0.0, %v5016
        %v5018 = vpop.f32.mrb[0].mxu0
        %v5019 = vadd.f32 0.0, %v5018
        %5020 = vmatprep.mubr.bf16.mxu0 %v3921
        %5021 = vmatmul.mubr.bf16.gmra.mrb[0].mxu0 %v3920
        %v5022 = vpop.f32.mrb[0].mxu0
        %v5023 = vadd.f32 0.0, %v5022
        %v5024 = vpop.f32.mrb[0].mxu0
        %v5025 = vadd.f32 0.0, %v5024
        %v5026 = vpop.f32.mrb[0].mxu0
        %v5027 = vadd.f32 0.0, %v5026
        %v5028 = vpop.f32.mrb[0].mxu0
        %v5029 = vadd.f32 0.0, %v5028
        %5030 = vdwg.mxu0
        %5031 = vmatprep.subr.bf16.mxu0 %v4503
        %5032 = vmatpush1.bf16.msra.mxu0 %v4502
        %5033 = vmatprep.subr.bf16.mxu0 %v4507
        %5034 = vmatpush1.bf16.msra.mxu0 %v4506
        %5035 = vmatprep.subr.bf16.mxu0 %v4511
        %5036 = vmatpush1.bf16.msra.mxu0 %v4510
        %5037 = vmatprep.subr.bf16.mxu0 %v4515
        %5038 = vmatpush1.bf16.msra.mxu0 %v4514
        %5039 = vmatprep.subr.bf16.mxu0 %v4519
        %5040 = vmatpush1.bf16.msra.mxu0 %v4518
        %5041 = vmatprep.subr.bf16.mxu0 %v4523
        %5042 = vmatpush1.bf16.msra.mxu0 %v4522
        %5043 = vmatprep.subr.bf16.mxu0 %v4527
        %5044 = vmatpush1.bf16.msra.mxu0 %v4526
        %5045 = vmatprep.subr.bf16.mxu0 %v4531
        %5046 = vmatpush1.bf16.msra.mxu0 %v4530
        %5047 = vmatprep.subr.bf16.mxu0 %v4535
        %5048 = vmatpush1.bf16.msra.mxu0 %v4534
        %5049 = vmatprep.subr.bf16.mxu0 %v4539
        %5050 = vmatpush1.bf16.msra.mxu0 %v4538
        %5051 = vmatprep.subr.bf16.mxu0 %v4543
        %5052 = vmatpush1.bf16.msra.mxu0 %v4542
        %5053 = vmatprep.subr.bf16.mxu0 %v4547
        %5054 = vmatpush1.bf16.msra.mxu0 %v4546
        %5055 = vmatprep.subr.bf16.mxu0 %v4551
        %5056 = vmatpush1.bf16.msra.mxu0 %v4550
        %5057 = vmatprep.subr.bf16.mxu0 %v4555
        %5058 = vmatpush1.bf16.msra.mxu0 %v4554
        %5059 = vmatprep.subr.bf16.mxu0 %v4559
        %5060 = vmatpush1.bf16.msra.mxu0 %v4558
        %5061 = vmatprep.subr.bf16.mxu0 %v4563
        %5062 = vmatpush1.bf16.msra.mxu0 %v4562
        %5063 = vmatprep.mubr.bf16.mxu0 %v3895
        %5064 = vmatmul.mubr.bf16.gmra.mrb[0].mxu0 %v3894
        %v5065 = vpop.f32.mrb[0].mxu0
        %v5066 = vadd.f32 %v4953, %v5065
        %v5067 = vpop.f32.mrb[0].mxu0
        %v5068 = vadd.f32 %v4955, %v5067
        %v5069 = vpop.f32.mrb[0].mxu0
        %v5070 = vadd.f32 %v4957, %v5069
        %v5071 = vpop.f32.mrb[0].mxu0
        %v5072 = vadd.f32 %v4959, %v5071
        %5073 = vmatprep.mubr.bf16.mxu0 %v3899
        %5074 = vmatmul.mubr.bf16.gmra.mrb[0].mxu0 %v3898
        %v5075 = vpop.f32.mrb[0].mxu0
        %v5076 = vadd.f32 %v4963, %v5075
        %v5077 = vpop.f32.mrb[0].mxu0
        %v5078 = vadd.f32 %v4965, %v5077
        %v5079 = vpop.f32.mrb[0].mxu0
        %v5080 = vadd.f32 %v4967, %v5079
        %v5081 = vpop.f32.mrb[0].mxu0
        %v5082 = vadd.f32 %v4969, %v5081
        %5083 = vmatprep.mubr.bf16.mxu0 %v3903
        %5084 = vmatmul.mubr.bf16.gmra.mrb[0].mxu0 %v3902
        %v5085 = vpop.f32.mrb[0].mxu0
        %v5086 = vadd.f32 %v4973, %v5085
        %v5087 = vpop.f32.mrb[0].mxu0
        %v5088 = vadd.f32 %v4975, %v5087
        %v5089 = vpop.f32.mrb[0].mxu0
        %v5090 = vadd.f32 %v4977, %v5089
        %v5091 = vpop.f32.mrb[0].mxu0
        %v5092 = vadd.f32 %v4979, %v5091
        %5093 = vmatprep.mubr.bf16.mxu0 %v3907
        %5094 = vmatmul.mubr.bf16.gmra.mrb[0].mxu0 %v3906
        %v5095 = vpop.f32.mrb[0].mxu0
        %v5096 = vadd.f32 %v4983, %v5095
        %v5097 = vpop.f32.mrb[0].mxu0
        %v5098 = vadd.f32 %v4985, %v5097
        %v5099 = vpop.f32.mrb[0].mxu0
        %v5100 = vadd.f32 %v4987, %v5099
        %v5101 = vpop.f32.mrb[0].mxu0
        %v5102 = vadd.f32 %v4989, %v5101
        %5103 = vmatprep.mubr.bf16.mxu0 %v3911
        %5104 = vmatmul.mubr.bf16.gmra.mrb[0].mxu0 %v3910
        %v5105 = vpop.f32.mrb[0].mxu0
        %v5106 = vadd.f32 %v4993, %v5105
        %v5107 = vpop.f32.mrb[0].mxu0
        %v5108 = vadd.f32 %v4995, %v5107
        %v5109 = vpop.f32.mrb[0].mxu0
        %v5110 = vadd.f32 %v4997, %v5109
        %v5111 = vpop.f32.mrb[0].mxu0
        %v5112 = vadd.f32 %v4999, %v5111
        %5113 = vmatprep.mubr.bf16.mxu0 %v3915
        %5114 = vmatmul.mubr.bf16.gmra.mrb[0].mxu0 %v3914
        %v5115 = vpop.f32.mrb[0].mxu0
        %v5116 = vadd.f32 %v5003, %v5115
        %v5117 = vpop.f32.mrb[0].mxu0
        %v5118 = vadd.f32 %v5005, %v5117
        %v5119 = vpop.f32.mrb[0].mxu0
        %v5120 = vadd.f32 %v5007, %v5119
        %v5121 = vpop.f32.mrb[0].mxu0
        %v5122 = vadd.f32 %v5009, %v5121
        %5123 = vmatprep.mubr.bf16.mxu0 %v3919
        %5124 = vmatmul.mubr.bf16.gmra.mrb[0].mxu0 %v3918
        %v5125 = vpop.f32.mrb[0].mxu0
        %v5126 = vadd.f32 %v5013, %v5125
        %v5127 = vpop.f32.mrb[0].mxu0
        %v5128 = vadd.f32 %v5015, %v5127
        %v5129 = vpop.f32.mrb[0].mxu0
        %v5130 = vadd.f32 %v5017, %v5129
        %v5131 = vpop.f32.mrb[0].mxu0
        %v5132 = vadd.f32 %v5019, %v5131
        %5133 = vmatprep.mubr.bf16.mxu0 %v3923
        %5134 = vmatmul.mubr.bf16.gmra.mrb[0].mxu0 %v3922
        %v5135 = vpop.f32.mrb[0].mxu0
        %v5136 = vadd.f32 %v5023, %v5135
        %v5137 = vpop.f32.mrb[0].mxu0
        %v5138 = vadd.f32 %v5025, %v5137
        %v5139 = vpop.f32.mrb[0].mxu0
        %v5140 = vadd.f32 %v5027, %v5139
        %v5141 = vpop.f32.mrb[0].mxu0
        %v5142 = vadd.f32 %v5029, %v5141
        %5143 = vdwg.mxu0
        %5144 = vst [vmem:[%s314] sm:$0xff] %v4840
        %5145 = vst [vmem:[%s314 + $0x8] sm:$0xff] %v4842
        %5146 = vst [vmem:[%s314 + $0x10] sm:$0xff] %v5066
        %5147 = vst [vmem:[%s314 + $0x18] sm:$0xff] %v5068
        %5148 = vst [vmem:[%s314 + $0x20] sm:$0xff] %v4844
        %5149 = vst [vmem:[%s314 + $0x28] sm:$0xff] %v4846
        %5150 = vst [vmem:[%s314 + $0x30] sm:$0xff] %v5070
        %5151 = vst [vmem:[%s314 + $0x38] sm:$0xff] %v5072
        %5152 = vst [vmem:[%s314 + $0x40] sm:$0xff] %v4850
        %5153 = vst [vmem:[%s314 + $0x48] sm:$0xff] %v4852
        %5154 = vst [vmem:[%s314 + $0x50] sm:$0xff] %v5076
        %5155 = vst [vmem:[%s314 + $0x58] sm:$0xff] %v5078
        %5156 = vst [vmem:[%s314 + $0x60] sm:$0xff] %v4854
        %5157 = vst [vmem:[%s314 + $0x68] sm:$0xff] %v4856
        %5158 = vst [vmem:[%s314 + $0x70] sm:$0xff] %v5080
        %5159 = vst [vmem:[%s314 + $0x78] sm:$0xff] %v5082
        %5160 = vst [vmem:[%s314 + $0x80] sm:$0xff] %v4860
        %5161 = vst [vmem:[%s314 + $0x88] sm:$0xff] %v4862
        %5162 = vst [vmem:[%s314 + $0x90] sm:$0xff] %v5086
        %5163 = vst [vmem:[%s314 + $0x98] sm:$0xff] %v5088
        %5164 = vst [vmem:[%s314 + $0xa0] sm:$0xff] %v4864
        %5165 = vst [vmem:[%s314 + $0xa8] sm:$0xff] %v4866
        %5166 = vst [vmem:[%s314 + $0xb0] sm:$0xff] %v5090
        %5167 = vst [vmem:[%s314 + $0xb8] sm:$0xff] %v5092
        %5168 = vst [vmem:[%s314 + $0xc0] sm:$0xff] %v4870
        %5169 = vst [vmem:[%s314 + $0xc8] sm:$0xff] %v4872
        %5170 = vst [vmem:[%s314 + $0xd0] sm:$0xff] %v5096
        %5171 = vst [vmem:[%s314 + $0xd8] sm:$0xff] %v5098
        %5172 = vst [vmem:[%s314 + $0xe0] sm:$0xff] %v4874
        %5173 = vst [vmem:[%s314 + $0xe8] sm:$0xff] %v4876
        %5174 = vst [vmem:[%s314 + $0xf0] sm:$0xff] %v5100
        %5175 = vst [vmem:[%s314 + $0xf8] sm:$0xff] %v5102
        %5176 = vst [vmem:[%s314 + $0x100] sm:$0xff] %v4880
        %5177 = vst [vmem:[%s314 + $0x108] sm:$0xff] %v4882
        %5178 = vst [vmem:[%s314 + $0x110] sm:$0xff] %v5106
        %5179 = vst [vmem:[%s314 + $0x118] sm:$0xff] %v5108
        %5180 = vst [vmem:[%s314 + $0x120] sm:$0xff] %v4884
        %5181 = vst [vmem:[%s314 + $0x128] sm:$0xff] %v4886
        %5182 = vst [vmem:[%s314 + $0x130] sm:$0xff] %v5110
        %5183 = vst [vmem:[%s314 + $0x138] sm:$0xff] %v5112
        %5184 = vst [vmem:[%s314 + $0x140] sm:$0xff] %v4890
        %5185 = vst [vmem:[%s314 + $0x148] sm:$0xff] %v4892
        %5186 = vst [vmem:[%s314 + $0x150] sm:$0xff] %v5116
        %5187 = vst [vmem:[%s314 + $0x158] sm:$0xff] %v5118
        %5188 = vst [vmem:[%s314 + $0x160] sm:$0xff] %v4894
        %5189 = vst [vmem:[%s314 + $0x168] sm:$0xff] %v4896
        %5190 = vst [vmem:[%s314 + $0x170] sm:$0xff] %v5120
        %5191 = vst [vmem:[%s314 + $0x178] sm:$0xff] %v5122
        %5192 = vst [vmem:[%s314 + $0x180] sm:$0xff] %v4900
        %5193 = vst [vmem:[%s314 + $0x188] sm:$0xff] %v4902
        %5194 = vst [vmem:[%s314 + $0x190] sm:$0xff] %v5126
        %5195 = vst [vmem:[%s314 + $0x198] sm:$0xff] %v5128
        %5196 = vst [vmem:[%s314 + $0x1a0] sm:$0xff] %v4904
        %5197 = vst [vmem:[%s314 + $0x1a8] sm:$0xff] %v4906
        %5198 = vst [vmem:[%s314 + $0x1b0] sm:$0xff] %v5130
        %5199 = vst [vmem:[%s314 + $0x1b8] sm:$0xff] %v5132
        %5200 = vst [vmem:[%s314 + $0x1c0] sm:$0xff] %v4910
        %5201 = vst [vmem:[%s314 + $0x1c8] sm:$0xff] %v4912
        %5202 = vst [vmem:[%s314 + $0x1d0] sm:$0xff] %v5136
        %5203 = vst [vmem:[%s314 + $0x1d8] sm:$0xff] %v5138
        %5204 = vst [vmem:[%s314 + $0x1e0] sm:$0xff] %v4914
        %5205 = vst [vmem:[%s314 + $0x1e8] sm:$0xff] %v4916
        %5206 = vst [vmem:[%s314 + $0x1f0] sm:$0xff] %v5140
        %5207 = vst [vmem:[%s314 + $0x1f8] sm:$0xff] %v5142
        %s5208 = sand.u32 %s165, 1
        %s5209 = scalar_lea.sflag [#allocation6], %s5208
        %s5210 = sand.u32 %s165, 1
        %s5211 = smul.addr %s5210, 512
        %s5212 = scalar_lea.vmem [#allocation12], %s5211
        // Predicated region
        $region61: #{tpu_custom_call.1} parent=43 // pred_check
          %p5213 = pneg %p175
        $region62: #{tpu_custom_call.1} parent=43 // pred_check_branch
          %5215 = sbr.rel (%p5213) target = $region64
        $region63: #{tpu_custom_call.1} parent=43 // pred_region
          %s5216 = smul.u32 4, %s26
          %s5218 = ssub.s32 8192, 8192
          %5219 = vsyncadd %s5209, %s5218
          %s5220 = smul.addr %s5216, 128
          %s5221 = scalar_lea.hbm %s6, %s5220
          %s5222 = sshll.u32 %s5212, 4
          %s5223 = int_to_ptr.vmem [resolvable:$true] %s5222
          %5228 = dma.vmem_to_hbm [thread:$0]  %s5223, 8192, %s5221, %s5209, 512, 1024, 32
        $region64: #{tpu_custom_call.1} parent=43 // pred_fallthru
          _
      $region44: #{tpu_custom_call.1} parent=5 // pred_fallthru
        _
      %p5229 = scmp.le.s32.totalorder 2, %s21
      // Predicated region
      $region65: #{tpu_custom_call.1} parent=5 // pred_check
        %p5230 = pneg %p5229
      $region66: #{tpu_custom_call.1} parent=5 // pred_check_branch
        %5232 = sbr.rel (%p5230) target = $region68
      $region67: #{tpu_custom_call.1} parent=5 // pred_region
        %s5233 = ssub.s32 %s21, 2
        // Predicated region
        $region69: #{tpu_custom_call.1} parent=67 // pred_check
          %p5234 = pneg %p181
        $region70: #{tpu_custom_call.1} parent=67 // pred_check_branch
          %5236 = sbr.rel (%p5234) target = $region72
        $region71: #{tpu_custom_call.1} parent=67 // pred_region
          %s5237 = sand.u32 %s166, 1
          %s5238 = scalar_lea.sflag [#allocation6], %s5237
          %s5239 = sand.u32 %s166, 1
          %s5240 = smul.addr %s5239, 512
          %s5241 = scalar_lea.vmem [#allocation12], %s5240
          %5242 = dma.done %s5238, 8192
        $region72: #{tpu_custom_call.1} parent=67 // pred_fallthru
          _
      $region68: #{tpu_custom_call.1} parent=5 // pred_fallthru
        _
    $region6: #{tpu_custom_call.1} parent=1 // loop_footer
      %s25 = sadd.s32 1, %s21
    $region7: #{tpu_custom_call.1} parent=1 // loop_footer_branch
      %20 = sbr.rel target = $region3
    $region8: #{tpu_custom_call.1} parent=1 // loop_exit
      _
    %5243 = vsyncpa [#allocation5], 1
    %s5244 = scalar_lea.sflag [#allocation5], 1
    %5245 = vsyncpa %s5244, 1
    %5246 = vsyncpa [#allocation8], 1
    %5247 = vsyncpa [#allocation11], 1
    %5248 = vsyncpa [#allocation6], 1
    %s5249 = scalar_lea.sflag [#allocation6], 1
    %5250 = vsyncpa %s5249, 1

</llo_original>
